<compile_context>
chip_gen: v5e
topology: v5e:2x2
jax: 0.10.0
libtpu: 0.0.40
codegen_flags: <defaults>
</compile_context>

<pallas_src>
import jax
import jax.numpy as jnp
from jax.experimental import pallas as pl
from jax.experimental.pallas import tpu as pltpu


def _sigmoid_mul_kernel(gate_ref, x_ref, out_ref):
    # gate_ref: (TR, 1), x_ref: (TR, S), out_ref: (TR, S)
    g = jax.nn.sigmoid(gate_ref[...].astype(jnp.float32))      # EUP exp + VPU ops
    out_ref[...] = (g * x_ref[...].astype(jnp.float32)).astype(out_ref.dtype)


def _round_up(x: int, m: int) -> int:
    return ((x + m - 1) // m) * m


def _num_tensorcores() -> int:
    """Best-effort TensorCore count of the local device (v7x megacore = 2)."""
    try:
        dev = jax.devices()[0]
        nc = getattr(dev, "num_cores", None)
        if isinstance(nc, int) and nc > 0:
            return nc
        if "v7" in str(getattr(dev, "device_kind", "")).lower():
            return 2
    except Exception:
        pass
    return 1


def _pick_row_tile(rows: int, cols: int, itemsize: int, ncores: int) -> int:
    """One block per TensorCore unless the double-buffered working set would
    blow the scoped-VMEM budget; rows tiled in multiples of the sublane pack."""
    sub = max(8, 32 // itemsize)              # f32 -> 8, bf16 -> 16, int8/fp8 -> 32
    # Per tile row: input + output, each double-buffered, plus gate lane-padded to 128.
    bytes_per_row = 2 * (2 * cols * itemsize) + 2 * 128 * itemsize
    vmem_budget = 24 * 1024 * 1024            # headroom under v7x's 32 MiB scoped default
    max_tr = max(sub, (vmem_budget // bytes_per_row) // sub * sub)
    tr = min(_round_up(pl.cdiv(rows, ncores), sub), max_tr)
    if tr >= rows:
        return rows                           # single full-extent block (always legal)
    return tr


def sigmoid_mul(x567, x563):
    """Reproduces: sigmoid(x567) * x563  with x567=(N,C,1,1), x563=(N,C,H,W)."""
    n, c, h, w = x563.shape
    assert x567.shape == (n, c, 1, 1)
    rows, cols = n * c, h * w
    x2d = x563.reshape(rows, cols)
    g2d = x567.reshape(rows, 1)

    itemsize = jnp.dtype(x563.dtype).itemsize
    ncores = _num_tensorcores()
    tr = _pick_row_tile(rows, cols, itemsize, ncores)
    grid = (pl.cdiv(rows, tr),)

    cost = pl.CostEstimate(
        flops=2 * rows * cols,                 # sigmoid-mul + broadcast mul (approx.)
        transcendentals=rows,                  # one exp per channel
        bytes_accessed=(2 * rows * cols + rows) * itemsize,
    )

    # TODO(synk): the largest remaining win on all generations is to fuse this
    # SE gate multiply into the epilogue of the producer of x563 (and keep a
    # lane-dense channels-last layout there), eliminating the ~2 MB HBM round
    # trip and this launch entirely.
    out2d = pl.pallas_call(
        _sigmoid_mul_kernel,
        out_shape=jax.ShapeDtypeStruct((rows, cols), x563.dtype),
        grid=grid,
        in_specs=[
            pl.BlockSpec((tr, 1), lambda i: (i, 0)),
            pl.BlockSpec((tr, cols), lambda i: (i, 0)),
        ],
        out_specs=pl.BlockSpec((tr, cols), lambda i: (i, 0)),
        input_output_aliases={1: 0},           # gate x2d in place (fresh intermediate)
        cost_estimate=cost,
        compiler_params=pltpu.CompilerParams(
            dimension_semantics=("parallel",),  # rows independent -> both TCs on v7x
        ),
    )(g2d, x2d)
    return out2d.reshape(n, c, h, w)


if __name__ == "__main__":
    key = jax.random.PRNGKey(0)
    k1, k2 = jax.random.split(key)
    # Shapes implied by the module (small: ~1 MB in + ~1 MB out).
    x563 = jax.random.normal(k1, (1, 1344, 14, 14), dtype=jnp.float32)
    x567 = jax.random.normal(k2, (1, 1344, 1, 1), dtype=jnp.float32)

    # Reference computed first (kernel aliases its flattened activation buffer).
    ref = jax.block_until_ready(jax.nn.sigmoid(x567) * x563)

    out = sigmoid_mul(x567, x563)
    out = jax.block_until_ready(out)

    assert out.shape == (1, 1344, 14, 14)
    assert jnp.allclose(out, ref, atol=1e-6, rtol=1e-6)
    print("KERNEL_OK")
</pallas_src>

<mosaic_0001>
module attributes {stable_mosaic.version = 11 : i64} {
  func.func @_sigmoid_mul_kernel(%arg0: i32, %arg1: memref<1344x1xf32, #tpu.memory_space<vmem>>, %arg2: memref<1344x196xf32, #tpu.memory_space<vmem>>, %arg3: memref<1344x196xf32, #tpu.memory_space<vmem>>) attributes {dimension_semantics = [#tpu.dimension_semantics<parallel>], iteration_bounds = array<i64: 1>, scalar_prefetch = 0 : i64, scratch_operands = 0 : i64, tpu.core_type = #tpu.core_type<tc>, window_params = [{transform_indices = @transform_0, window_bounds = array<i64: 1344, 1>}, {transform_indices = @transform_1, window_bounds = array<i64: 1344, 196>}, {transform_indices = @transform_2, window_bounds = array<i64: 1344, 196>}]} {
    %c0 = arith.constant 0 : index
    %c0_0 = arith.constant 0 : index
    %0 = vector.load %arg1[%c0, %c0_0] : memref<1344x1xf32, #tpu.memory_space<vmem>>, vector<1344x1xf32>
    %1 = arith.negf %0 : vector<1344x1xf32>
    %2 = math.exp %1 : vector<1344x1xf32>
    %cst = arith.constant 1.000000e+00 : f32
    %3 = vector.broadcast %cst : f32 to vector<1344x1xf32>
    %4 = arith.addf %3, %2 : vector<1344x1xf32>
    %5 = arith.divf %3, %4 : vector<1344x1xf32>
    %c0_1 = arith.constant 0 : index
    %c0_2 = arith.constant 0 : index
    %6 = vector.load %arg2[%c0_1, %c0_2] : memref<1344x196xf32, #tpu.memory_space<vmem>>, vector<1344x196xf32>
    %7 = vector.broadcast %5 : vector<1344x1xf32> to vector<1344x196xf32>
    %8 = arith.mulf %7, %6 : vector<1344x196xf32>
    %c0_3 = arith.constant 0 : index
    %c0_4 = arith.constant 0 : index
    %9 = vector.load %arg3[%c0_3, %c0_4] : memref<1344x196xf32, #tpu.memory_space<vmem>>, vector<1344x196xf32>
    tpu.vector_store %arg3[%c0_3, %c0_4], %8 {strides = array<i32>} : memref<1344x196xf32, #tpu.memory_space<vmem>>, vector<1344x196xf32>,
    return
  }
  func.func @transform_0(%arg0: i32) -> (i32, i32) {
    %c0_i32 = arith.constant 0 : i32
    %c0_i32_0 = arith.constant 0 : i32
    return %arg0, %c0_i32 : i32, i32
  }
  func.func @transform_1(%arg0: i32) -> (i32, i32) {
    %c0_i32 = arith.constant 0 : i32
    %c0_i32_0 = arith.constant 0 : i32
    return %arg0, %c0_i32 : i32, i32
  }
  func.func @transform_2(%arg0: i32) -> (i32, i32) {
    %c0_i32 = arith.constant 0 : i32
    %c0_i32_0 = arith.constant 0 : i32
    return %arg0, %c0_i32 : i32, i32
  }
}

</mosaic_0001>

<llo_original>
// kernel: tpu_custom_call.1
$region0: #{tpu_custom_call.1}
  #allocation0 [shape = 'u32[]', space=smem, size = 0x4, offset = 0x4, fixed_abs, tag = 'smem constant byte address 0x4 - core index']
  #allocation1 [shape = 'u32[72,128]{1,0:T(1,128)}', space=vmem, size = 0x9000, scoped, tag = 'internal scratch']
  %s0 = inlined_call_operand.vmem [shape: f32[1344,1], index: 0, kind: input, shape index: {}]
  %s1 = inlined_call_operand.vmem [shape: f32[1344,196], index: 1, kind: input, shape index: {}, may-alias: {1,2}]
  %s2 = inlined_call_operand.vmem [shape: f32[1344,196], index: 2, kind: output, shape index: {}, may-alias: {1,2}]
  %s3 = sld [smem:[#allocation0]]
  $region18: #{tpu_custom_call.1} parent=0
    _
  %s5 = ssub.s32 1, %s3
  %s6 = scalar_select 0, %s5, %s3
  // Predicated region
  $region2: #{tpu_custom_call.1} parent=0 // pred_check
    _
  $region3: #{tpu_custom_call.1} parent=0 // pred_check_branch
    %8 = sbr.rel (0) target = $region5
  $region4: #{tpu_custom_call.1} parent=0 // pred_region
    _
  $region5: #{tpu_custom_call.1} parent=0 // pred_fallthru
    _
  // Predicated region
  $region6: #{tpu_custom_call.1} parent=0 // pred_check
    _
  $region7: #{tpu_custom_call.1} parent=0 // pred_check_branch
    %10 = sbr.rel (0) target = $region9
  $region8: #{tpu_custom_call.1} parent=0 // pred_region
    _
  $region9: #{tpu_custom_call.1} parent=0 // pred_fallthru
    _
  %v11 = vld [vmem:[%s0] sm:$0xff]
  %v12 = vld [vmem:[%s0 + $0x8] sm:$0xff]
  %v13 = vld [vmem:[%s0 + $0x10] sm:$0xff]
  %v14 = vld [vmem:[%s0 + $0x18] sm:$0xff]
  %v15 = vld [vmem:[%s0 + $0x20] sm:$0xff]
  %v16 = vld [vmem:[%s0 + $0x28] sm:$0xff]
  %v17 = vld [vmem:[%s0 + $0x30] sm:$0xff]
  %v18 = vld [vmem:[%s0 + $0x38] sm:$0xff]
  %v19 = vld [vmem:[%s0 + $0x40] sm:$0xff]
  %v20 = vld [vmem:[%s0 + $0x48] sm:$0xff]
  %v21 = vld [vmem:[%s0 + $0x50] sm:$0xff]
  %v22 = vld [vmem:[%s0 + $0x58] sm:$0xff]
  %v23 = vld [vmem:[%s0 + $0x60] sm:$0xff]
  %v24 = vld [vmem:[%s0 + $0x68] sm:$0xff]
  %v25 = vld [vmem:[%s0 + $0x70] sm:$0xff]
  %v26 = vld [vmem:[%s0 + $0x78] sm:$0xff]
  %v27 = vld [vmem:[%s0 + $0x80] sm:$0xff]
  %v28 = vld [vmem:[%s0 + $0x88] sm:$0xff]
  %v29 = vld [vmem:[%s0 + $0x90] sm:$0xff]
  %v30 = vld [vmem:[%s0 + $0x98] sm:$0xff]
  %v31 = vld [vmem:[%s0 + $0xa0] sm:$0xff]
  %v32 = vld [vmem:[%s0 + $0xa8] sm:$0xff]
  %v33 = vld [vmem:[%s0 + $0xb0] sm:$0xff]
  %v34 = vld [vmem:[%s0 + $0xb8] sm:$0xff]
  %v35 = vld [vmem:[%s0 + $0xc0] sm:$0xff]
  %v36 = vld [vmem:[%s0 + $0xc8] sm:$0xff]
  %v37 = vld [vmem:[%s0 + $0xd0] sm:$0xff]
  %v38 = vld [vmem:[%s0 + $0xd8] sm:$0xff]
  %v39 = vld [vmem:[%s0 + $0xe0] sm:$0xff]
  %v40 = vld [vmem:[%s0 + $0xe8] sm:$0xff]
  %v41 = vld [vmem:[%s0 + $0xf0] sm:$0xff]
  %v42 = vld [vmem:[%s0 + $0xf8] sm:$0xff]
  %v43 = vld [vmem:[%s0 + $0x100] sm:$0xff]
  %v44 = vld [vmem:[%s0 + $0x108] sm:$0xff]
  %v45 = vld [vmem:[%s0 + $0x110] sm:$0xff]
  %v46 = vld [vmem:[%s0 + $0x118] sm:$0xff]
  %v47 = vld [vmem:[%s0 + $0x120] sm:$0xff]
  %v48 = vld [vmem:[%s0 + $0x128] sm:$0xff]
  %v49 = vld [vmem:[%s0 + $0x130] sm:$0xff]
  %v50 = vld [vmem:[%s0 + $0x138] sm:$0xff]
  %v51 = vld [vmem:[%s0 + $0x140] sm:$0xff]
  %v52 = vld [vmem:[%s0 + $0x148] sm:$0xff]
  %v53 = vld [vmem:[%s0 + $0x150] sm:$0xff]
  %v54 = vld [vmem:[%s0 + $0x158] sm:$0xff]
  %v55 = vld [vmem:[%s0 + $0x160] sm:$0xff]
  %v56 = vld [vmem:[%s0 + $0x168] sm:$0xff]
  %v57 = vld [vmem:[%s0 + $0x170] sm:$0xff]
  %v58 = vld [vmem:[%s0 + $0x178] sm:$0xff]
  %v59 = vld [vmem:[%s0 + $0x180] sm:$0xff]
  %v60 = vld [vmem:[%s0 + $0x188] sm:$0xff]
  %v61 = vld [vmem:[%s0 + $0x190] sm:$0xff]
  %v62 = vld [vmem:[%s0 + $0x198] sm:$0xff]
  %v63 = vld [vmem:[%s0 + $0x1a0] sm:$0xff]
  %v64 = vld [vmem:[%s0 + $0x1a8] sm:$0xff]
  %v65 = vld [vmem:[%s0 + $0x1b0] sm:$0xff]
  %v66 = vld [vmem:[%s0 + $0x1b8] sm:$0xff]
  %v67 = vld [vmem:[%s0 + $0x1c0] sm:$0xff]
  %v68 = vld [vmem:[%s0 + $0x1c8] sm:$0xff]
  %v69 = vld [vmem:[%s0 + $0x1d0] sm:$0xff]
  %v70 = vld [vmem:[%s0 + $0x1d8] sm:$0xff]
  %v71 = vld [vmem:[%s0 + $0x1e0] sm:$0xff]
  %v72 = vld [vmem:[%s0 + $0x1e8] sm:$0xff]
  %v73 = vld [vmem:[%s0 + $0x1f0] sm:$0xff]
  %v74 = vld [vmem:[%s0 + $0x1f8] sm:$0xff]
  %v75 = vld [vmem:[%s0 + $0x200] sm:$0xff]
  %v76 = vld [vmem:[%s0 + $0x208] sm:$0xff]
  %v77 = vld [vmem:[%s0 + $0x210] sm:$0xff]
  %v78 = vld [vmem:[%s0 + $0x218] sm:$0xff]
  %v79 = vld [vmem:[%s0 + $0x220] sm:$0xff]
  %v80 = vld [vmem:[%s0 + $0x228] sm:$0xff]
  %v81 = vld [vmem:[%s0 + $0x230] sm:$0xff]
  %v82 = vld [vmem:[%s0 + $0x238] sm:$0xff]
  %v83 = vld [vmem:[%s0 + $0x240] sm:$0xff]
  %v84 = vld [vmem:[%s0 + $0x248] sm:$0xff]
  %v85 = vld [vmem:[%s0 + $0x250] sm:$0xff]
  %v86 = vld [vmem:[%s0 + $0x258] sm:$0xff]
  %v87 = vld [vmem:[%s0 + $0x260] sm:$0xff]
  %v88 = vld [vmem:[%s0 + $0x268] sm:$0xff]
  %v89 = vld [vmem:[%s0 + $0x270] sm:$0xff]
  %v90 = vld [vmem:[%s0 + $0x278] sm:$0xff]
  %v91 = vld [vmem:[%s0 + $0x280] sm:$0xff]
  %v92 = vld [vmem:[%s0 + $0x288] sm:$0xff]
  %v93 = vld [vmem:[%s0 + $0x290] sm:$0xff]
  %v94 = vld [vmem:[%s0 + $0x298] sm:$0xff]
  %v95 = vld [vmem:[%s0 + $0x2a0] sm:$0xff]
  %v96 = vld [vmem:[%s0 + $0x2a8] sm:$0xff]
  %v97 = vld [vmem:[%s0 + $0x2b0] sm:$0xff]
  %v98 = vld [vmem:[%s0 + $0x2b8] sm:$0xff]
  %v99 = vld [vmem:[%s0 + $0x2c0] sm:$0xff]
  %v100 = vld [vmem:[%s0 + $0x2c8] sm:$0xff]
  %v101 = vld [vmem:[%s0 + $0x2d0] sm:$0xff]
  %v102 = vld [vmem:[%s0 + $0x2d8] sm:$0xff]
  %v103 = vld [vmem:[%s0 + $0x2e0] sm:$0xff]
  %v104 = vld [vmem:[%s0 + $0x2e8] sm:$0xff]
  %v105 = vld [vmem:[%s0 + $0x2f0] sm:$0xff]
  %v106 = vld [vmem:[%s0 + $0x2f8] sm:$0xff]
  %v107 = vld [vmem:[%s0 + $0x300] sm:$0xff]
  %v108 = vld [vmem:[%s0 + $0x308] sm:$0xff]
  %v109 = vld [vmem:[%s0 + $0x310] sm:$0xff]
  %v110 = vld [vmem:[%s0 + $0x318] sm:$0xff]
  %v111 = vld [vmem:[%s0 + $0x320] sm:$0xff]
  %v112 = vld [vmem:[%s0 + $0x328] sm:$0xff]
  %v113 = vld [vmem:[%s0 + $0x330] sm:$0xff]
  %v114 = vld [vmem:[%s0 + $0x338] sm:$0xff]
  %v115 = vld [vmem:[%s0 + $0x340] sm:$0xff]
  %v116 = vld [vmem:[%s0 + $0x348] sm:$0xff]
  %v117 = vld [vmem:[%s0 + $0x350] sm:$0xff]
  %v118 = vld [vmem:[%s0 + $0x358] sm:$0xff]
  %v119 = vld [vmem:[%s0 + $0x360] sm:$0xff]
  %v120 = vld [vmem:[%s0 + $0x368] sm:$0xff]
  %v121 = vld [vmem:[%s0 + $0x370] sm:$0xff]
  %v122 = vld [vmem:[%s0 + $0x378] sm:$0xff]
  %v123 = vld [vmem:[%s0 + $0x380] sm:$0xff]
  %v124 = vld [vmem:[%s0 + $0x388] sm:$0xff]
  %v125 = vld [vmem:[%s0 + $0x390] sm:$0xff]
  %v126 = vld [vmem:[%s0 + $0x398] sm:$0xff]
  %v127 = vld [vmem:[%s0 + $0x3a0] sm:$0xff]
  %v128 = vld [vmem:[%s0 + $0x3a8] sm:$0xff]
  %v129 = vld [vmem:[%s0 + $0x3b0] sm:$0xff]
  %v130 = vld [vmem:[%s0 + $0x3b8] sm:$0xff]
  %v131 = vld [vmem:[%s0 + $0x3c0] sm:$0xff]
  %v132 = vld [vmem:[%s0 + $0x3c8] sm:$0xff]
  %v133 = vld [vmem:[%s0 + $0x3d0] sm:$0xff]
  %v134 = vld [vmem:[%s0 + $0x3d8] sm:$0xff]
  %v135 = vld [vmem:[%s0 + $0x3e0] sm:$0xff]
  %v136 = vld [vmem:[%s0 + $0x3e8] sm:$0xff]
  %v137 = vld [vmem:[%s0 + $0x3f0] sm:$0xff]
  %v138 = vld [vmem:[%s0 + $0x3f8] sm:$0xff]
  %v139 = vld [vmem:[%s0 + $0x400] sm:$0xff]
  %v140 = vld [vmem:[%s0 + $0x408] sm:$0xff]
  %v141 = vld [vmem:[%s0 + $0x410] sm:$0xff]
  %v142 = vld [vmem:[%s0 + $0x418] sm:$0xff]
  %v143 = vld [vmem:[%s0 + $0x420] sm:$0xff]
  %v144 = vld [vmem:[%s0 + $0x428] sm:$0xff]
  %v145 = vld [vmem:[%s0 + $0x430] sm:$0xff]
  %v146 = vld [vmem:[%s0 + $0x438] sm:$0xff]
  %v147 = vld [vmem:[%s0 + $0x440] sm:$0xff]
  %v148 = vld [vmem:[%s0 + $0x448] sm:$0xff]
  %v149 = vld [vmem:[%s0 + $0x450] sm:$0xff]
  %v150 = vld [vmem:[%s0 + $0x458] sm:$0xff]
  %v151 = vld [vmem:[%s0 + $0x460] sm:$0xff]
  %v152 = vld [vmem:[%s0 + $0x468] sm:$0xff]
  %v153 = vld [vmem:[%s0 + $0x470] sm:$0xff]
  %v154 = vld [vmem:[%s0 + $0x478] sm:$0xff]
  %v155 = vld [vmem:[%s0 + $0x480] sm:$0xff]
  %v156 = vld [vmem:[%s0 + $0x488] sm:$0xff]
  %v157 = vld [vmem:[%s0 + $0x490] sm:$0xff]
  %v158 = vld [vmem:[%s0 + $0x498] sm:$0xff]
  %v159 = vld [vmem:[%s0 + $0x4a0] sm:$0xff]
  %v160 = vld [vmem:[%s0 + $0x4a8] sm:$0xff]
  %v161 = vld [vmem:[%s0 + $0x4b0] sm:$0xff]
  %v162 = vld [vmem:[%s0 + $0x4b8] sm:$0xff]
  %v163 = vld [vmem:[%s0 + $0x4c0] sm:$0xff]
  %v164 = vld [vmem:[%s0 + $0x4c8] sm:$0xff]
  %v165 = vld [vmem:[%s0 + $0x4d0] sm:$0xff]
  %v166 = vld [vmem:[%s0 + $0x4d8] sm:$0xff]
  %v167 = vld [vmem:[%s0 + $0x4e0] sm:$0xff]
  %v168 = vld [vmem:[%s0 + $0x4e8] sm:$0xff]
  %v169 = vld [vmem:[%s0 + $0x4f0] sm:$0xff]
  %v170 = vld [vmem:[%s0 + $0x4f8] sm:$0xff]
  %v171 = vld [vmem:[%s0 + $0x500] sm:$0xff]
  %v172 = vld [vmem:[%s0 + $0x508] sm:$0xff]
  %v173 = vld [vmem:[%s0 + $0x510] sm:$0xff]
  %v174 = vld [vmem:[%s0 + $0x518] sm:$0xff]
  %v175 = vld [vmem:[%s0 + $0x520] sm:$0xff]
  %v176 = vld [vmem:[%s0 + $0x528] sm:$0xff]
  %v177 = vld [vmem:[%s0 + $0x530] sm:$0xff]
  %v178 = vld [vmem:[%s0 + $0x538] sm:$0xff]
  %v179 = vxor.u32 %v11, 2147483648
  %v180 = vxor.u32 %v12, 2147483648
  %v181 = vxor.u32 %v13, 2147483648
  %v182 = vxor.u32 %v14, 2147483648
  %v183 = vxor.u32 %v15, 2147483648
  %v184 = vxor.u32 %v16, 2147483648
  %v185 = vxor.u32 %v17, 2147483648
  %v186 = vxor.u32 %v18, 2147483648
  %v187 = vxor.u32 %v19, 2147483648
  %v188 = vxor.u32 %v20, 2147483648
  %v189 = vxor.u32 %v21, 2147483648
  %v190 = vxor.u32 %v22, 2147483648
  %v191 = vxor.u32 %v23, 2147483648
  %v192 = vxor.u32 %v24, 2147483648
  %v193 = vxor.u32 %v25, 2147483648
  %v194 = vxor.u32 %v26, 2147483648
  %v195 = vxor.u32 %v27, 2147483648
  %v196 = vxor.u32 %v28, 2147483648
  %v197 = vxor.u32 %v29, 2147483648
  %v198 = vxor.u32 %v30, 2147483648
  %v199 = vxor.u32 %v31, 2147483648
  %v200 = vxor.u32 %v32, 2147483648
  %v201 = vxor.u32 %v33, 2147483648
  %v202 = vxor.u32 %v34, 2147483648
  %v203 = vxor.u32 %v35, 2147483648
  %v204 = vxor.u32 %v36, 2147483648
  %v205 = vxor.u32 %v37, 2147483648
  %v206 = vxor.u32 %v38, 2147483648
  %v207 = vxor.u32 %v39, 2147483648
  %v208 = vxor.u32 %v40, 2147483648
  %v209 = vxor.u32 %v41, 2147483648
  %v210 = vxor.u32 %v42, 2147483648
  %v211 = vxor.u32 %v43, 2147483648
  %v212 = vxor.u32 %v44, 2147483648
  %v213 = vxor.u32 %v45, 2147483648
  %v214 = vxor.u32 %v46, 2147483648
  %v215 = vxor.u32 %v47, 2147483648
  %v216 = vxor.u32 %v48, 2147483648
  %v217 = vxor.u32 %v49, 2147483648
  %v218 = vxor.u32 %v50, 2147483648
  %v219 = vxor.u32 %v51, 2147483648
  %v220 = vxor.u32 %v52, 2147483648
  %v221 = vxor.u32 %v53, 2147483648
  %v222 = vxor.u32 %v54, 2147483648
  %v223 = vxor.u32 %v55, 2147483648
  %v224 = vxor.u32 %v56, 2147483648
  %v225 = vxor.u32 %v57, 2147483648
  %v226 = vxor.u32 %v58, 2147483648
  %v227 = vxor.u32 %v59, 2147483648
  %v228 = vxor.u32 %v60, 2147483648
  %v229 = vxor.u32 %v61, 2147483648
  %v230 = vxor.u32 %v62, 2147483648
  %v231 = vxor.u32 %v63, 2147483648
  %v232 = vxor.u32 %v64, 2147483648
  %v233 = vxor.u32 %v65, 2147483648
  %v234 = vxor.u32 %v66, 2147483648
  %v235 = vxor.u32 %v67, 2147483648
  %v236 = vxor.u32 %v68, 2147483648
  %v237 = vxor.u32 %v69, 2147483648
  %v238 = vxor.u32 %v70, 2147483648
  %v239 = vxor.u32 %v71, 2147483648
  %v240 = vxor.u32 %v72, 2147483648
  %v241 = vxor.u32 %v73, 2147483648
  %v242 = vxor.u32 %v74, 2147483648
  %v243 = vxor.u32 %v75, 2147483648
  %v244 = vxor.u32 %v76, 2147483648
  %v245 = vxor.u32 %v77, 2147483648
  %v246 = vxor.u32 %v78, 2147483648
  %v247 = vxor.u32 %v79, 2147483648
  %v248 = vxor.u32 %v80, 2147483648
  %v249 = vxor.u32 %v81, 2147483648
  %v250 = vxor.u32 %v82, 2147483648
  %v251 = vxor.u32 %v83, 2147483648
  %v252 = vxor.u32 %v84, 2147483648
  %v253 = vxor.u32 %v85, 2147483648
  %v254 = vxor.u32 %v86, 2147483648
  %v255 = vxor.u32 %v87, 2147483648
  %v256 = vxor.u32 %v88, 2147483648
  %v257 = vxor.u32 %v89, 2147483648
  %v258 = vxor.u32 %v90, 2147483648
  %v259 = vxor.u32 %v91, 2147483648
  %v260 = vxor.u32 %v92, 2147483648
  %v261 = vxor.u32 %v93, 2147483648
  %v262 = vxor.u32 %v94, 2147483648
  %v263 = vxor.u32 %v95, 2147483648
  %v264 = vxor.u32 %v96, 2147483648
  %v265 = vxor.u32 %v97, 2147483648
  %v266 = vxor.u32 %v98, 2147483648
  %v267 = vxor.u32 %v99, 2147483648
  %v268 = vxor.u32 %v100, 2147483648
  %v269 = vxor.u32 %v101, 2147483648
  %v270 = vxor.u32 %v102, 2147483648
  %v271 = vxor.u32 %v103, 2147483648
  %v272 = vxor.u32 %v104, 2147483648
  %v273 = vxor.u32 %v105, 2147483648
  %v274 = vxor.u32 %v106, 2147483648
  %v275 = vxor.u32 %v107, 2147483648
  %v276 = vxor.u32 %v108, 2147483648
  %v277 = vxor.u32 %v109, 2147483648
  %v278 = vxor.u32 %v110, 2147483648
  %v279 = vxor.u32 %v111, 2147483648
  %v280 = vxor.u32 %v112, 2147483648
  %v281 = vxor.u32 %v113, 2147483648
  %v282 = vxor.u32 %v114, 2147483648
  %v283 = vxor.u32 %v115, 2147483648
  %v284 = vxor.u32 %v116, 2147483648
  %v285 = vxor.u32 %v117, 2147483648
  %v286 = vxor.u32 %v118, 2147483648
  %v287 = vxor.u32 %v119, 2147483648
  %v288 = vxor.u32 %v120, 2147483648
  %v289 = vxor.u32 %v121, 2147483648
  %v290 = vxor.u32 %v122, 2147483648
  %v291 = vxor.u32 %v123, 2147483648
  %v292 = vxor.u32 %v124, 2147483648
  %v293 = vxor.u32 %v125, 2147483648
  %v294 = vxor.u32 %v126, 2147483648
  %v295 = vxor.u32 %v127, 2147483648
  %v296 = vxor.u32 %v128, 2147483648
  %v297 = vxor.u32 %v129, 2147483648
  %v298 = vxor.u32 %v130, 2147483648
  %v299 = vxor.u32 %v131, 2147483648
  %v300 = vxor.u32 %v132, 2147483648
  %v301 = vxor.u32 %v133, 2147483648
  %v302 = vxor.u32 %v134, 2147483648
  %v303 = vxor.u32 %v135, 2147483648
  %v304 = vxor.u32 %v136, 2147483648
  %v305 = vxor.u32 %v137, 2147483648
  %v306 = vxor.u32 %v138, 2147483648
  %v307 = vxor.u32 %v139, 2147483648
  %v308 = vxor.u32 %v140, 2147483648
  %v309 = vxor.u32 %v141, 2147483648
  %v310 = vxor.u32 %v142, 2147483648
  %v311 = vxor.u32 %v143, 2147483648
  %v312 = vxor.u32 %v144, 2147483648
  %v313 = vxor.u32 %v145, 2147483648
  %v314 = vxor.u32 %v146, 2147483648
  %v315 = vxor.u32 %v147, 2147483648
  %v316 = vxor.u32 %v148, 2147483648
  %v317 = vxor.u32 %v149, 2147483648
  %v318 = vxor.u32 %v150, 2147483648
  %v319 = vxor.u32 %v151, 2147483648
  %v320 = vxor.u32 %v152, 2147483648
  %v321 = vxor.u32 %v153, 2147483648
  %v322 = vxor.u32 %v154, 2147483648
  %v323 = vxor.u32 %v155, 2147483648
  %v324 = vxor.u32 %v156, 2147483648
  %v325 = vxor.u32 %v157, 2147483648
  %v326 = vxor.u32 %v158, 2147483648
  %v327 = vxor.u32 %v159, 2147483648
  %v328 = vxor.u32 %v160, 2147483648
  %v329 = vxor.u32 %v161, 2147483648
  %v330 = vxor.u32 %v162, 2147483648
  %v331 = vxor.u32 %v163, 2147483648
  %v332 = vxor.u32 %v164, 2147483648
  %v333 = vxor.u32 %v165, 2147483648
  %v334 = vxor.u32 %v166, 2147483648
  %v335 = vxor.u32 %v167, 2147483648
  %v336 = vxor.u32 %v168, 2147483648
  %v337 = vxor.u32 %v169, 2147483648
  %v338 = vxor.u32 %v170, 2147483648
  %v339 = vxor.u32 %v171, 2147483648
  %v340 = vxor.u32 %v172, 2147483648
  %v341 = vxor.u32 %v173, 2147483648
  %v342 = vxor.u32 %v174, 2147483648
  %v343 = vxor.u32 %v175, 2147483648
  %v344 = vxor.u32 %v176, 2147483648
  %v345 = vxor.u32 %v177, 2147483648
  %v346 = vxor.u32 %v178, 2147483648
  %v347 = vmul.f32 %v179, 1.442695
  %v348 = vpow.pop %v347
  %v349 = vmul.f32 %v180, 1.442695
  %v350 = vpow.pop %v349
  %v351 = vmul.f32 %v181, 1.442695
  %v352 = vpow.pop %v351
  %v353 = vmul.f32 %v182, 1.442695
  %v354 = vpow.pop %v353
  %v355 = vmul.f32 %v183, 1.442695
  %v356 = vpow.pop %v355
  %v357 = vmul.f32 %v184, 1.442695
  %v358 = vpow.pop %v357
  %v359 = vmul.f32 %v185, 1.442695
  %v360 = vpow.pop %v359
  %v361 = vmul.f32 %v186, 1.442695
  %v362 = vpow.pop %v361
  %v363 = vmul.f32 %v187, 1.442695
  %v364 = vpow.pop %v363
  %v365 = vmul.f32 %v188, 1.442695
  %v366 = vpow.pop %v365
  %v367 = vmul.f32 %v189, 1.442695
  %v368 = vpow.pop %v367
  %v369 = vmul.f32 %v190, 1.442695
  %v370 = vpow.pop %v369
  %v371 = vmul.f32 %v191, 1.442695
  %v372 = vpow.pop %v371
  %v373 = vmul.f32 %v192, 1.442695
  %v374 = vpow.pop %v373
  %v375 = vmul.f32 %v193, 1.442695
  %v376 = vpow.pop %v375
  %v377 = vmul.f32 %v194, 1.442695
  %v378 = vpow.pop %v377
  %v379 = vmul.f32 %v195, 1.442695
  %v380 = vpow.pop %v379
  %v381 = vmul.f32 %v196, 1.442695
  %v382 = vpow.pop %v381
  %v383 = vmul.f32 %v197, 1.442695
  %v384 = vpow.pop %v383
  %v385 = vmul.f32 %v198, 1.442695
  %v386 = vpow.pop %v385
  %v387 = vmul.f32 %v199, 1.442695
  %v388 = vpow.pop %v387
  %v389 = vmul.f32 %v200, 1.442695
  %v390 = vpow.pop %v389
  %v391 = vmul.f32 %v201, 1.442695
  %v392 = vpow.pop %v391
  %v393 = vmul.f32 %v202, 1.442695
  %v394 = vpow.pop %v393
  %v395 = vmul.f32 %v203, 1.442695
  %v396 = vpow.pop %v395
  %v397 = vmul.f32 %v204, 1.442695
  %v398 = vpow.pop %v397
  %v399 = vmul.f32 %v205, 1.442695
  %v400 = vpow.pop %v399
  %v401 = vmul.f32 %v206, 1.442695
  %v402 = vpow.pop %v401
  %v403 = vmul.f32 %v207, 1.442695
  %v404 = vpow.pop %v403
  %v405 = vmul.f32 %v208, 1.442695
  %v406 = vpow.pop %v405
  %v407 = vmul.f32 %v209, 1.442695
  %v408 = vpow.pop %v407
  %v409 = vmul.f32 %v210, 1.442695
  %v410 = vpow.pop %v409
  %v411 = vmul.f32 %v211, 1.442695
  %v412 = vpow.pop %v411
  %v413 = vmul.f32 %v212, 1.442695
  %v414 = vpow.pop %v413
  %v415 = vmul.f32 %v213, 1.442695
  %v416 = vpow.pop %v415
  %v417 = vmul.f32 %v214, 1.442695
  %v418 = vpow.pop %v417
  %v419 = vmul.f32 %v215, 1.442695
  %v420 = vpow.pop %v419
  %v421 = vmul.f32 %v216, 1.442695
  %v422 = vpow.pop %v421
  %v423 = vmul.f32 %v217, 1.442695
  %v424 = vpow.pop %v423
  %v425 = vmul.f32 %v218, 1.442695
  %v426 = vpow.pop %v425
  %v427 = vmul.f32 %v219, 1.442695
  %v428 = vpow.pop %v427
  %v429 = vmul.f32 %v220, 1.442695
  %v430 = vpow.pop %v429
  %v431 = vmul.f32 %v221, 1.442695
  %v432 = vpow.pop %v431
  %v433 = vmul.f32 %v222, 1.442695
  %v434 = vpow.pop %v433
  %v435 = vmul.f32 %v223, 1.442695
  %v436 = vpow.pop %v435
  %v437 = vmul.f32 %v224, 1.442695
  %v438 = vpow.pop %v437
  %v439 = vmul.f32 %v225, 1.442695
  %v440 = vpow.pop %v439
  %v441 = vmul.f32 %v226, 1.442695
  %v442 = vpow.pop %v441
  %v443 = vmul.f32 %v227, 1.442695
  %v444 = vpow.pop %v443
  %v445 = vmul.f32 %v228, 1.442695
  %v446 = vpow.pop %v445
  %v447 = vmul.f32 %v229, 1.442695
  %v448 = vpow.pop %v447
  %v449 = vmul.f32 %v230, 1.442695
  %v450 = vpow.pop %v449
  %v451 = vmul.f32 %v231, 1.442695
  %v452 = vpow.pop %v451
  %v453 = vmul.f32 %v232, 1.442695
  %v454 = vpow.pop %v453
  %v455 = vmul.f32 %v233, 1.442695
  %v456 = vpow.pop %v455
  %v457 = vmul.f32 %v234, 1.442695
  %v458 = vpow.pop %v457
  %v459 = vmul.f32 %v235, 1.442695
  %v460 = vpow.pop %v459
  %v461 = vmul.f32 %v236, 1.442695
  %v462 = vpow.pop %v461
  %v463 = vmul.f32 %v237, 1.442695
  %v464 = vpow.pop %v463
  %v465 = vmul.f32 %v238, 1.442695
  %v466 = vpow.pop %v465
  %v467 = vmul.f32 %v239, 1.442695
  %v468 = vpow.pop %v467
  %v469 = vmul.f32 %v240, 1.442695
  %v470 = vpow.pop %v469
  %v471 = vmul.f32 %v241, 1.442695
  %v472 = vpow.pop %v471
  %v473 = vmul.f32 %v242, 1.442695
  %v474 = vpow.pop %v473
  %v475 = vmul.f32 %v243, 1.442695
  %v476 = vpow.pop %v475
  %v477 = vmul.f32 %v244, 1.442695
  %v478 = vpow.pop %v477
  %v479 = vmul.f32 %v245, 1.442695
  %v480 = vpow.pop %v479
  %v481 = vmul.f32 %v246, 1.442695
  %v482 = vpow.pop %v481
  %v483 = vmul.f32 %v247, 1.442695
  %v484 = vpow.pop %v483
  %v485 = vmul.f32 %v248, 1.442695
  %v486 = vpow.pop %v485
  %v487 = vmul.f32 %v249, 1.442695
  %v488 = vpow.pop %v487
  %v489 = vmul.f32 %v250, 1.442695
  %v490 = vpow.pop %v489
  %v491 = vmul.f32 %v251, 1.442695
  %v492 = vpow.pop %v491
  %v493 = vmul.f32 %v252, 1.442695
  %v494 = vpow.pop %v493
  %v495 = vmul.f32 %v253, 1.442695
  %v496 = vpow.pop %v495
  %v497 = vmul.f32 %v254, 1.442695
  %v498 = vpow.pop %v497
  %v499 = vmul.f32 %v255, 1.442695
  %v500 = vpow.pop %v499
  %v501 = vmul.f32 %v256, 1.442695
  %v502 = vpow.pop %v501
  %v503 = vmul.f32 %v257, 1.442695
  %v504 = vpow.pop %v503
  %v505 = vmul.f32 %v258, 1.442695
  %v506 = vpow.pop %v505
  %v507 = vmul.f32 %v259, 1.442695
  %v508 = vpow.pop %v507
  %v509 = vmul.f32 %v260, 1.442695
  %v510 = vpow.pop %v509
  %v511 = vmul.f32 %v261, 1.442695
  %v512 = vpow.pop %v511
  %v513 = vmul.f32 %v262, 1.442695
  %v514 = vpow.pop %v513
  %v515 = vmul.f32 %v263, 1.442695
  %v516 = vpow.pop %v515
  %v517 = vmul.f32 %v264, 1.442695
  %v518 = vpow.pop %v517
  %v519 = vmul.f32 %v265, 1.442695
  %v520 = vpow.pop %v519
  %v521 = vmul.f32 %v266, 1.442695
  %v522 = vpow.pop %v521
  %v523 = vmul.f32 %v267, 1.442695
  %v524 = vpow.pop %v523
  %v525 = vmul.f32 %v268, 1.442695
  %v526 = vpow.pop %v525
  %v527 = vmul.f32 %v269, 1.442695
  %v528 = vpow.pop %v527
  %v529 = vmul.f32 %v270, 1.442695
  %v530 = vpow.pop %v529
  %v531 = vmul.f32 %v271, 1.442695
  %v532 = vpow.pop %v531
  %v533 = vmul.f32 %v272, 1.442695
  %v534 = vpow.pop %v533
  %v535 = vmul.f32 %v273, 1.442695
  %v536 = vpow.pop %v535
  %v537 = vmul.f32 %v274, 1.442695
  %v538 = vpow.pop %v537
  %v539 = vmul.f32 %v275, 1.442695
  %v540 = vpow.pop %v539
  %v541 = vmul.f32 %v276, 1.442695
  %v542 = vpow.pop %v541
  %v543 = vmul.f32 %v277, 1.442695
  %v544 = vpow.pop %v543
  %v545 = vmul.f32 %v278, 1.442695
  %v546 = vpow.pop %v545
  %v547 = vmul.f32 %v279, 1.442695
  %v548 = vpow.pop %v547
  %v549 = vmul.f32 %v280, 1.442695
  %v550 = vpow.pop %v549
  %v551 = vmul.f32 %v281, 1.442695
  %v552 = vpow.pop %v551
  %v553 = vmul.f32 %v282, 1.442695
  %v554 = vpow.pop %v553
  %v555 = vmul.f32 %v283, 1.442695
  %v556 = vpow.pop %v555
  %v557 = vmul.f32 %v284, 1.442695
  %v558 = vpow.pop %v557
  %v559 = vmul.f32 %v285, 1.442695
  %v560 = vpow.pop %v559
  %v561 = vmul.f32 %v286, 1.442695
  %v562 = vpow.pop %v561
  %v563 = vmul.f32 %v287, 1.442695
  %v564 = vpow.pop %v563
  %v565 = vmul.f32 %v288, 1.442695
  %v566 = vpow.pop %v565
  %v567 = vmul.f32 %v289, 1.442695
  %v568 = vpow.pop %v567
  %v569 = vmul.f32 %v290, 1.442695
  %v570 = vpow.pop %v569
  %v571 = vmul.f32 %v291, 1.442695
  %v572 = vpow.pop %v571
  %v573 = vmul.f32 %v292, 1.442695
  %v574 = vpow.pop %v573
  %v575 = vmul.f32 %v293, 1.442695
  %v576 = vpow.pop %v575
  %v577 = vmul.f32 %v294, 1.442695
  %v578 = vpow.pop %v577
  %v579 = vmul.f32 %v295, 1.442695
  %v580 = vpow.pop %v579
  %v581 = vmul.f32 %v296, 1.442695
  %v582 = vpow.pop %v581
  %v583 = vmul.f32 %v297, 1.442695
  %v584 = vpow.pop %v583
  %v585 = vmul.f32 %v298, 1.442695
  %v586 = vpow.pop %v585
  %v587 = vmul.f32 %v299, 1.442695
  %v588 = vpow.pop %v587
  %v589 = vmul.f32 %v300, 1.442695
  %v590 = vpow.pop %v589
  %v591 = vmul.f32 %v301, 1.442695
  %v592 = vpow.pop %v591
  %v593 = vmul.f32 %v302, 1.442695
  %v594 = vpow.pop %v593
  %v595 = vmul.f32 %v303, 1.442695
  %v596 = vpow.pop %v595
  %v597 = vmul.f32 %v304, 1.442695
  %v598 = vpow.pop %v597
  %v599 = vmul.f32 %v305, 1.442695
  %v600 = vpow.pop %v599
  %v601 = vmul.f32 %v306, 1.442695
  %v602 = vpow.pop %v601
  %v603 = vmul.f32 %v307, 1.442695
  %v604 = vpow.pop %v603
  %v605 = vmul.f32 %v308, 1.442695
  %v606 = vpow.pop %v605
  %v607 = vmul.f32 %v309, 1.442695
  %v608 = vpow.pop %v607
  %v609 = vmul.f32 %v310, 1.442695
  %v610 = vpow.pop %v609
  %v611 = vmul.f32 %v311, 1.442695
  %v612 = vpow.pop %v611
  %v613 = vmul.f32 %v312, 1.442695
  %v614 = vpow.pop %v613
  %v615 = vmul.f32 %v313, 1.442695
  %v616 = vpow.pop %v615
  %v617 = vmul.f32 %v314, 1.442695
  %v618 = vpow.pop %v617
  %v619 = vmul.f32 %v315, 1.442695
  %v620 = vpow.pop %v619
  %v621 = vmul.f32 %v316, 1.442695
  %v622 = vpow.pop %v621
  %v623 = vmul.f32 %v317, 1.442695
  %v624 = vpow.pop %v623
  %v625 = vmul.f32 %v318, 1.442695
  %v626 = vpow.pop %v625
  %v627 = vmul.f32 %v319, 1.442695
  %v628 = vpow.pop %v627
  %v629 = vmul.f32 %v320, 1.442695
  %v630 = vpow.pop %v629
  %v631 = vmul.f32 %v321, 1.442695
  %v632 = vpow.pop %v631
  %v633 = vmul.f32 %v322, 1.442695
  %v634 = vpow.pop %v633
  %v635 = vmul.f32 %v323, 1.442695
  %v636 = vpow.pop %v635
  %v637 = vmul.f32 %v324, 1.442695
  %v638 = vpow.pop %v637
  %v639 = vmul.f32 %v325, 1.442695
  %v640 = vpow.pop %v639
  %v641 = vmul.f32 %v326, 1.442695
  %v642 = vpow.pop %v641
  %v643 = vmul.f32 %v327, 1.442695
  %v644 = vpow.pop %v643
  %v645 = vmul.f32 %v328, 1.442695
  %v646 = vpow.pop %v645
  %v647 = vmul.f32 %v329, 1.442695
  %v648 = vpow.pop %v647
  %v649 = vmul.f32 %v330, 1.442695
  %v650 = vpow.pop %v649
  %v651 = vmul.f32 %v331, 1.442695
  %v652 = vpow.pop %v651
  %v653 = vmul.f32 %v332, 1.442695
  %v654 = vpow.pop %v653
  %v655 = vmul.f32 %v333, 1.442695
  %v656 = vpow.pop %v655
  %v657 = vmul.f32 %v334, 1.442695
  %v658 = vpow.pop %v657
  %v659 = vmul.f32 %v335, 1.442695
  %v660 = vpow.pop %v659
  %v661 = vmul.f32 %v336, 1.442695
  %v662 = vpow.pop %v661
  %v663 = vmul.f32 %v337, 1.442695
  %v664 = vpow.pop %v663
  %v665 = vmul.f32 %v338, 1.442695
  %v666 = vpow.pop %v665
  %v667 = vmul.f32 %v339, 1.442695
  %v668 = vpow.pop %v667
  %v669 = vmul.f32 %v340, 1.442695
  %v670 = vpow.pop %v669
  %v671 = vmul.f32 %v341, 1.442695
  %v672 = vpow.pop %v671
  %v673 = vmul.f32 %v342, 1.442695
  %v674 = vpow.pop %v673
  %v675 = vmul.f32 %v343, 1.442695
  %v676 = vpow.pop %v675
  %v677 = vmul.f32 %v344, 1.442695
  %v678 = vpow.pop %v677
  %v679 = vmul.f32 %v345, 1.442695
  %v680 = vpow.pop %v679
  %v681 = vmul.f32 %v346, 1.442695
  %v682 = vpow.pop %v681
  %v683 = vadd.f32 %v348, 1.0
  %v684 = vadd.f32 %v350, 1.0
  %v685 = vadd.f32 %v352, 1.0
  %v686 = vadd.f32 %v354, 1.0
  %v687 = vadd.f32 %v356, 1.0
  %v688 = vadd.f32 %v358, 1.0
  %v689 = vadd.f32 %v360, 1.0
  %v690 = vadd.f32 %v362, 1.0
  %v691 = vadd.f32 %v364, 1.0
  %v692 = vadd.f32 %v366, 1.0
  %v693 = vadd.f32 %v368, 1.0
  %v694 = vadd.f32 %v370, 1.0
  %v695 = vadd.f32 %v372, 1.0
  %v696 = vadd.f32 %v374, 1.0
  %v697 = vadd.f32 %v376, 1.0
  %v698 = vadd.f32 %v378, 1.0
  %v699 = vadd.f32 %v380, 1.0
  %v700 = vadd.f32 %v382, 1.0
  %v701 = vadd.f32 %v384, 1.0
  %v702 = vadd.f32 %v386, 1.0
  %v703 = vadd.f32 %v388, 1.0
  %v704 = vadd.f32 %v390, 1.0
  %v705 = vadd.f32 %v392, 1.0
  %v706 = vadd.f32 %v394, 1.0
  %v707 = vadd.f32 %v396, 1.0
  %v708 = vadd.f32 %v398, 1.0
  %v709 = vadd.f32 %v400, 1.0
  %v710 = vadd.f32 %v402, 1.0
  %v711 = vadd.f32 %v404, 1.0
  %v712 = vadd.f32 %v406, 1.0
  %v713 = vadd.f32 %v408, 1.0
  %v714 = vadd.f32 %v410, 1.0
  %v715 = vadd.f32 %v412, 1.0
  %v716 = vadd.f32 %v414, 1.0
  %v717 = vadd.f32 %v416, 1.0
  %v718 = vadd.f32 %v418, 1.0
  %v719 = vadd.f32 %v420, 1.0
  %v720 = vadd.f32 %v422, 1.0
  %v721 = vadd.f32 %v424, 1.0
  %v722 = vadd.f32 %v426, 1.0
  %v723 = vadd.f32 %v428, 1.0
  %v724 = vadd.f32 %v430, 1.0
  %v725 = vadd.f32 %v432, 1.0
  %v726 = vadd.f32 %v434, 1.0
  %v727 = vadd.f32 %v436, 1.0
  %v728 = vadd.f32 %v438, 1.0
  %v729 = vadd.f32 %v440, 1.0
  %v730 = vadd.f32 %v442, 1.0
  %v731 = vadd.f32 %v444, 1.0
  %v732 = vadd.f32 %v446, 1.0
  %v733 = vadd.f32 %v448, 1.0
  %v734 = vadd.f32 %v450, 1.0
  %v735 = vadd.f32 %v452, 1.0
  %v736 = vadd.f32 %v454, 1.0
  %v737 = vadd.f32 %v456, 1.0
  %v738 = vadd.f32 %v458, 1.0
  %v739 = vadd.f32 %v460, 1.0
  %v740 = vadd.f32 %v462, 1.0
  %v741 = vadd.f32 %v464, 1.0
  %v742 = vadd.f32 %v466, 1.0
  %v743 = vadd.f32 %v468, 1.0
  %v744 = vadd.f32 %v470, 1.0
  %v745 = vadd.f32 %v472, 1.0
  %v746 = vadd.f32 %v474, 1.0
  %v747 = vadd.f32 %v476, 1.0
  %v748 = vadd.f32 %v478, 1.0
  %v749 = vadd.f32 %v480, 1.0
  %v750 = vadd.f32 %v482, 1.0
  %v751 = vadd.f32 %v484, 1.0
  %v752 = vadd.f32 %v486, 1.0
  %v753 = vadd.f32 %v488, 1.0
  %v754 = vadd.f32 %v490, 1.0
  %v755 = vadd.f32 %v492, 1.0
  %v756 = vadd.f32 %v494, 1.0
  %v757 = vadd.f32 %v496, 1.0
  %v758 = vadd.f32 %v498, 1.0
  %v759 = vadd.f32 %v500, 1.0
  %v760 = vadd.f32 %v502, 1.0
  %v761 = vadd.f32 %v504, 1.0
  %v762 = vadd.f32 %v506, 1.0
  %v763 = vadd.f32 %v508, 1.0
  %v764 = vadd.f32 %v510, 1.0
  %v765 = vadd.f32 %v512, 1.0
  %v766 = vadd.f32 %v514, 1.0
  %v767 = vadd.f32 %v516, 1.0
  %v768 = vadd.f32 %v518, 1.0
  %v769 = vadd.f32 %v520, 1.0
  %v770 = vadd.f32 %v522, 1.0
  %v771 = vadd.f32 %v524, 1.0
  %v772 = vadd.f32 %v526, 1.0
  %v773 = vadd.f32 %v528, 1.0
  %v774 = vadd.f32 %v530, 1.0
  %v775 = vadd.f32 %v532, 1.0
  %v776 = vadd.f32 %v534, 1.0
  %v777 = vadd.f32 %v536, 1.0
  %v778 = vadd.f32 %v538, 1.0
  %v779 = vadd.f32 %v540, 1.0
  %v780 = vadd.f32 %v542, 1.0
  %v781 = vadd.f32 %v544, 1.0
  %v782 = vadd.f32 %v546, 1.0
  %v783 = vadd.f32 %v548, 1.0
  %v784 = vadd.f32 %v550, 1.0
  %v785 = vadd.f32 %v552, 1.0
  %v786 = vadd.f32 %v554, 1.0
  %v787 = vadd.f32 %v556, 1.0
  %v788 = vadd.f32 %v558, 1.0
  %v789 = vadd.f32 %v560, 1.0
  %v790 = vadd.f32 %v562, 1.0
  %v791 = vadd.f32 %v564, 1.0
  %v792 = vadd.f32 %v566, 1.0
  %v793 = vadd.f32 %v568, 1.0
  %v794 = vadd.f32 %v570, 1.0
  %v795 = vadd.f32 %v572, 1.0
  %v796 = vadd.f32 %v574, 1.0
  %v797 = vadd.f32 %v576, 1.0
  %v798 = vadd.f32 %v578, 1.0
  %v799 = vadd.f32 %v580, 1.0
  %v800 = vadd.f32 %v582, 1.0
  %v801 = vadd.f32 %v584, 1.0
  %v802 = vadd.f32 %v586, 1.0
  %v803 = vadd.f32 %v588, 1.0
  %v804 = vadd.f32 %v590, 1.0
  %v805 = vadd.f32 %v592, 1.0
  %v806 = vadd.f32 %v594, 1.0
  %v807 = vadd.f32 %v596, 1.0
  %v808 = vadd.f32 %v598, 1.0
  %v809 = vadd.f32 %v600, 1.0
  %v810 = vadd.f32 %v602, 1.0
  %v811 = vadd.f32 %v604, 1.0
  %v812 = vadd.f32 %v606, 1.0
  %v813 = vadd.f32 %v608, 1.0
  %v814 = vadd.f32 %v610, 1.0
  %v815 = vadd.f32 %v612, 1.0
  %v816 = vadd.f32 %v614, 1.0
  %v817 = vadd.f32 %v616, 1.0
  %v818 = vadd.f32 %v618, 1.0
  %v819 = vadd.f32 %v620, 1.0
  %v820 = vadd.f32 %v622, 1.0
  %v821 = vadd.f32 %v624, 1.0
  %v822 = vadd.f32 %v626, 1.0
  %v823 = vadd.f32 %v628, 1.0
  %v824 = vadd.f32 %v630, 1.0
  %v825 = vadd.f32 %v632, 1.0
  %v826 = vadd.f32 %v634, 1.0
  %v827 = vadd.f32 %v636, 1.0
  %v828 = vadd.f32 %v638, 1.0
  %v829 = vadd.f32 %v640, 1.0
  %v830 = vadd.f32 %v642, 1.0
  %v831 = vadd.f32 %v644, 1.0
  %v832 = vadd.f32 %v646, 1.0
  %v833 = vadd.f32 %v648, 1.0
  %v834 = vadd.f32 %v650, 1.0
  %v835 = vadd.f32 %v652, 1.0
  %v836 = vadd.f32 %v654, 1.0
  %v837 = vadd.f32 %v656, 1.0
  %v838 = vadd.f32 %v658, 1.0
  %v839 = vadd.f32 %v660, 1.0
  %v840 = vadd.f32 %v662, 1.0
  %v841 = vadd.f32 %v664, 1.0
  %v842 = vadd.f32 %v666, 1.0
  %v843 = vadd.f32 %v668, 1.0
  %v844 = vadd.f32 %v670, 1.0
  %v845 = vadd.f32 %v672, 1.0
  %v846 = vadd.f32 %v674, 1.0
  %v847 = vadd.f32 %v676, 1.0
  %v848 = vadd.f32 %v678, 1.0
  %v849 = vadd.f32 %v680, 1.0
  %v850 = vadd.f32 %v682, 1.0
  %v851 = vrcp.pop %v683
  %v852 = vmul.f32 %v683, %v851
  %v853 = vsub.f32 1.0, %v852
  %v854 = vmul.f32 %v851, %v853
  %v855 = vadd.f32 %v851, %v854
  %vm856 = vweird.f32 %v683
  %vm857 = vweird.f32 %v851
  %vm858 = vmor %vm856, %vm857
  %v859 = vsel %vm858, %v851, %v855
  %v860 = vand.u32 2147483647, %v683
  %vm861 = vcmp.eq.f32.partialorder %v860, 8.507059e+37
  %v862 = vand.u32 %v683, 2147483648
  %v863 = vor.u32 1.1754944e-38, %v862
  %v864 = vsel %vm861, %v863, %v859
  %v865 = vmul.f32 1.0, %v864
  %v866 = vrcp.pop %v684
  %v867 = vmul.f32 %v684, %v866
  %v868 = vsub.f32 1.0, %v867
  %v869 = vmul.f32 %v866, %v868
  %v870 = vadd.f32 %v866, %v869
  %vm871 = vweird.f32 %v684
  %vm872 = vweird.f32 %v866
  %vm873 = vmor %vm871, %vm872
  %v874 = vsel %vm873, %v866, %v870
  %v875 = vand.u32 2147483647, %v684
  %vm876 = vcmp.eq.f32.partialorder %v875, 8.507059e+37
  %v877 = vand.u32 %v684, 2147483648
  %v878 = vor.u32 1.1754944e-38, %v877
  %v879 = vsel %vm876, %v878, %v874
  %v880 = vmul.f32 1.0, %v879
  %v881 = vrcp.pop %v685
  %v882 = vmul.f32 %v685, %v881
  %v883 = vsub.f32 1.0, %v882
  %v884 = vmul.f32 %v881, %v883
  %v885 = vadd.f32 %v881, %v884
  %vm886 = vweird.f32 %v685
  %vm887 = vweird.f32 %v881
  %vm888 = vmor %vm886, %vm887
  %v889 = vsel %vm888, %v881, %v885
  %v890 = vand.u32 2147483647, %v685
  %vm891 = vcmp.eq.f32.partialorder %v890, 8.507059e+37
  %v892 = vand.u32 %v685, 2147483648
  %v893 = vor.u32 1.1754944e-38, %v892
  %v894 = vsel %vm891, %v893, %v889
  %v895 = vmul.f32 1.0, %v894
  %v896 = vrcp.pop %v686
  %v897 = vmul.f32 %v686, %v896
  %v898 = vsub.f32 1.0, %v897
  %v899 = vmul.f32 %v896, %v898
  %v900 = vadd.f32 %v896, %v899
  %vm901 = vweird.f32 %v686
  %vm902 = vweird.f32 %v896
  %vm903 = vmor %vm901, %vm902
  %v904 = vsel %vm903, %v896, %v900
  %v905 = vand.u32 2147483647, %v686
  %vm906 = vcmp.eq.f32.partialorder %v905, 8.507059e+37
  %v907 = vand.u32 %v686, 2147483648
  %v908 = vor.u32 1.1754944e-38, %v907
  %v909 = vsel %vm906, %v908, %v904
  %v910 = vmul.f32 1.0, %v909
  %v911 = vrcp.pop %v687
  %v912 = vmul.f32 %v687, %v911
  %v913 = vsub.f32 1.0, %v912
  %v914 = vmul.f32 %v911, %v913
  %v915 = vadd.f32 %v911, %v914
  %vm916 = vweird.f32 %v687
  %vm917 = vweird.f32 %v911
  %vm918 = vmor %vm916, %vm917
  %v919 = vsel %vm918, %v911, %v915
  %v920 = vand.u32 2147483647, %v687
  %vm921 = vcmp.eq.f32.partialorder %v920, 8.507059e+37
  %v922 = vand.u32 %v687, 2147483648
  %v923 = vor.u32 1.1754944e-38, %v922
  %v924 = vsel %vm921, %v923, %v919
  %v925 = vmul.f32 1.0, %v924
  %v926 = vrcp.pop %v688
  %v927 = vmul.f32 %v688, %v926
  %v928 = vsub.f32 1.0, %v927
  %v929 = vmul.f32 %v926, %v928
  %v930 = vadd.f32 %v926, %v929
  %vm931 = vweird.f32 %v688
  %vm932 = vweird.f32 %v926
  %vm933 = vmor %vm931, %vm932
  %v934 = vsel %vm933, %v926, %v930
  %v935 = vand.u32 2147483647, %v688
  %vm936 = vcmp.eq.f32.partialorder %v935, 8.507059e+37
  %v937 = vand.u32 %v688, 2147483648
  %v938 = vor.u32 1.1754944e-38, %v937
  %v939 = vsel %vm936, %v938, %v934
  %v940 = vmul.f32 1.0, %v939
  %v941 = vrcp.pop %v689
  %v942 = vmul.f32 %v689, %v941
  %v943 = vsub.f32 1.0, %v942
  %v944 = vmul.f32 %v941, %v943
  %v945 = vadd.f32 %v941, %v944
  %vm946 = vweird.f32 %v689
  %vm947 = vweird.f32 %v941
  %vm948 = vmor %vm946, %vm947
  %v949 = vsel %vm948, %v941, %v945
  %v950 = vand.u32 2147483647, %v689
  %vm951 = vcmp.eq.f32.partialorder %v950, 8.507059e+37
  %v952 = vand.u32 %v689, 2147483648
  %v953 = vor.u32 1.1754944e-38, %v952
  %v954 = vsel %vm951, %v953, %v949
  %v955 = vmul.f32 1.0, %v954
  %v956 = vrcp.pop %v690
  %v957 = vmul.f32 %v690, %v956
  %v958 = vsub.f32 1.0, %v957
  %v959 = vmul.f32 %v956, %v958
  %v960 = vadd.f32 %v956, %v959
  %vm961 = vweird.f32 %v690
  %vm962 = vweird.f32 %v956
  %vm963 = vmor %vm961, %vm962
  %v964 = vsel %vm963, %v956, %v960
  %v965 = vand.u32 2147483647, %v690
  %vm966 = vcmp.eq.f32.partialorder %v965, 8.507059e+37
  %v967 = vand.u32 %v690, 2147483648
  %v968 = vor.u32 1.1754944e-38, %v967
  %v969 = vsel %vm966, %v968, %v964
  %v970 = vmul.f32 1.0, %v969
  %v971 = vrcp.pop %v691
  %v972 = vmul.f32 %v691, %v971
  %v973 = vsub.f32 1.0, %v972
  %v974 = vmul.f32 %v971, %v973
  %v975 = vadd.f32 %v971, %v974
  %vm976 = vweird.f32 %v691
  %vm977 = vweird.f32 %v971
  %vm978 = vmor %vm976, %vm977
  %v979 = vsel %vm978, %v971, %v975
  %v980 = vand.u32 2147483647, %v691
  %vm981 = vcmp.eq.f32.partialorder %v980, 8.507059e+37
  %v982 = vand.u32 %v691, 2147483648
  %v983 = vor.u32 1.1754944e-38, %v982
  %v984 = vsel %vm981, %v983, %v979
  %v985 = vmul.f32 1.0, %v984
  %v986 = vrcp.pop %v692
  %v987 = vmul.f32 %v692, %v986
  %v988 = vsub.f32 1.0, %v987
  %v989 = vmul.f32 %v986, %v988
  %v990 = vadd.f32 %v986, %v989
  %vm991 = vweird.f32 %v692
  %vm992 = vweird.f32 %v986
  %vm993 = vmor %vm991, %vm992
  %v994 = vsel %vm993, %v986, %v990
  %v995 = vand.u32 2147483647, %v692
  %vm996 = vcmp.eq.f32.partialorder %v995, 8.507059e+37
  %v997 = vand.u32 %v692, 2147483648
  %v998 = vor.u32 1.1754944e-38, %v997
  %v999 = vsel %vm996, %v998, %v994
  %v1000 = vmul.f32 1.0, %v999
  %v1001 = vrcp.pop %v693
  %v1002 = vmul.f32 %v693, %v1001
  %v1003 = vsub.f32 1.0, %v1002
  %v1004 = vmul.f32 %v1001, %v1003
  %v1005 = vadd.f32 %v1001, %v1004
  %vm1006 = vweird.f32 %v693
  %vm1007 = vweird.f32 %v1001
  %vm1008 = vmor %vm1006, %vm1007
  %v1009 = vsel %vm1008, %v1001, %v1005
  %v1010 = vand.u32 2147483647, %v693
  %vm1011 = vcmp.eq.f32.partialorder %v1010, 8.507059e+37
  %v1012 = vand.u32 %v693, 2147483648
  %v1013 = vor.u32 1.1754944e-38, %v1012
  %v1014 = vsel %vm1011, %v1013, %v1009
  %v1015 = vmul.f32 1.0, %v1014
  %v1016 = vrcp.pop %v694
  %v1017 = vmul.f32 %v694, %v1016
  %v1018 = vsub.f32 1.0, %v1017
  %v1019 = vmul.f32 %v1016, %v1018
  %v1020 = vadd.f32 %v1016, %v1019
  %vm1021 = vweird.f32 %v694
  %vm1022 = vweird.f32 %v1016
  %vm1023 = vmor %vm1021, %vm1022
  %v1024 = vsel %vm1023, %v1016, %v1020
  %v1025 = vand.u32 2147483647, %v694
  %vm1026 = vcmp.eq.f32.partialorder %v1025, 8.507059e+37
  %v1027 = vand.u32 %v694, 2147483648
  %v1028 = vor.u32 1.1754944e-38, %v1027
  %v1029 = vsel %vm1026, %v1028, %v1024
  %v1030 = vmul.f32 1.0, %v1029
  %v1031 = vrcp.pop %v695
  %v1032 = vmul.f32 %v695, %v1031
  %v1033 = vsub.f32 1.0, %v1032
  %v1034 = vmul.f32 %v1031, %v1033
  %v1035 = vadd.f32 %v1031, %v1034
  %vm1036 = vweird.f32 %v695
  %vm1037 = vweird.f32 %v1031
  %vm1038 = vmor %vm1036, %vm1037
  %v1039 = vsel %vm1038, %v1031, %v1035
  %v1040 = vand.u32 2147483647, %v695
  %vm1041 = vcmp.eq.f32.partialorder %v1040, 8.507059e+37
  %v1042 = vand.u32 %v695, 2147483648
  %v1043 = vor.u32 1.1754944e-38, %v1042
  %v1044 = vsel %vm1041, %v1043, %v1039
  %v1045 = vmul.f32 1.0, %v1044
  %v1046 = vrcp.pop %v696
  %v1047 = vmul.f32 %v696, %v1046
  %v1048 = vsub.f32 1.0, %v1047
  %v1049 = vmul.f32 %v1046, %v1048
  %v1050 = vadd.f32 %v1046, %v1049
  %vm1051 = vweird.f32 %v696
  %vm1052 = vweird.f32 %v1046
  %vm1053 = vmor %vm1051, %vm1052
  %v1054 = vsel %vm1053, %v1046, %v1050
  %v1055 = vand.u32 2147483647, %v696
  %vm1056 = vcmp.eq.f32.partialorder %v1055, 8.507059e+37
  %v1057 = vand.u32 %v696, 2147483648
  %v1058 = vor.u32 1.1754944e-38, %v1057
  %v1059 = vsel %vm1056, %v1058, %v1054
  %v1060 = vmul.f32 1.0, %v1059
  %v1061 = vrcp.pop %v697
  %v1062 = vmul.f32 %v697, %v1061
  %v1063 = vsub.f32 1.0, %v1062
  %v1064 = vmul.f32 %v1061, %v1063
  %v1065 = vadd.f32 %v1061, %v1064
  %vm1066 = vweird.f32 %v697
  %vm1067 = vweird.f32 %v1061
  %vm1068 = vmor %vm1066, %vm1067
  %v1069 = vsel %vm1068, %v1061, %v1065
  %v1070 = vand.u32 2147483647, %v697
  %vm1071 = vcmp.eq.f32.partialorder %v1070, 8.507059e+37
  %v1072 = vand.u32 %v697, 2147483648
  %v1073 = vor.u32 1.1754944e-38, %v1072
  %v1074 = vsel %vm1071, %v1073, %v1069
  %v1075 = vmul.f32 1.0, %v1074
  %v1076 = vrcp.pop %v698
  %v1077 = vmul.f32 %v698, %v1076
  %v1078 = vsub.f32 1.0, %v1077
  %v1079 = vmul.f32 %v1076, %v1078
  %v1080 = vadd.f32 %v1076, %v1079
  %vm1081 = vweird.f32 %v698
  %vm1082 = vweird.f32 %v1076
  %vm1083 = vmor %vm1081, %vm1082
  %v1084 = vsel %vm1083, %v1076, %v1080
  %v1085 = vand.u32 2147483647, %v698
  %vm1086 = vcmp.eq.f32.partialorder %v1085, 8.507059e+37
  %v1087 = vand.u32 %v698, 2147483648
  %v1088 = vor.u32 1.1754944e-38, %v1087
  %v1089 = vsel %vm1086, %v1088, %v1084
  %v1090 = vmul.f32 1.0, %v1089
  %v1091 = vrcp.pop %v699
  %v1092 = vmul.f32 %v699, %v1091
  %v1093 = vsub.f32 1.0, %v1092
  %v1094 = vmul.f32 %v1091, %v1093
  %v1095 = vadd.f32 %v1091, %v1094
  %vm1096 = vweird.f32 %v699
  %vm1097 = vweird.f32 %v1091
  %vm1098 = vmor %vm1096, %vm1097
  %v1099 = vsel %vm1098, %v1091, %v1095
  %v1100 = vand.u32 2147483647, %v699
  %vm1101 = vcmp.eq.f32.partialorder %v1100, 8.507059e+37
  %v1102 = vand.u32 %v699, 2147483648
  %v1103 = vor.u32 1.1754944e-38, %v1102
  %v1104 = vsel %vm1101, %v1103, %v1099
  %v1105 = vmul.f32 1.0, %v1104
  %v1106 = vrcp.pop %v700
  %v1107 = vmul.f32 %v700, %v1106
  %v1108 = vsub.f32 1.0, %v1107
  %v1109 = vmul.f32 %v1106, %v1108
  %v1110 = vadd.f32 %v1106, %v1109
  %vm1111 = vweird.f32 %v700
  %vm1112 = vweird.f32 %v1106
  %vm1113 = vmor %vm1111, %vm1112
  %v1114 = vsel %vm1113, %v1106, %v1110
  %v1115 = vand.u32 2147483647, %v700
  %vm1116 = vcmp.eq.f32.partialorder %v1115, 8.507059e+37
  %v1117 = vand.u32 %v700, 2147483648
  %v1118 = vor.u32 1.1754944e-38, %v1117
  %v1119 = vsel %vm1116, %v1118, %v1114
  %v1120 = vmul.f32 1.0, %v1119
  %v1121 = vrcp.pop %v701
  %v1122 = vmul.f32 %v701, %v1121
  %v1123 = vsub.f32 1.0, %v1122
  %v1124 = vmul.f32 %v1121, %v1123
  %v1125 = vadd.f32 %v1121, %v1124
  %vm1126 = vweird.f32 %v701
  %vm1127 = vweird.f32 %v1121
  %vm1128 = vmor %vm1126, %vm1127
  %v1129 = vsel %vm1128, %v1121, %v1125
  %v1130 = vand.u32 2147483647, %v701
  %vm1131 = vcmp.eq.f32.partialorder %v1130, 8.507059e+37
  %v1132 = vand.u32 %v701, 2147483648
  %v1133 = vor.u32 1.1754944e-38, %v1132
  %v1134 = vsel %vm1131, %v1133, %v1129
  %v1135 = vmul.f32 1.0, %v1134
  %v1136 = vrcp.pop %v702
  %v1137 = vmul.f32 %v702, %v1136
  %v1138 = vsub.f32 1.0, %v1137
  %v1139 = vmul.f32 %v1136, %v1138
  %v1140 = vadd.f32 %v1136, %v1139
  %vm1141 = vweird.f32 %v702
  %vm1142 = vweird.f32 %v1136
  %vm1143 = vmor %vm1141, %vm1142
  %v1144 = vsel %vm1143, %v1136, %v1140
  %v1145 = vand.u32 2147483647, %v702
  %vm1146 = vcmp.eq.f32.partialorder %v1145, 8.507059e+37
  %v1147 = vand.u32 %v702, 2147483648
  %v1148 = vor.u32 1.1754944e-38, %v1147
  %v1149 = vsel %vm1146, %v1148, %v1144
  %v1150 = vmul.f32 1.0, %v1149
  %v1151 = vrcp.pop %v703
  %v1152 = vmul.f32 %v703, %v1151
  %v1153 = vsub.f32 1.0, %v1152
  %v1154 = vmul.f32 %v1151, %v1153
  %v1155 = vadd.f32 %v1151, %v1154
  %vm1156 = vweird.f32 %v703
  %vm1157 = vweird.f32 %v1151
  %vm1158 = vmor %vm1156, %vm1157
  %v1159 = vsel %vm1158, %v1151, %v1155
  %v1160 = vand.u32 2147483647, %v703
  %vm1161 = vcmp.eq.f32.partialorder %v1160, 8.507059e+37
  %v1162 = vand.u32 %v703, 2147483648
  %v1163 = vor.u32 1.1754944e-38, %v1162
  %v1164 = vsel %vm1161, %v1163, %v1159
  %v1165 = vmul.f32 1.0, %v1164
  %v1166 = vrcp.pop %v704
  %v1167 = vmul.f32 %v704, %v1166
  %v1168 = vsub.f32 1.0, %v1167
  %v1169 = vmul.f32 %v1166, %v1168
  %v1170 = vadd.f32 %v1166, %v1169
  %vm1171 = vweird.f32 %v704
  %vm1172 = vweird.f32 %v1166
  %vm1173 = vmor %vm1171, %vm1172
  %v1174 = vsel %vm1173, %v1166, %v1170
  %v1175 = vand.u32 2147483647, %v704
  %vm1176 = vcmp.eq.f32.partialorder %v1175, 8.507059e+37
  %v1177 = vand.u32 %v704, 2147483648
  %v1178 = vor.u32 1.1754944e-38, %v1177
  %v1179 = vsel %vm1176, %v1178, %v1174
  %v1180 = vmul.f32 1.0, %v1179
  %v1181 = vrcp.pop %v705
  %v1182 = vmul.f32 %v705, %v1181
  %v1183 = vsub.f32 1.0, %v1182
  %v1184 = vmul.f32 %v1181, %v1183
  %v1185 = vadd.f32 %v1181, %v1184
  %vm1186 = vweird.f32 %v705
  %vm1187 = vweird.f32 %v1181
  %vm1188 = vmor %vm1186, %vm1187
  %v1189 = vsel %vm1188, %v1181, %v1185
  %v1190 = vand.u32 2147483647, %v705
  %vm1191 = vcmp.eq.f32.partialorder %v1190, 8.507059e+37
  %v1192 = vand.u32 %v705, 2147483648
  %v1193 = vor.u32 1.1754944e-38, %v1192
  %v1194 = vsel %vm1191, %v1193, %v1189
  %v1195 = vmul.f32 1.0, %v1194
  %v1196 = vrcp.pop %v706
  %v1197 = vmul.f32 %v706, %v1196
  %v1198 = vsub.f32 1.0, %v1197
  %v1199 = vmul.f32 %v1196, %v1198
  %v1200 = vadd.f32 %v1196, %v1199
  %vm1201 = vweird.f32 %v706
  %vm1202 = vweird.f32 %v1196
  %vm1203 = vmor %vm1201, %vm1202
  %v1204 = vsel %vm1203, %v1196, %v1200
  %v1205 = vand.u32 2147483647, %v706
  %vm1206 = vcmp.eq.f32.partialorder %v1205, 8.507059e+37
  %v1207 = vand.u32 %v706, 2147483648
  %v1208 = vor.u32 1.1754944e-38, %v1207
  %v1209 = vsel %vm1206, %v1208, %v1204
  %v1210 = vmul.f32 1.0, %v1209
  %v1211 = vrcp.pop %v707
  %v1212 = vmul.f32 %v707, %v1211
  %v1213 = vsub.f32 1.0, %v1212
  %v1214 = vmul.f32 %v1211, %v1213
  %v1215 = vadd.f32 %v1211, %v1214
  %vm1216 = vweird.f32 %v707
  %vm1217 = vweird.f32 %v1211
  %vm1218 = vmor %vm1216, %vm1217
  %v1219 = vsel %vm1218, %v1211, %v1215
  %v1220 = vand.u32 2147483647, %v707
  %vm1221 = vcmp.eq.f32.partialorder %v1220, 8.507059e+37
  %v1222 = vand.u32 %v707, 2147483648
  %v1223 = vor.u32 1.1754944e-38, %v1222
  %v1224 = vsel %vm1221, %v1223, %v1219
  %v1225 = vmul.f32 1.0, %v1224
  %v1226 = vrcp.pop %v708
  %v1227 = vmul.f32 %v708, %v1226
  %v1228 = vsub.f32 1.0, %v1227
  %v1229 = vmul.f32 %v1226, %v1228
  %v1230 = vadd.f32 %v1226, %v1229
  %vm1231 = vweird.f32 %v708
  %vm1232 = vweird.f32 %v1226
  %vm1233 = vmor %vm1231, %vm1232
  %v1234 = vsel %vm1233, %v1226, %v1230
  %v1235 = vand.u32 2147483647, %v708
  %vm1236 = vcmp.eq.f32.partialorder %v1235, 8.507059e+37
  %v1237 = vand.u32 %v708, 2147483648
  %v1238 = vor.u32 1.1754944e-38, %v1237
  %v1239 = vsel %vm1236, %v1238, %v1234
  %v1240 = vmul.f32 1.0, %v1239
  %v1241 = vrcp.pop %v709
  %v1242 = vmul.f32 %v709, %v1241
  %v1243 = vsub.f32 1.0, %v1242
  %v1244 = vmul.f32 %v1241, %v1243
  %v1245 = vadd.f32 %v1241, %v1244
  %vm1246 = vweird.f32 %v709
  %vm1247 = vweird.f32 %v1241
  %vm1248 = vmor %vm1246, %vm1247
  %v1249 = vsel %vm1248, %v1241, %v1245
  %v1250 = vand.u32 2147483647, %v709
  %vm1251 = vcmp.eq.f32.partialorder %v1250, 8.507059e+37
  %v1252 = vand.u32 %v709, 2147483648
  %v1253 = vor.u32 1.1754944e-38, %v1252
  %v1254 = vsel %vm1251, %v1253, %v1249
  %v1255 = vmul.f32 1.0, %v1254
  %v1256 = vrcp.pop %v710
  %v1257 = vmul.f32 %v710, %v1256
  %v1258 = vsub.f32 1.0, %v1257
  %v1259 = vmul.f32 %v1256, %v1258
  %v1260 = vadd.f32 %v1256, %v1259
  %vm1261 = vweird.f32 %v710
  %vm1262 = vweird.f32 %v1256
  %vm1263 = vmor %vm1261, %vm1262
  %v1264 = vsel %vm1263, %v1256, %v1260
  %v1265 = vand.u32 2147483647, %v710
  %vm1266 = vcmp.eq.f32.partialorder %v1265, 8.507059e+37
  %v1267 = vand.u32 %v710, 2147483648
  %v1268 = vor.u32 1.1754944e-38, %v1267
  %v1269 = vsel %vm1266, %v1268, %v1264
  %v1270 = vmul.f32 1.0, %v1269
  %v1271 = vrcp.pop %v711
  %v1272 = vmul.f32 %v711, %v1271
  %v1273 = vsub.f32 1.0, %v1272
  %v1274 = vmul.f32 %v1271, %v1273
  %v1275 = vadd.f32 %v1271, %v1274
  %vm1276 = vweird.f32 %v711
  %vm1277 = vweird.f32 %v1271
  %vm1278 = vmor %vm1276, %vm1277
  %v1279 = vsel %vm1278, %v1271, %v1275
  %v1280 = vand.u32 2147483647, %v711
  %vm1281 = vcmp.eq.f32.partialorder %v1280, 8.507059e+37
  %v1282 = vand.u32 %v711, 2147483648
  %v1283 = vor.u32 1.1754944e-38, %v1282
  %v1284 = vsel %vm1281, %v1283, %v1279
  %v1285 = vmul.f32 1.0, %v1284
  %v1286 = vrcp.pop %v712
  %v1287 = vmul.f32 %v712, %v1286
  %v1288 = vsub.f32 1.0, %v1287
  %v1289 = vmul.f32 %v1286, %v1288
  %v1290 = vadd.f32 %v1286, %v1289
  %vm1291 = vweird.f32 %v712
  %vm1292 = vweird.f32 %v1286
  %vm1293 = vmor %vm1291, %vm1292
  %v1294 = vsel %vm1293, %v1286, %v1290
  %v1295 = vand.u32 2147483647, %v712
  %vm1296 = vcmp.eq.f32.partialorder %v1295, 8.507059e+37
  %v1297 = vand.u32 %v712, 2147483648
  %v1298 = vor.u32 1.1754944e-38, %v1297
  %v1299 = vsel %vm1296, %v1298, %v1294
  %v1300 = vmul.f32 1.0, %v1299
  %v1301 = vrcp.pop %v713
  %v1302 = vmul.f32 %v713, %v1301
  %v1303 = vsub.f32 1.0, %v1302
  %v1304 = vmul.f32 %v1301, %v1303
  %v1305 = vadd.f32 %v1301, %v1304
  %vm1306 = vweird.f32 %v713
  %vm1307 = vweird.f32 %v1301
  %vm1308 = vmor %vm1306, %vm1307
  %v1309 = vsel %vm1308, %v1301, %v1305
  %v1310 = vand.u32 2147483647, %v713
  %vm1311 = vcmp.eq.f32.partialorder %v1310, 8.507059e+37
  %v1312 = vand.u32 %v713, 2147483648
  %v1313 = vor.u32 1.1754944e-38, %v1312
  %v1314 = vsel %vm1311, %v1313, %v1309
  %v1315 = vmul.f32 1.0, %v1314
  %v1316 = vrcp.pop %v714
  %v1317 = vmul.f32 %v714, %v1316
  %v1318 = vsub.f32 1.0, %v1317
  %v1319 = vmul.f32 %v1316, %v1318
  %v1320 = vadd.f32 %v1316, %v1319
  %vm1321 = vweird.f32 %v714
  %vm1322 = vweird.f32 %v1316
  %vm1323 = vmor %vm1321, %vm1322
  %v1324 = vsel %vm1323, %v1316, %v1320
  %v1325 = vand.u32 2147483647, %v714
  %vm1326 = vcmp.eq.f32.partialorder %v1325, 8.507059e+37
  %v1327 = vand.u32 %v714, 2147483648
  %v1328 = vor.u32 1.1754944e-38, %v1327
  %v1329 = vsel %vm1326, %v1328, %v1324
  %v1330 = vmul.f32 1.0, %v1329
  %v1331 = vrcp.pop %v715
  %v1332 = vmul.f32 %v715, %v1331
  %v1333 = vsub.f32 1.0, %v1332
  %v1334 = vmul.f32 %v1331, %v1333
  %v1335 = vadd.f32 %v1331, %v1334
  %vm1336 = vweird.f32 %v715
  %vm1337 = vweird.f32 %v1331
  %vm1338 = vmor %vm1336, %vm1337
  %v1339 = vsel %vm1338, %v1331, %v1335
  %v1340 = vand.u32 2147483647, %v715
  %vm1341 = vcmp.eq.f32.partialorder %v1340, 8.507059e+37
  %v1342 = vand.u32 %v715, 2147483648
  %v1343 = vor.u32 1.1754944e-38, %v1342
  %v1344 = vsel %vm1341, %v1343, %v1339
  %v1345 = vmul.f32 1.0, %v1344
  %v1346 = vrcp.pop %v716
  %v1347 = vmul.f32 %v716, %v1346
  %v1348 = vsub.f32 1.0, %v1347
  %v1349 = vmul.f32 %v1346, %v1348
  %v1350 = vadd.f32 %v1346, %v1349
  %vm1351 = vweird.f32 %v716
  %vm1352 = vweird.f32 %v1346
  %vm1353 = vmor %vm1351, %vm1352
  %v1354 = vsel %vm1353, %v1346, %v1350
  %v1355 = vand.u32 2147483647, %v716
  %vm1356 = vcmp.eq.f32.partialorder %v1355, 8.507059e+37
  %v1357 = vand.u32 %v716, 2147483648
  %v1358 = vor.u32 1.1754944e-38, %v1357
  %v1359 = vsel %vm1356, %v1358, %v1354
  %v1360 = vmul.f32 1.0, %v1359
  %v1361 = vrcp.pop %v717
  %v1362 = vmul.f32 %v717, %v1361
  %v1363 = vsub.f32 1.0, %v1362
  %v1364 = vmul.f32 %v1361, %v1363
  %v1365 = vadd.f32 %v1361, %v1364
  %vm1366 = vweird.f32 %v717
  %vm1367 = vweird.f32 %v1361
  %vm1368 = vmor %vm1366, %vm1367
  %v1369 = vsel %vm1368, %v1361, %v1365
  %v1370 = vand.u32 2147483647, %v717
  %vm1371 = vcmp.eq.f32.partialorder %v1370, 8.507059e+37
  %v1372 = vand.u32 %v717, 2147483648
  %v1373 = vor.u32 1.1754944e-38, %v1372
  %v1374 = vsel %vm1371, %v1373, %v1369
  %v1375 = vmul.f32 1.0, %v1374
  %v1376 = vrcp.pop %v718
  %v1377 = vmul.f32 %v718, %v1376
  %v1378 = vsub.f32 1.0, %v1377
  %v1379 = vmul.f32 %v1376, %v1378
  %v1380 = vadd.f32 %v1376, %v1379
  %vm1381 = vweird.f32 %v718
  %vm1382 = vweird.f32 %v1376
  %vm1383 = vmor %vm1381, %vm1382
  %v1384 = vsel %vm1383, %v1376, %v1380
  %v1385 = vand.u32 2147483647, %v718
  %vm1386 = vcmp.eq.f32.partialorder %v1385, 8.507059e+37
  %v1387 = vand.u32 %v718, 2147483648
  %v1388 = vor.u32 1.1754944e-38, %v1387
  %v1389 = vsel %vm1386, %v1388, %v1384
  %v1390 = vmul.f32 1.0, %v1389
  %v1391 = vrcp.pop %v719
  %v1392 = vmul.f32 %v719, %v1391
  %v1393 = vsub.f32 1.0, %v1392
  %v1394 = vmul.f32 %v1391, %v1393
  %v1395 = vadd.f32 %v1391, %v1394
  %vm1396 = vweird.f32 %v719
  %vm1397 = vweird.f32 %v1391
  %vm1398 = vmor %vm1396, %vm1397
  %v1399 = vsel %vm1398, %v1391, %v1395
  %v1400 = vand.u32 2147483647, %v719
  %vm1401 = vcmp.eq.f32.partialorder %v1400, 8.507059e+37
  %v1402 = vand.u32 %v719, 2147483648
  %v1403 = vor.u32 1.1754944e-38, %v1402
  %v1404 = vsel %vm1401, %v1403, %v1399
  %v1405 = vmul.f32 1.0, %v1404
  %v1406 = vrcp.pop %v720
  %v1407 = vmul.f32 %v720, %v1406
  %v1408 = vsub.f32 1.0, %v1407
  %v1409 = vmul.f32 %v1406, %v1408
  %v1410 = vadd.f32 %v1406, %v1409
  %vm1411 = vweird.f32 %v720
  %vm1412 = vweird.f32 %v1406
  %vm1413 = vmor %vm1411, %vm1412
  %v1414 = vsel %vm1413, %v1406, %v1410
  %v1415 = vand.u32 2147483647, %v720
  %vm1416 = vcmp.eq.f32.partialorder %v1415, 8.507059e+37
  %v1417 = vand.u32 %v720, 2147483648
  %v1418 = vor.u32 1.1754944e-38, %v1417
  %v1419 = vsel %vm1416, %v1418, %v1414
  %v1420 = vmul.f32 1.0, %v1419
  %v1421 = vrcp.pop %v721
  %v1422 = vmul.f32 %v721, %v1421
  %v1423 = vsub.f32 1.0, %v1422
  %v1424 = vmul.f32 %v1421, %v1423
  %v1425 = vadd.f32 %v1421, %v1424
  %vm1426 = vweird.f32 %v721
  %vm1427 = vweird.f32 %v1421
  %vm1428 = vmor %vm1426, %vm1427
  %v1429 = vsel %vm1428, %v1421, %v1425
  %v1430 = vand.u32 2147483647, %v721
  %vm1431 = vcmp.eq.f32.partialorder %v1430, 8.507059e+37
  %v1432 = vand.u32 %v721, 2147483648
  %v1433 = vor.u32 1.1754944e-38, %v1432
  %v1434 = vsel %vm1431, %v1433, %v1429
  %v1435 = vmul.f32 1.0, %v1434
  %v1436 = vrcp.pop %v722
  %v1437 = vmul.f32 %v722, %v1436
  %v1438 = vsub.f32 1.0, %v1437
  %v1439 = vmul.f32 %v1436, %v1438
  %v1440 = vadd.f32 %v1436, %v1439
  %vm1441 = vweird.f32 %v722
  %vm1442 = vweird.f32 %v1436
  %vm1443 = vmor %vm1441, %vm1442
  %v1444 = vsel %vm1443, %v1436, %v1440
  %v1445 = vand.u32 2147483647, %v722
  %vm1446 = vcmp.eq.f32.partialorder %v1445, 8.507059e+37
  %v1447 = vand.u32 %v722, 2147483648
  %v1448 = vor.u32 1.1754944e-38, %v1447
  %v1449 = vsel %vm1446, %v1448, %v1444
  %v1450 = vmul.f32 1.0, %v1449
  %v1451 = vrcp.pop %v723
  %v1452 = vmul.f32 %v723, %v1451
  %v1453 = vsub.f32 1.0, %v1452
  %v1454 = vmul.f32 %v1451, %v1453
  %v1455 = vadd.f32 %v1451, %v1454
  %vm1456 = vweird.f32 %v723
  %vm1457 = vweird.f32 %v1451
  %vm1458 = vmor %vm1456, %vm1457
  %v1459 = vsel %vm1458, %v1451, %v1455
  %v1460 = vand.u32 2147483647, %v723
  %vm1461 = vcmp.eq.f32.partialorder %v1460, 8.507059e+37
  %v1462 = vand.u32 %v723, 2147483648
  %v1463 = vor.u32 1.1754944e-38, %v1462
  %v1464 = vsel %vm1461, %v1463, %v1459
  %v1465 = vmul.f32 1.0, %v1464
  %v1466 = vrcp.pop %v724
  %v1467 = vmul.f32 %v724, %v1466
  %v1468 = vsub.f32 1.0, %v1467
  %v1469 = vmul.f32 %v1466, %v1468
  %v1470 = vadd.f32 %v1466, %v1469
  %vm1471 = vweird.f32 %v724
  %vm1472 = vweird.f32 %v1466
  %vm1473 = vmor %vm1471, %vm1472
  %v1474 = vsel %vm1473, %v1466, %v1470
  %v1475 = vand.u32 2147483647, %v724
  %vm1476 = vcmp.eq.f32.partialorder %v1475, 8.507059e+37
  %v1477 = vand.u32 %v724, 2147483648
  %v1478 = vor.u32 1.1754944e-38, %v1477
  %v1479 = vsel %vm1476, %v1478, %v1474
  %v1480 = vmul.f32 1.0, %v1479
  %v1481 = vrcp.pop %v725
  %v1482 = vmul.f32 %v725, %v1481
  %v1483 = vsub.f32 1.0, %v1482
  %v1484 = vmul.f32 %v1481, %v1483
  %v1485 = vadd.f32 %v1481, %v1484
  %vm1486 = vweird.f32 %v725
  %vm1487 = vweird.f32 %v1481
  %vm1488 = vmor %vm1486, %vm1487
  %v1489 = vsel %vm1488, %v1481, %v1485
  %v1490 = vand.u32 2147483647, %v725
  %vm1491 = vcmp.eq.f32.partialorder %v1490, 8.507059e+37
  %v1492 = vand.u32 %v725, 2147483648
  %v1493 = vor.u32 1.1754944e-38, %v1492
  %v1494 = vsel %vm1491, %v1493, %v1489
  %v1495 = vmul.f32 1.0, %v1494
  %v1496 = vrcp.pop %v726
  %v1497 = vmul.f32 %v726, %v1496
  %v1498 = vsub.f32 1.0, %v1497
  %v1499 = vmul.f32 %v1496, %v1498
  %v1500 = vadd.f32 %v1496, %v1499
  %vm1501 = vweird.f32 %v726
  %vm1502 = vweird.f32 %v1496
  %vm1503 = vmor %vm1501, %vm1502
  %v1504 = vsel %vm1503, %v1496, %v1500
  %v1505 = vand.u32 2147483647, %v726
  %vm1506 = vcmp.eq.f32.partialorder %v1505, 8.507059e+37
  %v1507 = vand.u32 %v726, 2147483648
  %v1508 = vor.u32 1.1754944e-38, %v1507
  %v1509 = vsel %vm1506, %v1508, %v1504
  %v1510 = vmul.f32 1.0, %v1509
  %v1511 = vrcp.pop %v727
  %v1512 = vmul.f32 %v727, %v1511
  %v1513 = vsub.f32 1.0, %v1512
  %v1514 = vmul.f32 %v1511, %v1513
  %v1515 = vadd.f32 %v1511, %v1514
  %vm1516 = vweird.f32 %v727
  %vm1517 = vweird.f32 %v1511
  %vm1518 = vmor %vm1516, %vm1517
  %v1519 = vsel %vm1518, %v1511, %v1515
  %v1520 = vand.u32 2147483647, %v727
  %vm1521 = vcmp.eq.f32.partialorder %v1520, 8.507059e+37
  %v1522 = vand.u32 %v727, 2147483648
  %v1523 = vor.u32 1.1754944e-38, %v1522
  %v1524 = vsel %vm1521, %v1523, %v1519
  %v1525 = vmul.f32 1.0, %v1524
  %v1526 = vrcp.pop %v728
  %v1527 = vmul.f32 %v728, %v1526
  %v1528 = vsub.f32 1.0, %v1527
  %v1529 = vmul.f32 %v1526, %v1528
  %v1530 = vadd.f32 %v1526, %v1529
  %vm1531 = vweird.f32 %v728
  %vm1532 = vweird.f32 %v1526
  %vm1533 = vmor %vm1531, %vm1532
  %v1534 = vsel %vm1533, %v1526, %v1530
  %v1535 = vand.u32 2147483647, %v728
  %vm1536 = vcmp.eq.f32.partialorder %v1535, 8.507059e+37
  %v1537 = vand.u32 %v728, 2147483648
  %v1538 = vor.u32 1.1754944e-38, %v1537
  %v1539 = vsel %vm1536, %v1538, %v1534
  %v1540 = vmul.f32 1.0, %v1539
  %v1541 = vrcp.pop %v729
  %v1542 = vmul.f32 %v729, %v1541
  %v1543 = vsub.f32 1.0, %v1542
  %v1544 = vmul.f32 %v1541, %v1543
  %v1545 = vadd.f32 %v1541, %v1544
  %vm1546 = vweird.f32 %v729
  %vm1547 = vweird.f32 %v1541
  %vm1548 = vmor %vm1546, %vm1547
  %v1549 = vsel %vm1548, %v1541, %v1545
  %v1550 = vand.u32 2147483647, %v729
  %vm1551 = vcmp.eq.f32.partialorder %v1550, 8.507059e+37
  %v1552 = vand.u32 %v729, 2147483648
  %v1553 = vor.u32 1.1754944e-38, %v1552
  %v1554 = vsel %vm1551, %v1553, %v1549
  %v1555 = vmul.f32 1.0, %v1554
  %v1556 = vrcp.pop %v730
  %v1557 = vmul.f32 %v730, %v1556
  %v1558 = vsub.f32 1.0, %v1557
  %v1559 = vmul.f32 %v1556, %v1558
  %v1560 = vadd.f32 %v1556, %v1559
  %vm1561 = vweird.f32 %v730
  %vm1562 = vweird.f32 %v1556
  %vm1563 = vmor %vm1561, %vm1562
  %v1564 = vsel %vm1563, %v1556, %v1560
  %v1565 = vand.u32 2147483647, %v730
  %vm1566 = vcmp.eq.f32.partialorder %v1565, 8.507059e+37
  %v1567 = vand.u32 %v730, 2147483648
  %v1568 = vor.u32 1.1754944e-38, %v1567
  %v1569 = vsel %vm1566, %v1568, %v1564
  %v1570 = vmul.f32 1.0, %v1569
  %v1571 = vrcp.pop %v731
  %v1572 = vmul.f32 %v731, %v1571
  %v1573 = vsub.f32 1.0, %v1572
  %v1574 = vmul.f32 %v1571, %v1573
  %v1575 = vadd.f32 %v1571, %v1574
  %vm1576 = vweird.f32 %v731
  %vm1577 = vweird.f32 %v1571
  %vm1578 = vmor %vm1576, %vm1577
  %v1579 = vsel %vm1578, %v1571, %v1575
  %v1580 = vand.u32 2147483647, %v731
  %vm1581 = vcmp.eq.f32.partialorder %v1580, 8.507059e+37
  %v1582 = vand.u32 %v731, 2147483648
  %v1583 = vor.u32 1.1754944e-38, %v1582
  %v1584 = vsel %vm1581, %v1583, %v1579
  %v1585 = vmul.f32 1.0, %v1584
  %v1586 = vrcp.pop %v732
  %v1587 = vmul.f32 %v732, %v1586
  %v1588 = vsub.f32 1.0, %v1587
  %v1589 = vmul.f32 %v1586, %v1588
  %v1590 = vadd.f32 %v1586, %v1589
  %vm1591 = vweird.f32 %v732
  %vm1592 = vweird.f32 %v1586
  %vm1593 = vmor %vm1591, %vm1592
  %v1594 = vsel %vm1593, %v1586, %v1590
  %v1595 = vand.u32 2147483647, %v732
  %vm1596 = vcmp.eq.f32.partialorder %v1595, 8.507059e+37
  %v1597 = vand.u32 %v732, 2147483648
  %v1598 = vor.u32 1.1754944e-38, %v1597
  %v1599 = vsel %vm1596, %v1598, %v1594
  %v1600 = vmul.f32 1.0, %v1599
  %v1601 = vrcp.pop %v733
  %v1602 = vmul.f32 %v733, %v1601
  %v1603 = vsub.f32 1.0, %v1602
  %v1604 = vmul.f32 %v1601, %v1603
  %v1605 = vadd.f32 %v1601, %v1604
  %vm1606 = vweird.f32 %v733
  %vm1607 = vweird.f32 %v1601
  %vm1608 = vmor %vm1606, %vm1607
  %v1609 = vsel %vm1608, %v1601, %v1605
  %v1610 = vand.u32 2147483647, %v733
  %vm1611 = vcmp.eq.f32.partialorder %v1610, 8.507059e+37
  %v1612 = vand.u32 %v733, 2147483648
  %v1613 = vor.u32 1.1754944e-38, %v1612
  %v1614 = vsel %vm1611, %v1613, %v1609
  %v1615 = vmul.f32 1.0, %v1614
  %v1616 = vrcp.pop %v734
  %v1617 = vmul.f32 %v734, %v1616
  %v1618 = vsub.f32 1.0, %v1617
  %v1619 = vmul.f32 %v1616, %v1618
  %v1620 = vadd.f32 %v1616, %v1619
  %vm1621 = vweird.f32 %v734
  %vm1622 = vweird.f32 %v1616
  %vm1623 = vmor %vm1621, %vm1622
  %v1624 = vsel %vm1623, %v1616, %v1620
  %v1625 = vand.u32 2147483647, %v734
  %vm1626 = vcmp.eq.f32.partialorder %v1625, 8.507059e+37
  %v1627 = vand.u32 %v734, 2147483648
  %v1628 = vor.u32 1.1754944e-38, %v1627
  %v1629 = vsel %vm1626, %v1628, %v1624
  %v1630 = vmul.f32 1.0, %v1629
  %v1631 = vrcp.pop %v735
  %v1632 = vmul.f32 %v735, %v1631
  %v1633 = vsub.f32 1.0, %v1632
  %v1634 = vmul.f32 %v1631, %v1633
  %v1635 = vadd.f32 %v1631, %v1634
  %vm1636 = vweird.f32 %v735
  %vm1637 = vweird.f32 %v1631
  %vm1638 = vmor %vm1636, %vm1637
  %v1639 = vsel %vm1638, %v1631, %v1635
  %v1640 = vand.u32 2147483647, %v735
  %vm1641 = vcmp.eq.f32.partialorder %v1640, 8.507059e+37
  %v1642 = vand.u32 %v735, 2147483648
  %v1643 = vor.u32 1.1754944e-38, %v1642
  %v1644 = vsel %vm1641, %v1643, %v1639
  %v1645 = vmul.f32 1.0, %v1644
  %v1646 = vrcp.pop %v736
  %v1647 = vmul.f32 %v736, %v1646
  %v1648 = vsub.f32 1.0, %v1647
  %v1649 = vmul.f32 %v1646, %v1648
  %v1650 = vadd.f32 %v1646, %v1649
  %vm1651 = vweird.f32 %v736
  %vm1652 = vweird.f32 %v1646
  %vm1653 = vmor %vm1651, %vm1652
  %v1654 = vsel %vm1653, %v1646, %v1650
  %v1655 = vand.u32 2147483647, %v736
  %vm1656 = vcmp.eq.f32.partialorder %v1655, 8.507059e+37
  %v1657 = vand.u32 %v736, 2147483648
  %v1658 = vor.u32 1.1754944e-38, %v1657
  %v1659 = vsel %vm1656, %v1658, %v1654
  %v1660 = vmul.f32 1.0, %v1659
  %v1661 = vrcp.pop %v737
  %v1662 = vmul.f32 %v737, %v1661
  %v1663 = vsub.f32 1.0, %v1662
  %v1664 = vmul.f32 %v1661, %v1663
  %v1665 = vadd.f32 %v1661, %v1664
  %vm1666 = vweird.f32 %v737
  %vm1667 = vweird.f32 %v1661
  %vm1668 = vmor %vm1666, %vm1667
  %v1669 = vsel %vm1668, %v1661, %v1665
  %v1670 = vand.u32 2147483647, %v737
  %vm1671 = vcmp.eq.f32.partialorder %v1670, 8.507059e+37
  %v1672 = vand.u32 %v737, 2147483648
  %v1673 = vor.u32 1.1754944e-38, %v1672
  %v1674 = vsel %vm1671, %v1673, %v1669
  %v1675 = vmul.f32 1.0, %v1674
  %v1676 = vrcp.pop %v738
  %v1677 = vmul.f32 %v738, %v1676
  %v1678 = vsub.f32 1.0, %v1677
  %v1679 = vmul.f32 %v1676, %v1678
  %v1680 = vadd.f32 %v1676, %v1679
  %vm1681 = vweird.f32 %v738
  %vm1682 = vweird.f32 %v1676
  %vm1683 = vmor %vm1681, %vm1682
  %v1684 = vsel %vm1683, %v1676, %v1680
  %v1685 = vand.u32 2147483647, %v738
  %vm1686 = vcmp.eq.f32.partialorder %v1685, 8.507059e+37
  %v1687 = vand.u32 %v738, 2147483648
  %v1688 = vor.u32 1.1754944e-38, %v1687
  %v1689 = vsel %vm1686, %v1688, %v1684
  %v1690 = vmul.f32 1.0, %v1689
  %v1691 = vrcp.pop %v739
  %v1692 = vmul.f32 %v739, %v1691
  %v1693 = vsub.f32 1.0, %v1692
  %v1694 = vmul.f32 %v1691, %v1693
  %v1695 = vadd.f32 %v1691, %v1694
  %vm1696 = vweird.f32 %v739
  %vm1697 = vweird.f32 %v1691
  %vm1698 = vmor %vm1696, %vm1697
  %v1699 = vsel %vm1698, %v1691, %v1695
  %v1700 = vand.u32 2147483647, %v739
  %vm1701 = vcmp.eq.f32.partialorder %v1700, 8.507059e+37
  %v1702 = vand.u32 %v739, 2147483648
  %v1703 = vor.u32 1.1754944e-38, %v1702
  %v1704 = vsel %vm1701, %v1703, %v1699
  %v1705 = vmul.f32 1.0, %v1704
  %v1706 = vrcp.pop %v740
  %v1707 = vmul.f32 %v740, %v1706
  %v1708 = vsub.f32 1.0, %v1707
  %v1709 = vmul.f32 %v1706, %v1708
  %v1710 = vadd.f32 %v1706, %v1709
  %vm1711 = vweird.f32 %v740
  %vm1712 = vweird.f32 %v1706
  %vm1713 = vmor %vm1711, %vm1712
  %v1714 = vsel %vm1713, %v1706, %v1710
  %v1715 = vand.u32 2147483647, %v740
  %vm1716 = vcmp.eq.f32.partialorder %v1715, 8.507059e+37
  %v1717 = vand.u32 %v740, 2147483648
  %v1718 = vor.u32 1.1754944e-38, %v1717
  %v1719 = vsel %vm1716, %v1718, %v1714
  %v1720 = vmul.f32 1.0, %v1719
  %v1721 = vrcp.pop %v741
  %v1722 = vmul.f32 %v741, %v1721
  %v1723 = vsub.f32 1.0, %v1722
  %v1724 = vmul.f32 %v1721, %v1723
  %v1725 = vadd.f32 %v1721, %v1724
  %vm1726 = vweird.f32 %v741
  %vm1727 = vweird.f32 %v1721
  %vm1728 = vmor %vm1726, %vm1727
  %v1729 = vsel %vm1728, %v1721, %v1725
  %v1730 = vand.u32 2147483647, %v741
  %vm1731 = vcmp.eq.f32.partialorder %v1730, 8.507059e+37
  %v1732 = vand.u32 %v741, 2147483648
  %v1733 = vor.u32 1.1754944e-38, %v1732
  %v1734 = vsel %vm1731, %v1733, %v1729
  %v1735 = vmul.f32 1.0, %v1734
  %v1736 = vrcp.pop %v742
  %v1737 = vmul.f32 %v742, %v1736
  %v1738 = vsub.f32 1.0, %v1737
  %v1739 = vmul.f32 %v1736, %v1738
  %v1740 = vadd.f32 %v1736, %v1739
  %vm1741 = vweird.f32 %v742
  %vm1742 = vweird.f32 %v1736
  %vm1743 = vmor %vm1741, %vm1742
  %v1744 = vsel %vm1743, %v1736, %v1740
  %v1745 = vand.u32 2147483647, %v742
  %vm1746 = vcmp.eq.f32.partialorder %v1745, 8.507059e+37
  %v1747 = vand.u32 %v742, 2147483648
  %v1748 = vor.u32 1.1754944e-38, %v1747
  %v1749 = vsel %vm1746, %v1748, %v1744
  %v1750 = vmul.f32 1.0, %v1749
  %v1751 = vrcp.pop %v743
  %v1752 = vmul.f32 %v743, %v1751
  %v1753 = vsub.f32 1.0, %v1752
  %v1754 = vmul.f32 %v1751, %v1753
  %v1755 = vadd.f32 %v1751, %v1754
  %vm1756 = vweird.f32 %v743
  %vm1757 = vweird.f32 %v1751
  %vm1758 = vmor %vm1756, %vm1757
  %v1759 = vsel %vm1758, %v1751, %v1755
  %v1760 = vand.u32 2147483647, %v743
  %vm1761 = vcmp.eq.f32.partialorder %v1760, 8.507059e+37
  %v1762 = vand.u32 %v743, 2147483648
  %v1763 = vor.u32 1.1754944e-38, %v1762
  %v1764 = vsel %vm1761, %v1763, %v1759
  %v1765 = vmul.f32 1.0, %v1764
  %v1766 = vrcp.pop %v744
  %v1767 = vmul.f32 %v744, %v1766
  %v1768 = vsub.f32 1.0, %v1767
  %v1769 = vmul.f32 %v1766, %v1768
  %v1770 = vadd.f32 %v1766, %v1769
  %vm1771 = vweird.f32 %v744
  %vm1772 = vweird.f32 %v1766
  %vm1773 = vmor %vm1771, %vm1772
  %v1774 = vsel %vm1773, %v1766, %v1770
  %v1775 = vand.u32 2147483647, %v744
  %vm1776 = vcmp.eq.f32.partialorder %v1775, 8.507059e+37
  %v1777 = vand.u32 %v744, 2147483648
  %v1778 = vor.u32 1.1754944e-38, %v1777
  %v1779 = vsel %vm1776, %v1778, %v1774
  %v1780 = vmul.f32 1.0, %v1779
  %v1781 = vrcp.pop %v745
  %v1782 = vmul.f32 %v745, %v1781
  %v1783 = vsub.f32 1.0, %v1782
  %v1784 = vmul.f32 %v1781, %v1783
  %v1785 = vadd.f32 %v1781, %v1784
  %vm1786 = vweird.f32 %v745
  %vm1787 = vweird.f32 %v1781
  %vm1788 = vmor %vm1786, %vm1787
  %v1789 = vsel %vm1788, %v1781, %v1785
  %v1790 = vand.u32 2147483647, %v745
  %vm1791 = vcmp.eq.f32.partialorder %v1790, 8.507059e+37
  %v1792 = vand.u32 %v745, 2147483648
  %v1793 = vor.u32 1.1754944e-38, %v1792
  %v1794 = vsel %vm1791, %v1793, %v1789
  %v1795 = vmul.f32 1.0, %v1794
  %v1796 = vrcp.pop %v746
  %v1797 = vmul.f32 %v746, %v1796
  %v1798 = vsub.f32 1.0, %v1797
  %v1799 = vmul.f32 %v1796, %v1798
  %v1800 = vadd.f32 %v1796, %v1799
  %vm1801 = vweird.f32 %v746
  %vm1802 = vweird.f32 %v1796
  %vm1803 = vmor %vm1801, %vm1802
  %v1804 = vsel %vm1803, %v1796, %v1800
  %v1805 = vand.u32 2147483647, %v746
  %vm1806 = vcmp.eq.f32.partialorder %v1805, 8.507059e+37
  %v1807 = vand.u32 %v746, 2147483648
  %v1808 = vor.u32 1.1754944e-38, %v1807
  %v1809 = vsel %vm1806, %v1808, %v1804
  %v1810 = vmul.f32 1.0, %v1809
  %v1811 = vrcp.pop %v747
  %v1812 = vmul.f32 %v747, %v1811
  %v1813 = vsub.f32 1.0, %v1812
  %v1814 = vmul.f32 %v1811, %v1813
  %v1815 = vadd.f32 %v1811, %v1814
  %vm1816 = vweird.f32 %v747
  %vm1817 = vweird.f32 %v1811
  %vm1818 = vmor %vm1816, %vm1817
  %v1819 = vsel %vm1818, %v1811, %v1815
  %v1820 = vand.u32 2147483647, %v747
  %vm1821 = vcmp.eq.f32.partialorder %v1820, 8.507059e+37
  %v1822 = vand.u32 %v747, 2147483648
  %v1823 = vor.u32 1.1754944e-38, %v1822
  %v1824 = vsel %vm1821, %v1823, %v1819
  %v1825 = vmul.f32 1.0, %v1824
  %v1826 = vrcp.pop %v748
  %v1827 = vmul.f32 %v748, %v1826
  %v1828 = vsub.f32 1.0, %v1827
  %v1829 = vmul.f32 %v1826, %v1828
  %v1830 = vadd.f32 %v1826, %v1829
  %vm1831 = vweird.f32 %v748
  %vm1832 = vweird.f32 %v1826
  %vm1833 = vmor %vm1831, %vm1832
  %v1834 = vsel %vm1833, %v1826, %v1830
  %v1835 = vand.u32 2147483647, %v748
  %vm1836 = vcmp.eq.f32.partialorder %v1835, 8.507059e+37
  %v1837 = vand.u32 %v748, 2147483648
  %v1838 = vor.u32 1.1754944e-38, %v1837
  %v1839 = vsel %vm1836, %v1838, %v1834
  %v1840 = vmul.f32 1.0, %v1839
  %v1841 = vrcp.pop %v749
  %v1842 = vmul.f32 %v749, %v1841
  %v1843 = vsub.f32 1.0, %v1842
  %v1844 = vmul.f32 %v1841, %v1843
  %v1845 = vadd.f32 %v1841, %v1844
  %vm1846 = vweird.f32 %v749
  %vm1847 = vweird.f32 %v1841
  %vm1848 = vmor %vm1846, %vm1847
  %v1849 = vsel %vm1848, %v1841, %v1845
  %v1850 = vand.u32 2147483647, %v749
  %vm1851 = vcmp.eq.f32.partialorder %v1850, 8.507059e+37
  %v1852 = vand.u32 %v749, 2147483648
  %v1853 = vor.u32 1.1754944e-38, %v1852
  %v1854 = vsel %vm1851, %v1853, %v1849
  %v1855 = vmul.f32 1.0, %v1854
  %v1856 = vrcp.pop %v750
  %v1857 = vmul.f32 %v750, %v1856
  %v1858 = vsub.f32 1.0, %v1857
  %v1859 = vmul.f32 %v1856, %v1858
  %v1860 = vadd.f32 %v1856, %v1859
  %vm1861 = vweird.f32 %v750
  %vm1862 = vweird.f32 %v1856
  %vm1863 = vmor %vm1861, %vm1862
  %v1864 = vsel %vm1863, %v1856, %v1860
  %v1865 = vand.u32 2147483647, %v750
  %vm1866 = vcmp.eq.f32.partialorder %v1865, 8.507059e+37
  %v1867 = vand.u32 %v750, 2147483648
  %v1868 = vor.u32 1.1754944e-38, %v1867
  %v1869 = vsel %vm1866, %v1868, %v1864
  %v1870 = vmul.f32 1.0, %v1869
  %v1871 = vrcp.pop %v751
  %v1872 = vmul.f32 %v751, %v1871
  %v1873 = vsub.f32 1.0, %v1872
  %v1874 = vmul.f32 %v1871, %v1873
  %v1875 = vadd.f32 %v1871, %v1874
  %vm1876 = vweird.f32 %v751
  %vm1877 = vweird.f32 %v1871
  %vm1878 = vmor %vm1876, %vm1877
  %v1879 = vsel %vm1878, %v1871, %v1875
  %v1880 = vand.u32 2147483647, %v751
  %vm1881 = vcmp.eq.f32.partialorder %v1880, 8.507059e+37
  %v1882 = vand.u32 %v751, 2147483648
  %v1883 = vor.u32 1.1754944e-38, %v1882
  %v1884 = vsel %vm1881, %v1883, %v1879
  %v1885 = vmul.f32 1.0, %v1884
  %v1886 = vrcp.pop %v752
  %v1887 = vmul.f32 %v752, %v1886
  %v1888 = vsub.f32 1.0, %v1887
  %v1889 = vmul.f32 %v1886, %v1888
  %v1890 = vadd.f32 %v1886, %v1889
  %vm1891 = vweird.f32 %v752
  %vm1892 = vweird.f32 %v1886
  %vm1893 = vmor %vm1891, %vm1892
  %v1894 = vsel %vm1893, %v1886, %v1890
  %v1895 = vand.u32 2147483647, %v752
  %vm1896 = vcmp.eq.f32.partialorder %v1895, 8.507059e+37
  %v1897 = vand.u32 %v752, 2147483648
  %v1898 = vor.u32 1.1754944e-38, %v1897
  %v1899 = vsel %vm1896, %v1898, %v1894
  %v1900 = vmul.f32 1.0, %v1899
  %v1901 = vrcp.pop %v753
  %v1902 = vmul.f32 %v753, %v1901
  %v1903 = vsub.f32 1.0, %v1902
  %v1904 = vmul.f32 %v1901, %v1903
  %v1905 = vadd.f32 %v1901, %v1904
  %vm1906 = vweird.f32 %v753
  %vm1907 = vweird.f32 %v1901
  %vm1908 = vmor %vm1906, %vm1907
  %v1909 = vsel %vm1908, %v1901, %v1905
  %v1910 = vand.u32 2147483647, %v753
  %vm1911 = vcmp.eq.f32.partialorder %v1910, 8.507059e+37
  %v1912 = vand.u32 %v753, 2147483648
  %v1913 = vor.u32 1.1754944e-38, %v1912
  %v1914 = vsel %vm1911, %v1913, %v1909
  %v1915 = vmul.f32 1.0, %v1914
  %v1916 = vrcp.pop %v754
  %v1917 = vmul.f32 %v754, %v1916
  %v1918 = vsub.f32 1.0, %v1917
  %v1919 = vmul.f32 %v1916, %v1918
  %v1920 = vadd.f32 %v1916, %v1919
  %vm1921 = vweird.f32 %v754
  %vm1922 = vweird.f32 %v1916
  %vm1923 = vmor %vm1921, %vm1922
  %v1924 = vsel %vm1923, %v1916, %v1920
  %v1925 = vand.u32 2147483647, %v754
  %vm1926 = vcmp.eq.f32.partialorder %v1925, 8.507059e+37
  %v1927 = vand.u32 %v754, 2147483648
  %v1928 = vor.u32 1.1754944e-38, %v1927
  %v1929 = vsel %vm1926, %v1928, %v1924
  %v1930 = vmul.f32 1.0, %v1929
  %v1931 = vrcp.pop %v755
  %v1932 = vmul.f32 %v755, %v1931
  %v1933 = vsub.f32 1.0, %v1932
  %v1934 = vmul.f32 %v1931, %v1933
  %v1935 = vadd.f32 %v1931, %v1934
  %vm1936 = vweird.f32 %v755
  %vm1937 = vweird.f32 %v1931
  %vm1938 = vmor %vm1936, %vm1937
  %v1939 = vsel %vm1938, %v1931, %v1935
  %v1940 = vand.u32 2147483647, %v755
  %vm1941 = vcmp.eq.f32.partialorder %v1940, 8.507059e+37
  %v1942 = vand.u32 %v755, 2147483648
  %v1943 = vor.u32 1.1754944e-38, %v1942
  %v1944 = vsel %vm1941, %v1943, %v1939
  %v1945 = vmul.f32 1.0, %v1944
  %v1946 = vrcp.pop %v756
  %v1947 = vmul.f32 %v756, %v1946
  %v1948 = vsub.f32 1.0, %v1947
  %v1949 = vmul.f32 %v1946, %v1948
  %v1950 = vadd.f32 %v1946, %v1949
  %vm1951 = vweird.f32 %v756
  %vm1952 = vweird.f32 %v1946
  %vm1953 = vmor %vm1951, %vm1952
  %v1954 = vsel %vm1953, %v1946, %v1950
  %v1955 = vand.u32 2147483647, %v756
  %vm1956 = vcmp.eq.f32.partialorder %v1955, 8.507059e+37
  %v1957 = vand.u32 %v756, 2147483648
  %v1958 = vor.u32 1.1754944e-38, %v1957
  %v1959 = vsel %vm1956, %v1958, %v1954
  %v1960 = vmul.f32 1.0, %v1959
  %v1961 = vrcp.pop %v757
  %v1962 = vmul.f32 %v757, %v1961
  %v1963 = vsub.f32 1.0, %v1962
  %v1964 = vmul.f32 %v1961, %v1963
  %v1965 = vadd.f32 %v1961, %v1964
  %vm1966 = vweird.f32 %v757
  %vm1967 = vweird.f32 %v1961
  %vm1968 = vmor %vm1966, %vm1967
  %v1969 = vsel %vm1968, %v1961, %v1965
  %v1970 = vand.u32 2147483647, %v757
  %vm1971 = vcmp.eq.f32.partialorder %v1970, 8.507059e+37
  %v1972 = vand.u32 %v757, 2147483648
  %v1973 = vor.u32 1.1754944e-38, %v1972
  %v1974 = vsel %vm1971, %v1973, %v1969
  %v1975 = vmul.f32 1.0, %v1974
  %v1976 = vrcp.pop %v758
  %v1977 = vmul.f32 %v758, %v1976
  %v1978 = vsub.f32 1.0, %v1977
  %v1979 = vmul.f32 %v1976, %v1978
  %v1980 = vadd.f32 %v1976, %v1979
  %vm1981 = vweird.f32 %v758
  %vm1982 = vweird.f32 %v1976
  %vm1983 = vmor %vm1981, %vm1982
  %v1984 = vsel %vm1983, %v1976, %v1980
  %v1985 = vand.u32 2147483647, %v758
  %vm1986 = vcmp.eq.f32.partialorder %v1985, 8.507059e+37
  %v1987 = vand.u32 %v758, 2147483648
  %v1988 = vor.u32 1.1754944e-38, %v1987
  %v1989 = vsel %vm1986, %v1988, %v1984
  %v1990 = vmul.f32 1.0, %v1989
  %v1991 = vrcp.pop %v759
  %v1992 = vmul.f32 %v759, %v1991
  %v1993 = vsub.f32 1.0, %v1992
  %v1994 = vmul.f32 %v1991, %v1993
  %v1995 = vadd.f32 %v1991, %v1994
  %vm1996 = vweird.f32 %v759
  %vm1997 = vweird.f32 %v1991
  %vm1998 = vmor %vm1996, %vm1997
  %v1999 = vsel %vm1998, %v1991, %v1995
  %v2000 = vand.u32 2147483647, %v759
  %vm2001 = vcmp.eq.f32.partialorder %v2000, 8.507059e+37
  %v2002 = vand.u32 %v759, 2147483648
  %v2003 = vor.u32 1.1754944e-38, %v2002
  %v2004 = vsel %vm2001, %v2003, %v1999
  %v2005 = vmul.f32 1.0, %v2004
  %v2006 = vrcp.pop %v760
  %v2007 = vmul.f32 %v760, %v2006
  %v2008 = vsub.f32 1.0, %v2007
  %v2009 = vmul.f32 %v2006, %v2008
  %v2010 = vadd.f32 %v2006, %v2009
  %vm2011 = vweird.f32 %v760
  %vm2012 = vweird.f32 %v2006
  %vm2013 = vmor %vm2011, %vm2012
  %v2014 = vsel %vm2013, %v2006, %v2010
  %v2015 = vand.u32 2147483647, %v760
  %vm2016 = vcmp.eq.f32.partialorder %v2015, 8.507059e+37
  %v2017 = vand.u32 %v760, 2147483648
  %v2018 = vor.u32 1.1754944e-38, %v2017
  %v2019 = vsel %vm2016, %v2018, %v2014
  %v2020 = vmul.f32 1.0, %v2019
  %v2021 = vrcp.pop %v761
  %v2022 = vmul.f32 %v761, %v2021
  %v2023 = vsub.f32 1.0, %v2022
  %v2024 = vmul.f32 %v2021, %v2023
  %v2025 = vadd.f32 %v2021, %v2024
  %vm2026 = vweird.f32 %v761
  %vm2027 = vweird.f32 %v2021
  %vm2028 = vmor %vm2026, %vm2027
  %v2029 = vsel %vm2028, %v2021, %v2025
  %v2030 = vand.u32 2147483647, %v761
  %vm2031 = vcmp.eq.f32.partialorder %v2030, 8.507059e+37
  %v2032 = vand.u32 %v761, 2147483648
  %v2033 = vor.u32 1.1754944e-38, %v2032
  %v2034 = vsel %vm2031, %v2033, %v2029
  %v2035 = vmul.f32 1.0, %v2034
  %v2036 = vrcp.pop %v762
  %v2037 = vmul.f32 %v762, %v2036
  %v2038 = vsub.f32 1.0, %v2037
  %v2039 = vmul.f32 %v2036, %v2038
  %v2040 = vadd.f32 %v2036, %v2039
  %vm2041 = vweird.f32 %v762
  %vm2042 = vweird.f32 %v2036
  %vm2043 = vmor %vm2041, %vm2042
  %v2044 = vsel %vm2043, %v2036, %v2040
  %v2045 = vand.u32 2147483647, %v762
  %vm2046 = vcmp.eq.f32.partialorder %v2045, 8.507059e+37
  %v2047 = vand.u32 %v762, 2147483648
  %v2048 = vor.u32 1.1754944e-38, %v2047
  %v2049 = vsel %vm2046, %v2048, %v2044
  %v2050 = vmul.f32 1.0, %v2049
  %v2051 = vrcp.pop %v763
  %v2052 = vmul.f32 %v763, %v2051
  %v2053 = vsub.f32 1.0, %v2052
  %v2054 = vmul.f32 %v2051, %v2053
  %v2055 = vadd.f32 %v2051, %v2054
  %vm2056 = vweird.f32 %v763
  %vm2057 = vweird.f32 %v2051
  %vm2058 = vmor %vm2056, %vm2057
  %v2059 = vsel %vm2058, %v2051, %v2055
  %v2060 = vand.u32 2147483647, %v763
  %vm2061 = vcmp.eq.f32.partialorder %v2060, 8.507059e+37
  %v2062 = vand.u32 %v763, 2147483648
  %v2063 = vor.u32 1.1754944e-38, %v2062
  %v2064 = vsel %vm2061, %v2063, %v2059
  %v2065 = vmul.f32 1.0, %v2064
  %v2066 = vrcp.pop %v764
  %v2067 = vmul.f32 %v764, %v2066
  %v2068 = vsub.f32 1.0, %v2067
  %v2069 = vmul.f32 %v2066, %v2068
  %v2070 = vadd.f32 %v2066, %v2069
  %vm2071 = vweird.f32 %v764
  %vm2072 = vweird.f32 %v2066
  %vm2073 = vmor %vm2071, %vm2072
  %v2074 = vsel %vm2073, %v2066, %v2070
  %v2075 = vand.u32 2147483647, %v764
  %vm2076 = vcmp.eq.f32.partialorder %v2075, 8.507059e+37
  %v2077 = vand.u32 %v764, 2147483648
  %v2078 = vor.u32 1.1754944e-38, %v2077
  %v2079 = vsel %vm2076, %v2078, %v2074
  %v2080 = vmul.f32 1.0, %v2079
  %v2081 = vrcp.pop %v765
  %v2082 = vmul.f32 %v765, %v2081
  %v2083 = vsub.f32 1.0, %v2082
  %v2084 = vmul.f32 %v2081, %v2083
  %v2085 = vadd.f32 %v2081, %v2084
  %vm2086 = vweird.f32 %v765
  %vm2087 = vweird.f32 %v2081
  %vm2088 = vmor %vm2086, %vm2087
  %v2089 = vsel %vm2088, %v2081, %v2085
  %v2090 = vand.u32 2147483647, %v765
  %vm2091 = vcmp.eq.f32.partialorder %v2090, 8.507059e+37
  %v2092 = vand.u32 %v765, 2147483648
  %v2093 = vor.u32 1.1754944e-38, %v2092
  %v2094 = vsel %vm2091, %v2093, %v2089
  %v2095 = vmul.f32 1.0, %v2094
  %v2096 = vrcp.pop %v766
  %v2097 = vmul.f32 %v766, %v2096
  %v2098 = vsub.f32 1.0, %v2097
  %v2099 = vmul.f32 %v2096, %v2098
  %v2100 = vadd.f32 %v2096, %v2099
  %vm2101 = vweird.f32 %v766
  %vm2102 = vweird.f32 %v2096
  %vm2103 = vmor %vm2101, %vm2102
  %v2104 = vsel %vm2103, %v2096, %v2100
  %v2105 = vand.u32 2147483647, %v766
  %vm2106 = vcmp.eq.f32.partialorder %v2105, 8.507059e+37
  %v2107 = vand.u32 %v766, 2147483648
  %v2108 = vor.u32 1.1754944e-38, %v2107
  %v2109 = vsel %vm2106, %v2108, %v2104
  %v2110 = vmul.f32 1.0, %v2109
  %v2111 = vrcp.pop %v767
  %v2112 = vmul.f32 %v767, %v2111
  %v2113 = vsub.f32 1.0, %v2112
  %v2114 = vmul.f32 %v2111, %v2113
  %v2115 = vadd.f32 %v2111, %v2114
  %vm2116 = vweird.f32 %v767
  %vm2117 = vweird.f32 %v2111
  %vm2118 = vmor %vm2116, %vm2117
  %v2119 = vsel %vm2118, %v2111, %v2115
  %v2120 = vand.u32 2147483647, %v767
  %vm2121 = vcmp.eq.f32.partialorder %v2120, 8.507059e+37
  %v2122 = vand.u32 %v767, 2147483648
  %v2123 = vor.u32 1.1754944e-38, %v2122
  %v2124 = vsel %vm2121, %v2123, %v2119
  %v2125 = vmul.f32 1.0, %v2124
  %v2126 = vrcp.pop %v768
  %v2127 = vmul.f32 %v768, %v2126
  %v2128 = vsub.f32 1.0, %v2127
  %v2129 = vmul.f32 %v2126, %v2128
  %v2130 = vadd.f32 %v2126, %v2129
  %vm2131 = vweird.f32 %v768
  %vm2132 = vweird.f32 %v2126
  %vm2133 = vmor %vm2131, %vm2132
  %v2134 = vsel %vm2133, %v2126, %v2130
  %v2135 = vand.u32 2147483647, %v768
  %vm2136 = vcmp.eq.f32.partialorder %v2135, 8.507059e+37
  %v2137 = vand.u32 %v768, 2147483648
  %v2138 = vor.u32 1.1754944e-38, %v2137
  %v2139 = vsel %vm2136, %v2138, %v2134
  %v2140 = vmul.f32 1.0, %v2139
  %v2141 = vrcp.pop %v769
  %v2142 = vmul.f32 %v769, %v2141
  %v2143 = vsub.f32 1.0, %v2142
  %v2144 = vmul.f32 %v2141, %v2143
  %v2145 = vadd.f32 %v2141, %v2144
  %vm2146 = vweird.f32 %v769
  %vm2147 = vweird.f32 %v2141
  %vm2148 = vmor %vm2146, %vm2147
  %v2149 = vsel %vm2148, %v2141, %v2145
  %v2150 = vand.u32 2147483647, %v769
  %vm2151 = vcmp.eq.f32.partialorder %v2150, 8.507059e+37
  %v2152 = vand.u32 %v769, 2147483648
  %v2153 = vor.u32 1.1754944e-38, %v2152
  %v2154 = vsel %vm2151, %v2153, %v2149
  %v2155 = vmul.f32 1.0, %v2154
  %v2156 = vrcp.pop %v770
  %v2157 = vmul.f32 %v770, %v2156
  %v2158 = vsub.f32 1.0, %v2157
  %v2159 = vmul.f32 %v2156, %v2158
  %v2160 = vadd.f32 %v2156, %v2159
  %vm2161 = vweird.f32 %v770
  %vm2162 = vweird.f32 %v2156
  %vm2163 = vmor %vm2161, %vm2162
  %v2164 = vsel %vm2163, %v2156, %v2160
  %v2165 = vand.u32 2147483647, %v770
  %vm2166 = vcmp.eq.f32.partialorder %v2165, 8.507059e+37
  %v2167 = vand.u32 %v770, 2147483648
  %v2168 = vor.u32 1.1754944e-38, %v2167
  %v2169 = vsel %vm2166, %v2168, %v2164
  %v2170 = vmul.f32 1.0, %v2169
  %v2171 = vrcp.pop %v771
  %v2172 = vmul.f32 %v771, %v2171
  %v2173 = vsub.f32 1.0, %v2172
  %v2174 = vmul.f32 %v2171, %v2173
  %v2175 = vadd.f32 %v2171, %v2174
  %vm2176 = vweird.f32 %v771
  %vm2177 = vweird.f32 %v2171
  %vm2178 = vmor %vm2176, %vm2177
  %v2179 = vsel %vm2178, %v2171, %v2175
  %v2180 = vand.u32 2147483647, %v771
  %vm2181 = vcmp.eq.f32.partialorder %v2180, 8.507059e+37
  %v2182 = vand.u32 %v771, 2147483648
  %v2183 = vor.u32 1.1754944e-38, %v2182
  %v2184 = vsel %vm2181, %v2183, %v2179
  %v2185 = vmul.f32 1.0, %v2184
  %v2186 = vrcp.pop %v772
  %v2187 = vmul.f32 %v772, %v2186
  %v2188 = vsub.f32 1.0, %v2187
  %v2189 = vmul.f32 %v2186, %v2188
  %v2190 = vadd.f32 %v2186, %v2189
  %vm2191 = vweird.f32 %v772
  %vm2192 = vweird.f32 %v2186
  %vm2193 = vmor %vm2191, %vm2192
  %v2194 = vsel %vm2193, %v2186, %v2190
  %v2195 = vand.u32 2147483647, %v772
  %vm2196 = vcmp.eq.f32.partialorder %v2195, 8.507059e+37
  %v2197 = vand.u32 %v772, 2147483648
  %v2198 = vor.u32 1.1754944e-38, %v2197
  %v2199 = vsel %vm2196, %v2198, %v2194
  %v2200 = vmul.f32 1.0, %v2199
  %v2201 = vrcp.pop %v773
  %v2202 = vmul.f32 %v773, %v2201
  %v2203 = vsub.f32 1.0, %v2202
  %v2204 = vmul.f32 %v2201, %v2203
  %v2205 = vadd.f32 %v2201, %v2204
  %vm2206 = vweird.f32 %v773
  %vm2207 = vweird.f32 %v2201
  %vm2208 = vmor %vm2206, %vm2207
  %v2209 = vsel %vm2208, %v2201, %v2205
  %v2210 = vand.u32 2147483647, %v773
  %vm2211 = vcmp.eq.f32.partialorder %v2210, 8.507059e+37
  %v2212 = vand.u32 %v773, 2147483648
  %v2213 = vor.u32 1.1754944e-38, %v2212
  %v2214 = vsel %vm2211, %v2213, %v2209
  %v2215 = vmul.f32 1.0, %v2214
  %v2216 = vrcp.pop %v774
  %v2217 = vmul.f32 %v774, %v2216
  %v2218 = vsub.f32 1.0, %v2217
  %v2219 = vmul.f32 %v2216, %v2218
  %v2220 = vadd.f32 %v2216, %v2219
  %vm2221 = vweird.f32 %v774
  %vm2222 = vweird.f32 %v2216
  %vm2223 = vmor %vm2221, %vm2222
  %v2224 = vsel %vm2223, %v2216, %v2220
  %v2225 = vand.u32 2147483647, %v774
  %vm2226 = vcmp.eq.f32.partialorder %v2225, 8.507059e+37
  %v2227 = vand.u32 %v774, 2147483648
  %v2228 = vor.u32 1.1754944e-38, %v2227
  %v2229 = vsel %vm2226, %v2228, %v2224
  %v2230 = vmul.f32 1.0, %v2229
  %v2231 = vrcp.pop %v775
  %v2232 = vmul.f32 %v775, %v2231
  %v2233 = vsub.f32 1.0, %v2232
  %v2234 = vmul.f32 %v2231, %v2233
  %v2235 = vadd.f32 %v2231, %v2234
  %vm2236 = vweird.f32 %v775
  %vm2237 = vweird.f32 %v2231
  %vm2238 = vmor %vm2236, %vm2237
  %v2239 = vsel %vm2238, %v2231, %v2235
  %v2240 = vand.u32 2147483647, %v775
  %vm2241 = vcmp.eq.f32.partialorder %v2240, 8.507059e+37
  %v2242 = vand.u32 %v775, 2147483648
  %v2243 = vor.u32 1.1754944e-38, %v2242
  %v2244 = vsel %vm2241, %v2243, %v2239
  %v2245 = vmul.f32 1.0, %v2244
  %v2246 = vrcp.pop %v776
  %v2247 = vmul.f32 %v776, %v2246
  %v2248 = vsub.f32 1.0, %v2247
  %v2249 = vmul.f32 %v2246, %v2248
  %v2250 = vadd.f32 %v2246, %v2249
  %vm2251 = vweird.f32 %v776
  %vm2252 = vweird.f32 %v2246
  %vm2253 = vmor %vm2251, %vm2252
  %v2254 = vsel %vm2253, %v2246, %v2250
  %v2255 = vand.u32 2147483647, %v776
  %vm2256 = vcmp.eq.f32.partialorder %v2255, 8.507059e+37
  %v2257 = vand.u32 %v776, 2147483648
  %v2258 = vor.u32 1.1754944e-38, %v2257
  %v2259 = vsel %vm2256, %v2258, %v2254
  %v2260 = vmul.f32 1.0, %v2259
  %v2261 = vrcp.pop %v777
  %v2262 = vmul.f32 %v777, %v2261
  %v2263 = vsub.f32 1.0, %v2262
  %v2264 = vmul.f32 %v2261, %v2263
  %v2265 = vadd.f32 %v2261, %v2264
  %vm2266 = vweird.f32 %v777
  %vm2267 = vweird.f32 %v2261
  %vm2268 = vmor %vm2266, %vm2267
  %v2269 = vsel %vm2268, %v2261, %v2265
  %v2270 = vand.u32 2147483647, %v777
  %vm2271 = vcmp.eq.f32.partialorder %v2270, 8.507059e+37
  %v2272 = vand.u32 %v777, 2147483648
  %v2273 = vor.u32 1.1754944e-38, %v2272
  %v2274 = vsel %vm2271, %v2273, %v2269
  %v2275 = vmul.f32 1.0, %v2274
  %v2276 = vrcp.pop %v778
  %v2277 = vmul.f32 %v778, %v2276
  %v2278 = vsub.f32 1.0, %v2277
  %v2279 = vmul.f32 %v2276, %v2278
  %v2280 = vadd.f32 %v2276, %v2279
  %vm2281 = vweird.f32 %v778
  %vm2282 = vweird.f32 %v2276
  %vm2283 = vmor %vm2281, %vm2282
  %v2284 = vsel %vm2283, %v2276, %v2280
  %v2285 = vand.u32 2147483647, %v778
  %vm2286 = vcmp.eq.f32.partialorder %v2285, 8.507059e+37
  %v2287 = vand.u32 %v778, 2147483648
  %v2288 = vor.u32 1.1754944e-38, %v2287
  %v2289 = vsel %vm2286, %v2288, %v2284
  %v2290 = vmul.f32 1.0, %v2289
  %v2291 = vrcp.pop %v779
  %v2292 = vmul.f32 %v779, %v2291
  %v2293 = vsub.f32 1.0, %v2292
  %v2294 = vmul.f32 %v2291, %v2293
  %v2295 = vadd.f32 %v2291, %v2294
  %vm2296 = vweird.f32 %v779
  %vm2297 = vweird.f32 %v2291
  %vm2298 = vmor %vm2296, %vm2297
  %v2299 = vsel %vm2298, %v2291, %v2295
  %v2300 = vand.u32 2147483647, %v779
  %vm2301 = vcmp.eq.f32.partialorder %v2300, 8.507059e+37
  %v2302 = vand.u32 %v779, 2147483648
  %v2303 = vor.u32 1.1754944e-38, %v2302
  %v2304 = vsel %vm2301, %v2303, %v2299
  %v2305 = vmul.f32 1.0, %v2304
  %v2306 = vrcp.pop %v780
  %v2307 = vmul.f32 %v780, %v2306
  %v2308 = vsub.f32 1.0, %v2307
  %v2309 = vmul.f32 %v2306, %v2308
  %v2310 = vadd.f32 %v2306, %v2309
  %vm2311 = vweird.f32 %v780
  %vm2312 = vweird.f32 %v2306
  %vm2313 = vmor %vm2311, %vm2312
  %v2314 = vsel %vm2313, %v2306, %v2310
  %v2315 = vand.u32 2147483647, %v780
  %vm2316 = vcmp.eq.f32.partialorder %v2315, 8.507059e+37
  %v2317 = vand.u32 %v780, 2147483648
  %v2318 = vor.u32 1.1754944e-38, %v2317
  %v2319 = vsel %vm2316, %v2318, %v2314
  %v2320 = vmul.f32 1.0, %v2319
  %v2321 = vrcp.pop %v781
  %v2322 = vmul.f32 %v781, %v2321
  %v2323 = vsub.f32 1.0, %v2322
  %v2324 = vmul.f32 %v2321, %v2323
  %v2325 = vadd.f32 %v2321, %v2324
  %vm2326 = vweird.f32 %v781
  %vm2327 = vweird.f32 %v2321
  %vm2328 = vmor %vm2326, %vm2327
  %v2329 = vsel %vm2328, %v2321, %v2325
  %v2330 = vand.u32 2147483647, %v781
  %vm2331 = vcmp.eq.f32.partialorder %v2330, 8.507059e+37
  %v2332 = vand.u32 %v781, 2147483648
  %v2333 = vor.u32 1.1754944e-38, %v2332
  %v2334 = vsel %vm2331, %v2333, %v2329
  %v2335 = vmul.f32 1.0, %v2334
  %v2336 = vrcp.pop %v782
  %v2337 = vmul.f32 %v782, %v2336
  %v2338 = vsub.f32 1.0, %v2337
  %v2339 = vmul.f32 %v2336, %v2338
  %v2340 = vadd.f32 %v2336, %v2339
  %vm2341 = vweird.f32 %v782
  %vm2342 = vweird.f32 %v2336
  %vm2343 = vmor %vm2341, %vm2342
  %v2344 = vsel %vm2343, %v2336, %v2340
  %v2345 = vand.u32 2147483647, %v782
  %vm2346 = vcmp.eq.f32.partialorder %v2345, 8.507059e+37
  %v2347 = vand.u32 %v782, 2147483648
  %v2348 = vor.u32 1.1754944e-38, %v2347
  %v2349 = vsel %vm2346, %v2348, %v2344
  %v2350 = vmul.f32 1.0, %v2349
  %v2351 = vrcp.pop %v783
  %v2352 = vmul.f32 %v783, %v2351
  %v2353 = vsub.f32 1.0, %v2352
  %v2354 = vmul.f32 %v2351, %v2353
  %v2355 = vadd.f32 %v2351, %v2354
  %vm2356 = vweird.f32 %v783
  %vm2357 = vweird.f32 %v2351
  %vm2358 = vmor %vm2356, %vm2357
  %v2359 = vsel %vm2358, %v2351, %v2355
  %v2360 = vand.u32 2147483647, %v783
  %vm2361 = vcmp.eq.f32.partialorder %v2360, 8.507059e+37
  %v2362 = vand.u32 %v783, 2147483648
  %v2363 = vor.u32 1.1754944e-38, %v2362
  %v2364 = vsel %vm2361, %v2363, %v2359
  %v2365 = vmul.f32 1.0, %v2364
  %v2366 = vrcp.pop %v784
  %v2367 = vmul.f32 %v784, %v2366
  %v2368 = vsub.f32 1.0, %v2367
  %v2369 = vmul.f32 %v2366, %v2368
  %v2370 = vadd.f32 %v2366, %v2369
  %vm2371 = vweird.f32 %v784
  %vm2372 = vweird.f32 %v2366
  %vm2373 = vmor %vm2371, %vm2372
  %v2374 = vsel %vm2373, %v2366, %v2370
  %v2375 = vand.u32 2147483647, %v784
  %vm2376 = vcmp.eq.f32.partialorder %v2375, 8.507059e+37
  %v2377 = vand.u32 %v784, 2147483648
  %v2378 = vor.u32 1.1754944e-38, %v2377
  %v2379 = vsel %vm2376, %v2378, %v2374
  %v2380 = vmul.f32 1.0, %v2379
  %v2381 = vrcp.pop %v785
  %v2382 = vmul.f32 %v785, %v2381
  %v2383 = vsub.f32 1.0, %v2382
  %v2384 = vmul.f32 %v2381, %v2383
  %v2385 = vadd.f32 %v2381, %v2384
  %vm2386 = vweird.f32 %v785
  %vm2387 = vweird.f32 %v2381
  %vm2388 = vmor %vm2386, %vm2387
  %v2389 = vsel %vm2388, %v2381, %v2385
  %v2390 = vand.u32 2147483647, %v785
  %vm2391 = vcmp.eq.f32.partialorder %v2390, 8.507059e+37
  %v2392 = vand.u32 %v785, 2147483648
  %v2393 = vor.u32 1.1754944e-38, %v2392
  %v2394 = vsel %vm2391, %v2393, %v2389
  %v2395 = vmul.f32 1.0, %v2394
  %v2396 = vrcp.pop %v786
  %v2397 = vmul.f32 %v786, %v2396
  %v2398 = vsub.f32 1.0, %v2397
  %v2399 = vmul.f32 %v2396, %v2398
  %v2400 = vadd.f32 %v2396, %v2399
  %vm2401 = vweird.f32 %v786
  %vm2402 = vweird.f32 %v2396
  %vm2403 = vmor %vm2401, %vm2402
  %v2404 = vsel %vm2403, %v2396, %v2400
  %v2405 = vand.u32 2147483647, %v786
  %vm2406 = vcmp.eq.f32.partialorder %v2405, 8.507059e+37
  %v2407 = vand.u32 %v786, 2147483648
  %v2408 = vor.u32 1.1754944e-38, %v2407
  %v2409 = vsel %vm2406, %v2408, %v2404
  %v2410 = vmul.f32 1.0, %v2409
  %v2411 = vrcp.pop %v787
  %v2412 = vmul.f32 %v787, %v2411
  %v2413 = vsub.f32 1.0, %v2412
  %v2414 = vmul.f32 %v2411, %v2413
  %v2415 = vadd.f32 %v2411, %v2414
  %vm2416 = vweird.f32 %v787
  %vm2417 = vweird.f32 %v2411
  %vm2418 = vmor %vm2416, %vm2417
  %v2419 = vsel %vm2418, %v2411, %v2415
  %v2420 = vand.u32 2147483647, %v787
  %vm2421 = vcmp.eq.f32.partialorder %v2420, 8.507059e+37
  %v2422 = vand.u32 %v787, 2147483648
  %v2423 = vor.u32 1.1754944e-38, %v2422
  %v2424 = vsel %vm2421, %v2423, %v2419
  %v2425 = vmul.f32 1.0, %v2424
  %v2426 = vrcp.pop %v788
  %v2427 = vmul.f32 %v788, %v2426
  %v2428 = vsub.f32 1.0, %v2427
  %v2429 = vmul.f32 %v2426, %v2428
  %v2430 = vadd.f32 %v2426, %v2429
  %vm2431 = vweird.f32 %v788
  %vm2432 = vweird.f32 %v2426
  %vm2433 = vmor %vm2431, %vm2432
  %v2434 = vsel %vm2433, %v2426, %v2430
  %v2435 = vand.u32 2147483647, %v788
  %vm2436 = vcmp.eq.f32.partialorder %v2435, 8.507059e+37
  %v2437 = vand.u32 %v788, 2147483648
  %v2438 = vor.u32 1.1754944e-38, %v2437
  %v2439 = vsel %vm2436, %v2438, %v2434
  %v2440 = vmul.f32 1.0, %v2439
  %v2441 = vrcp.pop %v789
  %v2442 = vmul.f32 %v789, %v2441
  %v2443 = vsub.f32 1.0, %v2442
  %v2444 = vmul.f32 %v2441, %v2443
  %v2445 = vadd.f32 %v2441, %v2444
  %vm2446 = vweird.f32 %v789
  %vm2447 = vweird.f32 %v2441
  %vm2448 = vmor %vm2446, %vm2447
  %v2449 = vsel %vm2448, %v2441, %v2445
  %v2450 = vand.u32 2147483647, %v789
  %vm2451 = vcmp.eq.f32.partialorder %v2450, 8.507059e+37
  %v2452 = vand.u32 %v789, 2147483648
  %v2453 = vor.u32 1.1754944e-38, %v2452
  %v2454 = vsel %vm2451, %v2453, %v2449
  %v2455 = vmul.f32 1.0, %v2454
  %v2456 = vrcp.pop %v790
  %v2457 = vmul.f32 %v790, %v2456
  %v2458 = vsub.f32 1.0, %v2457
  %v2459 = vmul.f32 %v2456, %v2458
  %v2460 = vadd.f32 %v2456, %v2459
  %vm2461 = vweird.f32 %v790
  %vm2462 = vweird.f32 %v2456
  %vm2463 = vmor %vm2461, %vm2462
  %v2464 = vsel %vm2463, %v2456, %v2460
  %v2465 = vand.u32 2147483647, %v790
  %vm2466 = vcmp.eq.f32.partialorder %v2465, 8.507059e+37
  %v2467 = vand.u32 %v790, 2147483648
  %v2468 = vor.u32 1.1754944e-38, %v2467
  %v2469 = vsel %vm2466, %v2468, %v2464
  %v2470 = vmul.f32 1.0, %v2469
  %v2471 = vrcp.pop %v791
  %v2472 = vmul.f32 %v791, %v2471
  %v2473 = vsub.f32 1.0, %v2472
  %v2474 = vmul.f32 %v2471, %v2473
  %v2475 = vadd.f32 %v2471, %v2474
  %vm2476 = vweird.f32 %v791
  %vm2477 = vweird.f32 %v2471
  %vm2478 = vmor %vm2476, %vm2477
  %v2479 = vsel %vm2478, %v2471, %v2475
  %v2480 = vand.u32 2147483647, %v791
  %vm2481 = vcmp.eq.f32.partialorder %v2480, 8.507059e+37
  %v2482 = vand.u32 %v791, 2147483648
  %v2483 = vor.u32 1.1754944e-38, %v2482
  %v2484 = vsel %vm2481, %v2483, %v2479
  %v2485 = vmul.f32 1.0, %v2484
  %v2486 = vrcp.pop %v792
  %v2487 = vmul.f32 %v792, %v2486
  %v2488 = vsub.f32 1.0, %v2487
  %v2489 = vmul.f32 %v2486, %v2488
  %v2490 = vadd.f32 %v2486, %v2489
  %vm2491 = vweird.f32 %v792
  %vm2492 = vweird.f32 %v2486
  %vm2493 = vmor %vm2491, %vm2492
  %v2494 = vsel %vm2493, %v2486, %v2490
  %v2495 = vand.u32 2147483647, %v792
  %vm2496 = vcmp.eq.f32.partialorder %v2495, 8.507059e+37
  %v2497 = vand.u32 %v792, 2147483648
  %v2498 = vor.u32 1.1754944e-38, %v2497
  %v2499 = vsel %vm2496, %v2498, %v2494
  %v2500 = vmul.f32 1.0, %v2499
  %v2501 = vrcp.pop %v793
  %v2502 = vmul.f32 %v793, %v2501
  %v2503 = vsub.f32 1.0, %v2502
  %v2504 = vmul.f32 %v2501, %v2503
  %v2505 = vadd.f32 %v2501, %v2504
  %vm2506 = vweird.f32 %v793
  %vm2507 = vweird.f32 %v2501
  %vm2508 = vmor %vm2506, %vm2507
  %v2509 = vsel %vm2508, %v2501, %v2505
  %v2510 = vand.u32 2147483647, %v793
  %vm2511 = vcmp.eq.f32.partialorder %v2510, 8.507059e+37
  %v2512 = vand.u32 %v793, 2147483648
  %v2513 = vor.u32 1.1754944e-38, %v2512
  %v2514 = vsel %vm2511, %v2513, %v2509
  %v2515 = vmul.f32 1.0, %v2514
  %v2516 = vrcp.pop %v794
  %v2517 = vmul.f32 %v794, %v2516
  %v2518 = vsub.f32 1.0, %v2517
  %v2519 = vmul.f32 %v2516, %v2518
  %v2520 = vadd.f32 %v2516, %v2519
  %vm2521 = vweird.f32 %v794
  %vm2522 = vweird.f32 %v2516
  %vm2523 = vmor %vm2521, %vm2522
  %v2524 = vsel %vm2523, %v2516, %v2520
  %v2525 = vand.u32 2147483647, %v794
  %vm2526 = vcmp.eq.f32.partialorder %v2525, 8.507059e+37
  %v2527 = vand.u32 %v794, 2147483648
  %v2528 = vor.u32 1.1754944e-38, %v2527
  %v2529 = vsel %vm2526, %v2528, %v2524
  %v2530 = vmul.f32 1.0, %v2529
  %v2531 = vrcp.pop %v795
  %v2532 = vmul.f32 %v795, %v2531
  %v2533 = vsub.f32 1.0, %v2532
  %v2534 = vmul.f32 %v2531, %v2533
  %v2535 = vadd.f32 %v2531, %v2534
  %vm2536 = vweird.f32 %v795
  %vm2537 = vweird.f32 %v2531
  %vm2538 = vmor %vm2536, %vm2537
  %v2539 = vsel %vm2538, %v2531, %v2535
  %v2540 = vand.u32 2147483647, %v795
  %vm2541 = vcmp.eq.f32.partialorder %v2540, 8.507059e+37
  %v2542 = vand.u32 %v795, 2147483648
  %v2543 = vor.u32 1.1754944e-38, %v2542
  %v2544 = vsel %vm2541, %v2543, %v2539
  %v2545 = vmul.f32 1.0, %v2544
  %v2546 = vrcp.pop %v796
  %v2547 = vmul.f32 %v796, %v2546
  %v2548 = vsub.f32 1.0, %v2547
  %v2549 = vmul.f32 %v2546, %v2548
  %v2550 = vadd.f32 %v2546, %v2549
  %vm2551 = vweird.f32 %v796
  %vm2552 = vweird.f32 %v2546
  %vm2553 = vmor %vm2551, %vm2552
  %v2554 = vsel %vm2553, %v2546, %v2550
  %v2555 = vand.u32 2147483647, %v796
  %vm2556 = vcmp.eq.f32.partialorder %v2555, 8.507059e+37
  %v2557 = vand.u32 %v796, 2147483648
  %v2558 = vor.u32 1.1754944e-38, %v2557
  %v2559 = vsel %vm2556, %v2558, %v2554
  %v2560 = vmul.f32 1.0, %v2559
  %v2561 = vrcp.pop %v797
  %v2562 = vmul.f32 %v797, %v2561
  %v2563 = vsub.f32 1.0, %v2562
  %v2564 = vmul.f32 %v2561, %v2563
  %v2565 = vadd.f32 %v2561, %v2564
  %vm2566 = vweird.f32 %v797
  %vm2567 = vweird.f32 %v2561
  %vm2568 = vmor %vm2566, %vm2567
  %v2569 = vsel %vm2568, %v2561, %v2565
  %v2570 = vand.u32 2147483647, %v797
  %vm2571 = vcmp.eq.f32.partialorder %v2570, 8.507059e+37
  %v2572 = vand.u32 %v797, 2147483648
  %v2573 = vor.u32 1.1754944e-38, %v2572
  %v2574 = vsel %vm2571, %v2573, %v2569
  %v2575 = vmul.f32 1.0, %v2574
  %v2576 = vrcp.pop %v798
  %v2577 = vmul.f32 %v798, %v2576
  %v2578 = vsub.f32 1.0, %v2577
  %v2579 = vmul.f32 %v2576, %v2578
  %v2580 = vadd.f32 %v2576, %v2579
  %vm2581 = vweird.f32 %v798
  %vm2582 = vweird.f32 %v2576
  %vm2583 = vmor %vm2581, %vm2582
  %v2584 = vsel %vm2583, %v2576, %v2580
  %v2585 = vand.u32 2147483647, %v798
  %vm2586 = vcmp.eq.f32.partialorder %v2585, 8.507059e+37
  %v2587 = vand.u32 %v798, 2147483648
  %v2588 = vor.u32 1.1754944e-38, %v2587
  %v2589 = vsel %vm2586, %v2588, %v2584
  %v2590 = vmul.f32 1.0, %v2589
  %v2591 = vrcp.pop %v799
  %v2592 = vmul.f32 %v799, %v2591
  %v2593 = vsub.f32 1.0, %v2592
  %v2594 = vmul.f32 %v2591, %v2593
  %v2595 = vadd.f32 %v2591, %v2594
  %vm2596 = vweird.f32 %v799
  %vm2597 = vweird.f32 %v2591
  %vm2598 = vmor %vm2596, %vm2597
  %v2599 = vsel %vm2598, %v2591, %v2595
  %v2600 = vand.u32 2147483647, %v799
  %vm2601 = vcmp.eq.f32.partialorder %v2600, 8.507059e+37
  %v2602 = vand.u32 %v799, 2147483648
  %v2603 = vor.u32 1.1754944e-38, %v2602
  %v2604 = vsel %vm2601, %v2603, %v2599
  %v2605 = vmul.f32 1.0, %v2604
  %v2606 = vrcp.pop %v800
  %v2607 = vmul.f32 %v800, %v2606
  %v2608 = vsub.f32 1.0, %v2607
  %v2609 = vmul.f32 %v2606, %v2608
  %v2610 = vadd.f32 %v2606, %v2609
  %vm2611 = vweird.f32 %v800
  %vm2612 = vweird.f32 %v2606
  %vm2613 = vmor %vm2611, %vm2612
  %v2614 = vsel %vm2613, %v2606, %v2610
  %v2615 = vand.u32 2147483647, %v800
  %vm2616 = vcmp.eq.f32.partialorder %v2615, 8.507059e+37
  %v2617 = vand.u32 %v800, 2147483648
  %v2618 = vor.u32 1.1754944e-38, %v2617
  %v2619 = vsel %vm2616, %v2618, %v2614
  %v2620 = vmul.f32 1.0, %v2619
  %v2621 = vrcp.pop %v801
  %v2622 = vmul.f32 %v801, %v2621
  %v2623 = vsub.f32 1.0, %v2622
  %v2624 = vmul.f32 %v2621, %v2623
  %v2625 = vadd.f32 %v2621, %v2624
  %vm2626 = vweird.f32 %v801
  %vm2627 = vweird.f32 %v2621
  %vm2628 = vmor %vm2626, %vm2627
  %v2629 = vsel %vm2628, %v2621, %v2625
  %v2630 = vand.u32 2147483647, %v801
  %vm2631 = vcmp.eq.f32.partialorder %v2630, 8.507059e+37
  %v2632 = vand.u32 %v801, 2147483648
  %v2633 = vor.u32 1.1754944e-38, %v2632
  %v2634 = vsel %vm2631, %v2633, %v2629
  %v2635 = vmul.f32 1.0, %v2634
  %v2636 = vrcp.pop %v802
  %v2637 = vmul.f32 %v802, %v2636
  %v2638 = vsub.f32 1.0, %v2637
  %v2639 = vmul.f32 %v2636, %v2638
  %v2640 = vadd.f32 %v2636, %v2639
  %vm2641 = vweird.f32 %v802
  %vm2642 = vweird.f32 %v2636
  %vm2643 = vmor %vm2641, %vm2642
  %v2644 = vsel %vm2643, %v2636, %v2640
  %v2645 = vand.u32 2147483647, %v802
  %vm2646 = vcmp.eq.f32.partialorder %v2645, 8.507059e+37
  %v2647 = vand.u32 %v802, 2147483648
  %v2648 = vor.u32 1.1754944e-38, %v2647
  %v2649 = vsel %vm2646, %v2648, %v2644
  %v2650 = vmul.f32 1.0, %v2649
  %v2651 = vrcp.pop %v803
  %v2652 = vmul.f32 %v803, %v2651
  %v2653 = vsub.f32 1.0, %v2652
  %v2654 = vmul.f32 %v2651, %v2653
  %v2655 = vadd.f32 %v2651, %v2654
  %vm2656 = vweird.f32 %v803
  %vm2657 = vweird.f32 %v2651
  %vm2658 = vmor %vm2656, %vm2657
  %v2659 = vsel %vm2658, %v2651, %v2655
  %v2660 = vand.u32 2147483647, %v803
  %vm2661 = vcmp.eq.f32.partialorder %v2660, 8.507059e+37
  %v2662 = vand.u32 %v803, 2147483648
  %v2663 = vor.u32 1.1754944e-38, %v2662
  %v2664 = vsel %vm2661, %v2663, %v2659
  %v2665 = vmul.f32 1.0, %v2664
  %v2666 = vrcp.pop %v804
  %v2667 = vmul.f32 %v804, %v2666
  %v2668 = vsub.f32 1.0, %v2667
  %v2669 = vmul.f32 %v2666, %v2668
  %v2670 = vadd.f32 %v2666, %v2669
  %vm2671 = vweird.f32 %v804
  %vm2672 = vweird.f32 %v2666
  %vm2673 = vmor %vm2671, %vm2672
  %v2674 = vsel %vm2673, %v2666, %v2670
  %v2675 = vand.u32 2147483647, %v804
  %vm2676 = vcmp.eq.f32.partialorder %v2675, 8.507059e+37
  %v2677 = vand.u32 %v804, 2147483648
  %v2678 = vor.u32 1.1754944e-38, %v2677
  %v2679 = vsel %vm2676, %v2678, %v2674
  %v2680 = vmul.f32 1.0, %v2679
  %v2681 = vrcp.pop %v805
  %v2682 = vmul.f32 %v805, %v2681
  %v2683 = vsub.f32 1.0, %v2682
  %v2684 = vmul.f32 %v2681, %v2683
  %v2685 = vadd.f32 %v2681, %v2684
  %vm2686 = vweird.f32 %v805
  %vm2687 = vweird.f32 %v2681
  %vm2688 = vmor %vm2686, %vm2687
  %v2689 = vsel %vm2688, %v2681, %v2685
  %v2690 = vand.u32 2147483647, %v805
  %vm2691 = vcmp.eq.f32.partialorder %v2690, 8.507059e+37
  %v2692 = vand.u32 %v805, 2147483648
  %v2693 = vor.u32 1.1754944e-38, %v2692
  %v2694 = vsel %vm2691, %v2693, %v2689
  %v2695 = vmul.f32 1.0, %v2694
  %v2696 = vrcp.pop %v806
  %v2697 = vmul.f32 %v806, %v2696
  %v2698 = vsub.f32 1.0, %v2697
  %v2699 = vmul.f32 %v2696, %v2698
  %v2700 = vadd.f32 %v2696, %v2699
  %vm2701 = vweird.f32 %v806
  %vm2702 = vweird.f32 %v2696
  %vm2703 = vmor %vm2701, %vm2702
  %v2704 = vsel %vm2703, %v2696, %v2700
  %v2705 = vand.u32 2147483647, %v806
  %vm2706 = vcmp.eq.f32.partialorder %v2705, 8.507059e+37
  %v2707 = vand.u32 %v806, 2147483648
  %v2708 = vor.u32 1.1754944e-38, %v2707
  %v2709 = vsel %vm2706, %v2708, %v2704
  %v2710 = vmul.f32 1.0, %v2709
  %v2711 = vrcp.pop %v807
  %v2712 = vmul.f32 %v807, %v2711
  %v2713 = vsub.f32 1.0, %v2712
  %v2714 = vmul.f32 %v2711, %v2713
  %v2715 = vadd.f32 %v2711, %v2714
  %vm2716 = vweird.f32 %v807
  %vm2717 = vweird.f32 %v2711
  %vm2718 = vmor %vm2716, %vm2717
  %v2719 = vsel %vm2718, %v2711, %v2715
  %v2720 = vand.u32 2147483647, %v807
  %vm2721 = vcmp.eq.f32.partialorder %v2720, 8.507059e+37
  %v2722 = vand.u32 %v807, 2147483648
  %v2723 = vor.u32 1.1754944e-38, %v2722
  %v2724 = vsel %vm2721, %v2723, %v2719
  %v2725 = vmul.f32 1.0, %v2724
  %v2726 = vrcp.pop %v808
  %v2727 = vmul.f32 %v808, %v2726
  %v2728 = vsub.f32 1.0, %v2727
  %v2729 = vmul.f32 %v2726, %v2728
  %v2730 = vadd.f32 %v2726, %v2729
  %vm2731 = vweird.f32 %v808
  %vm2732 = vweird.f32 %v2726
  %vm2733 = vmor %vm2731, %vm2732
  %v2734 = vsel %vm2733, %v2726, %v2730
  %v2735 = vand.u32 2147483647, %v808
  %vm2736 = vcmp.eq.f32.partialorder %v2735, 8.507059e+37
  %v2737 = vand.u32 %v808, 2147483648
  %v2738 = vor.u32 1.1754944e-38, %v2737
  %v2739 = vsel %vm2736, %v2738, %v2734
  %v2740 = vmul.f32 1.0, %v2739
  %v2741 = vrcp.pop %v809
  %v2742 = vmul.f32 %v809, %v2741
  %v2743 = vsub.f32 1.0, %v2742
  %v2744 = vmul.f32 %v2741, %v2743
  %v2745 = vadd.f32 %v2741, %v2744
  %vm2746 = vweird.f32 %v809
  %vm2747 = vweird.f32 %v2741
  %vm2748 = vmor %vm2746, %vm2747
  %v2749 = vsel %vm2748, %v2741, %v2745
  %v2750 = vand.u32 2147483647, %v809
  %vm2751 = vcmp.eq.f32.partialorder %v2750, 8.507059e+37
  %v2752 = vand.u32 %v809, 2147483648
  %v2753 = vor.u32 1.1754944e-38, %v2752
  %v2754 = vsel %vm2751, %v2753, %v2749
  %v2755 = vmul.f32 1.0, %v2754
  %v2756 = vrcp.pop %v810
  %v2757 = vmul.f32 %v810, %v2756
  %v2758 = vsub.f32 1.0, %v2757
  %v2759 = vmul.f32 %v2756, %v2758
  %v2760 = vadd.f32 %v2756, %v2759
  %vm2761 = vweird.f32 %v810
  %vm2762 = vweird.f32 %v2756
  %vm2763 = vmor %vm2761, %vm2762
  %v2764 = vsel %vm2763, %v2756, %v2760
  %v2765 = vand.u32 2147483647, %v810
  %vm2766 = vcmp.eq.f32.partialorder %v2765, 8.507059e+37
  %v2767 = vand.u32 %v810, 2147483648
  %v2768 = vor.u32 1.1754944e-38, %v2767
  %v2769 = vsel %vm2766, %v2768, %v2764
  %v2770 = vmul.f32 1.0, %v2769
  %v2771 = vrcp.pop %v811
  %v2772 = vmul.f32 %v811, %v2771
  %v2773 = vsub.f32 1.0, %v2772
  %v2774 = vmul.f32 %v2771, %v2773
  %v2775 = vadd.f32 %v2771, %v2774
  %vm2776 = vweird.f32 %v811
  %vm2777 = vweird.f32 %v2771
  %vm2778 = vmor %vm2776, %vm2777
  %v2779 = vsel %vm2778, %v2771, %v2775
  %v2780 = vand.u32 2147483647, %v811
  %vm2781 = vcmp.eq.f32.partialorder %v2780, 8.507059e+37
  %v2782 = vand.u32 %v811, 2147483648
  %v2783 = vor.u32 1.1754944e-38, %v2782
  %v2784 = vsel %vm2781, %v2783, %v2779
  %v2785 = vmul.f32 1.0, %v2784
  %v2786 = vrcp.pop %v812
  %v2787 = vmul.f32 %v812, %v2786
  %v2788 = vsub.f32 1.0, %v2787
  %v2789 = vmul.f32 %v2786, %v2788
  %v2790 = vadd.f32 %v2786, %v2789
  %vm2791 = vweird.f32 %v812
  %vm2792 = vweird.f32 %v2786
  %vm2793 = vmor %vm2791, %vm2792
  %v2794 = vsel %vm2793, %v2786, %v2790
  %v2795 = vand.u32 2147483647, %v812
  %vm2796 = vcmp.eq.f32.partialorder %v2795, 8.507059e+37
  %v2797 = vand.u32 %v812, 2147483648
  %v2798 = vor.u32 1.1754944e-38, %v2797
  %v2799 = vsel %vm2796, %v2798, %v2794
  %v2800 = vmul.f32 1.0, %v2799
  %v2801 = vrcp.pop %v813
  %v2802 = vmul.f32 %v813, %v2801
  %v2803 = vsub.f32 1.0, %v2802
  %v2804 = vmul.f32 %v2801, %v2803
  %v2805 = vadd.f32 %v2801, %v2804
  %vm2806 = vweird.f32 %v813
  %vm2807 = vweird.f32 %v2801
  %vm2808 = vmor %vm2806, %vm2807
  %v2809 = vsel %vm2808, %v2801, %v2805
  %v2810 = vand.u32 2147483647, %v813
  %vm2811 = vcmp.eq.f32.partialorder %v2810, 8.507059e+37
  %v2812 = vand.u32 %v813, 2147483648
  %v2813 = vor.u32 1.1754944e-38, %v2812
  %v2814 = vsel %vm2811, %v2813, %v2809
  %v2815 = vmul.f32 1.0, %v2814
  %v2816 = vrcp.pop %v814
  %v2817 = vmul.f32 %v814, %v2816
  %v2818 = vsub.f32 1.0, %v2817
  %v2819 = vmul.f32 %v2816, %v2818
  %v2820 = vadd.f32 %v2816, %v2819
  %vm2821 = vweird.f32 %v814
  %vm2822 = vweird.f32 %v2816
  %vm2823 = vmor %vm2821, %vm2822
  %v2824 = vsel %vm2823, %v2816, %v2820
  %v2825 = vand.u32 2147483647, %v814
  %vm2826 = vcmp.eq.f32.partialorder %v2825, 8.507059e+37
  %v2827 = vand.u32 %v814, 2147483648
  %v2828 = vor.u32 1.1754944e-38, %v2827
  %v2829 = vsel %vm2826, %v2828, %v2824
  %v2830 = vmul.f32 1.0, %v2829
  %v2831 = vrcp.pop %v815
  %v2832 = vmul.f32 %v815, %v2831
  %v2833 = vsub.f32 1.0, %v2832
  %v2834 = vmul.f32 %v2831, %v2833
  %v2835 = vadd.f32 %v2831, %v2834
  %vm2836 = vweird.f32 %v815
  %vm2837 = vweird.f32 %v2831
  %vm2838 = vmor %vm2836, %vm2837
  %v2839 = vsel %vm2838, %v2831, %v2835
  %v2840 = vand.u32 2147483647, %v815
  %vm2841 = vcmp.eq.f32.partialorder %v2840, 8.507059e+37
  %v2842 = vand.u32 %v815, 2147483648
  %v2843 = vor.u32 1.1754944e-38, %v2842
  %v2844 = vsel %vm2841, %v2843, %v2839
  %v2845 = vmul.f32 1.0, %v2844
  %v2846 = vrcp.pop %v816
  %v2847 = vmul.f32 %v816, %v2846
  %v2848 = vsub.f32 1.0, %v2847
  %v2849 = vmul.f32 %v2846, %v2848
  %v2850 = vadd.f32 %v2846, %v2849
  %vm2851 = vweird.f32 %v816
  %vm2852 = vweird.f32 %v2846
  %vm2853 = vmor %vm2851, %vm2852
  %v2854 = vsel %vm2853, %v2846, %v2850
  %v2855 = vand.u32 2147483647, %v816
  %vm2856 = vcmp.eq.f32.partialorder %v2855, 8.507059e+37
  %v2857 = vand.u32 %v816, 2147483648
  %v2858 = vor.u32 1.1754944e-38, %v2857
  %v2859 = vsel %vm2856, %v2858, %v2854
  %v2860 = vmul.f32 1.0, %v2859
  %v2861 = vrcp.pop %v817
  %v2862 = vmul.f32 %v817, %v2861
  %v2863 = vsub.f32 1.0, %v2862
  %v2864 = vmul.f32 %v2861, %v2863
  %v2865 = vadd.f32 %v2861, %v2864
  %vm2866 = vweird.f32 %v817
  %vm2867 = vweird.f32 %v2861
  %vm2868 = vmor %vm2866, %vm2867
  %v2869 = vsel %vm2868, %v2861, %v2865
  %v2870 = vand.u32 2147483647, %v817
  %vm2871 = vcmp.eq.f32.partialorder %v2870, 8.507059e+37
  %v2872 = vand.u32 %v817, 2147483648
  %v2873 = vor.u32 1.1754944e-38, %v2872
  %v2874 = vsel %vm2871, %v2873, %v2869
  %v2875 = vmul.f32 1.0, %v2874
  %v2876 = vrcp.pop %v818
  %v2877 = vmul.f32 %v818, %v2876
  %v2878 = vsub.f32 1.0, %v2877
  %v2879 = vmul.f32 %v2876, %v2878
  %v2880 = vadd.f32 %v2876, %v2879
  %vm2881 = vweird.f32 %v818
  %vm2882 = vweird.f32 %v2876
  %vm2883 = vmor %vm2881, %vm2882
  %v2884 = vsel %vm2883, %v2876, %v2880
  %v2885 = vand.u32 2147483647, %v818
  %vm2886 = vcmp.eq.f32.partialorder %v2885, 8.507059e+37
  %v2887 = vand.u32 %v818, 2147483648
  %v2888 = vor.u32 1.1754944e-38, %v2887
  %v2889 = vsel %vm2886, %v2888, %v2884
  %v2890 = vmul.f32 1.0, %v2889
  %v2891 = vrcp.pop %v819
  %v2892 = vmul.f32 %v819, %v2891
  %v2893 = vsub.f32 1.0, %v2892
  %v2894 = vmul.f32 %v2891, %v2893
  %v2895 = vadd.f32 %v2891, %v2894
  %vm2896 = vweird.f32 %v819
  %vm2897 = vweird.f32 %v2891
  %vm2898 = vmor %vm2896, %vm2897
  %v2899 = vsel %vm2898, %v2891, %v2895
  %v2900 = vand.u32 2147483647, %v819
  %vm2901 = vcmp.eq.f32.partialorder %v2900, 8.507059e+37
  %v2902 = vand.u32 %v819, 2147483648
  %v2903 = vor.u32 1.1754944e-38, %v2902
  %v2904 = vsel %vm2901, %v2903, %v2899
  %v2905 = vmul.f32 1.0, %v2904
  %v2906 = vrcp.pop %v820
  %v2907 = vmul.f32 %v820, %v2906
  %v2908 = vsub.f32 1.0, %v2907
  %v2909 = vmul.f32 %v2906, %v2908
  %v2910 = vadd.f32 %v2906, %v2909
  %vm2911 = vweird.f32 %v820
  %vm2912 = vweird.f32 %v2906
  %vm2913 = vmor %vm2911, %vm2912
  %v2914 = vsel %vm2913, %v2906, %v2910
  %v2915 = vand.u32 2147483647, %v820
  %vm2916 = vcmp.eq.f32.partialorder %v2915, 8.507059e+37
  %v2917 = vand.u32 %v820, 2147483648
  %v2918 = vor.u32 1.1754944e-38, %v2917
  %v2919 = vsel %vm2916, %v2918, %v2914
  %v2920 = vmul.f32 1.0, %v2919
  %v2921 = vrcp.pop %v821
  %v2922 = vmul.f32 %v821, %v2921
  %v2923 = vsub.f32 1.0, %v2922
  %v2924 = vmul.f32 %v2921, %v2923
  %v2925 = vadd.f32 %v2921, %v2924
  %vm2926 = vweird.f32 %v821
  %vm2927 = vweird.f32 %v2921
  %vm2928 = vmor %vm2926, %vm2927
  %v2929 = vsel %vm2928, %v2921, %v2925
  %v2930 = vand.u32 2147483647, %v821
  %vm2931 = vcmp.eq.f32.partialorder %v2930, 8.507059e+37
  %v2932 = vand.u32 %v821, 2147483648
  %v2933 = vor.u32 1.1754944e-38, %v2932
  %v2934 = vsel %vm2931, %v2933, %v2929
  %v2935 = vmul.f32 1.0, %v2934
  %v2936 = vrcp.pop %v822
  %v2937 = vmul.f32 %v822, %v2936
  %v2938 = vsub.f32 1.0, %v2937
  %v2939 = vmul.f32 %v2936, %v2938
  %v2940 = vadd.f32 %v2936, %v2939
  %vm2941 = vweird.f32 %v822
  %vm2942 = vweird.f32 %v2936
  %vm2943 = vmor %vm2941, %vm2942
  %v2944 = vsel %vm2943, %v2936, %v2940
  %v2945 = vand.u32 2147483647, %v822
  %vm2946 = vcmp.eq.f32.partialorder %v2945, 8.507059e+37
  %v2947 = vand.u32 %v822, 2147483648
  %v2948 = vor.u32 1.1754944e-38, %v2947
  %v2949 = vsel %vm2946, %v2948, %v2944
  %v2950 = vmul.f32 1.0, %v2949
  %v2951 = vrcp.pop %v823
  %v2952 = vmul.f32 %v823, %v2951
  %v2953 = vsub.f32 1.0, %v2952
  %v2954 = vmul.f32 %v2951, %v2953
  %v2955 = vadd.f32 %v2951, %v2954
  %vm2956 = vweird.f32 %v823
  %vm2957 = vweird.f32 %v2951
  %vm2958 = vmor %vm2956, %vm2957
  %v2959 = vsel %vm2958, %v2951, %v2955
  %v2960 = vand.u32 2147483647, %v823
  %vm2961 = vcmp.eq.f32.partialorder %v2960, 8.507059e+37
  %v2962 = vand.u32 %v823, 2147483648
  %v2963 = vor.u32 1.1754944e-38, %v2962
  %v2964 = vsel %vm2961, %v2963, %v2959
  %v2965 = vmul.f32 1.0, %v2964
  %v2966 = vrcp.pop %v824
  %v2967 = vmul.f32 %v824, %v2966
  %v2968 = vsub.f32 1.0, %v2967
  %v2969 = vmul.f32 %v2966, %v2968
  %v2970 = vadd.f32 %v2966, %v2969
  %vm2971 = vweird.f32 %v824
  %vm2972 = vweird.f32 %v2966
  %vm2973 = vmor %vm2971, %vm2972
  %v2974 = vsel %vm2973, %v2966, %v2970
  %v2975 = vand.u32 2147483647, %v824
  %vm2976 = vcmp.eq.f32.partialorder %v2975, 8.507059e+37
  %v2977 = vand.u32 %v824, 2147483648
  %v2978 = vor.u32 1.1754944e-38, %v2977
  %v2979 = vsel %vm2976, %v2978, %v2974
  %v2980 = vmul.f32 1.0, %v2979
  %v2981 = vrcp.pop %v825
  %v2982 = vmul.f32 %v825, %v2981
  %v2983 = vsub.f32 1.0, %v2982
  %v2984 = vmul.f32 %v2981, %v2983
  %v2985 = vadd.f32 %v2981, %v2984
  %vm2986 = vweird.f32 %v825
  %vm2987 = vweird.f32 %v2981
  %vm2988 = vmor %vm2986, %vm2987
  %v2989 = vsel %vm2988, %v2981, %v2985
  %v2990 = vand.u32 2147483647, %v825
  %vm2991 = vcmp.eq.f32.partialorder %v2990, 8.507059e+37
  %v2992 = vand.u32 %v825, 2147483648
  %v2993 = vor.u32 1.1754944e-38, %v2992
  %v2994 = vsel %vm2991, %v2993, %v2989
  %v2995 = vmul.f32 1.0, %v2994
  %v2996 = vrcp.pop %v826
  %v2997 = vmul.f32 %v826, %v2996
  %v2998 = vsub.f32 1.0, %v2997
  %v2999 = vmul.f32 %v2996, %v2998
  %v3000 = vadd.f32 %v2996, %v2999
  %vm3001 = vweird.f32 %v826
  %vm3002 = vweird.f32 %v2996
  %vm3003 = vmor %vm3001, %vm3002
  %v3004 = vsel %vm3003, %v2996, %v3000
  %v3005 = vand.u32 2147483647, %v826
  %vm3006 = vcmp.eq.f32.partialorder %v3005, 8.507059e+37
  %v3007 = vand.u32 %v826, 2147483648
  %v3008 = vor.u32 1.1754944e-38, %v3007
  %v3009 = vsel %vm3006, %v3008, %v3004
  %v3010 = vmul.f32 1.0, %v3009
  %v3011 = vrcp.pop %v827
  %v3012 = vmul.f32 %v827, %v3011
  %v3013 = vsub.f32 1.0, %v3012
  %v3014 = vmul.f32 %v3011, %v3013
  %v3015 = vadd.f32 %v3011, %v3014
  %vm3016 = vweird.f32 %v827
  %vm3017 = vweird.f32 %v3011
  %vm3018 = vmor %vm3016, %vm3017
  %v3019 = vsel %vm3018, %v3011, %v3015
  %v3020 = vand.u32 2147483647, %v827
  %vm3021 = vcmp.eq.f32.partialorder %v3020, 8.507059e+37
  %v3022 = vand.u32 %v827, 2147483648
  %v3023 = vor.u32 1.1754944e-38, %v3022
  %v3024 = vsel %vm3021, %v3023, %v3019
  %v3025 = vmul.f32 1.0, %v3024
  %v3026 = vrcp.pop %v828
  %v3027 = vmul.f32 %v828, %v3026
  %v3028 = vsub.f32 1.0, %v3027
  %v3029 = vmul.f32 %v3026, %v3028
  %v3030 = vadd.f32 %v3026, %v3029
  %vm3031 = vweird.f32 %v828
  %vm3032 = vweird.f32 %v3026
  %vm3033 = vmor %vm3031, %vm3032
  %v3034 = vsel %vm3033, %v3026, %v3030
  %v3035 = vand.u32 2147483647, %v828
  %vm3036 = vcmp.eq.f32.partialorder %v3035, 8.507059e+37
  %v3037 = vand.u32 %v828, 2147483648
  %v3038 = vor.u32 1.1754944e-38, %v3037
  %v3039 = vsel %vm3036, %v3038, %v3034
  %v3040 = vmul.f32 1.0, %v3039
  %v3041 = vrcp.pop %v829
  %v3042 = vmul.f32 %v829, %v3041
  %v3043 = vsub.f32 1.0, %v3042
  %v3044 = vmul.f32 %v3041, %v3043
  %v3045 = vadd.f32 %v3041, %v3044
  %vm3046 = vweird.f32 %v829
  %vm3047 = vweird.f32 %v3041
  %vm3048 = vmor %vm3046, %vm3047
  %v3049 = vsel %vm3048, %v3041, %v3045
  %v3050 = vand.u32 2147483647, %v829
  %vm3051 = vcmp.eq.f32.partialorder %v3050, 8.507059e+37
  %v3052 = vand.u32 %v829, 2147483648
  %v3053 = vor.u32 1.1754944e-38, %v3052
  %v3054 = vsel %vm3051, %v3053, %v3049
  %v3055 = vmul.f32 1.0, %v3054
  %v3056 = vrcp.pop %v830
  %v3057 = vmul.f32 %v830, %v3056
  %v3058 = vsub.f32 1.0, %v3057
  %v3059 = vmul.f32 %v3056, %v3058
  %v3060 = vadd.f32 %v3056, %v3059
  %vm3061 = vweird.f32 %v830
  %vm3062 = vweird.f32 %v3056
  %vm3063 = vmor %vm3061, %vm3062
  %v3064 = vsel %vm3063, %v3056, %v3060
  %v3065 = vand.u32 2147483647, %v830
  %vm3066 = vcmp.eq.f32.partialorder %v3065, 8.507059e+37
  %v3067 = vand.u32 %v830, 2147483648
  %v3068 = vor.u32 1.1754944e-38, %v3067
  %v3069 = vsel %vm3066, %v3068, %v3064
  %v3070 = vmul.f32 1.0, %v3069
  %v3071 = vrcp.pop %v831
  %v3072 = vmul.f32 %v831, %v3071
  %v3073 = vsub.f32 1.0, %v3072
  %v3074 = vmul.f32 %v3071, %v3073
  %v3075 = vadd.f32 %v3071, %v3074
  %vm3076 = vweird.f32 %v831
  %vm3077 = vweird.f32 %v3071
  %vm3078 = vmor %vm3076, %vm3077
  %v3079 = vsel %vm3078, %v3071, %v3075
  %v3080 = vand.u32 2147483647, %v831
  %vm3081 = vcmp.eq.f32.partialorder %v3080, 8.507059e+37
  %v3082 = vand.u32 %v831, 2147483648
  %v3083 = vor.u32 1.1754944e-38, %v3082
  %v3084 = vsel %vm3081, %v3083, %v3079
  %v3085 = vmul.f32 1.0, %v3084
  %v3086 = vrcp.pop %v832
  %v3087 = vmul.f32 %v832, %v3086
  %v3088 = vsub.f32 1.0, %v3087
  %v3089 = vmul.f32 %v3086, %v3088
  %v3090 = vadd.f32 %v3086, %v3089
  %vm3091 = vweird.f32 %v832
  %vm3092 = vweird.f32 %v3086
  %vm3093 = vmor %vm3091, %vm3092
  %v3094 = vsel %vm3093, %v3086, %v3090
  %v3095 = vand.u32 2147483647, %v832
  %vm3096 = vcmp.eq.f32.partialorder %v3095, 8.507059e+37
  %v3097 = vand.u32 %v832, 2147483648
  %v3098 = vor.u32 1.1754944e-38, %v3097
  %v3099 = vsel %vm3096, %v3098, %v3094
  %v3100 = vmul.f32 1.0, %v3099
  %v3101 = vrcp.pop %v833
  %v3102 = vmul.f32 %v833, %v3101
  %v3103 = vsub.f32 1.0, %v3102
  %v3104 = vmul.f32 %v3101, %v3103
  %v3105 = vadd.f32 %v3101, %v3104
  %vm3106 = vweird.f32 %v833
  %vm3107 = vweird.f32 %v3101
  %vm3108 = vmor %vm3106, %vm3107
  %v3109 = vsel %vm3108, %v3101, %v3105
  %v3110 = vand.u32 2147483647, %v833
  %vm3111 = vcmp.eq.f32.partialorder %v3110, 8.507059e+37
  %v3112 = vand.u32 %v833, 2147483648
  %v3113 = vor.u32 1.1754944e-38, %v3112
  %v3114 = vsel %vm3111, %v3113, %v3109
  %v3115 = vmul.f32 1.0, %v3114
  %v3116 = vrcp.pop %v834
  %v3117 = vmul.f32 %v834, %v3116
  %v3118 = vsub.f32 1.0, %v3117
  %v3119 = vmul.f32 %v3116, %v3118
  %v3120 = vadd.f32 %v3116, %v3119
  %vm3121 = vweird.f32 %v834
  %vm3122 = vweird.f32 %v3116
  %vm3123 = vmor %vm3121, %vm3122
  %v3124 = vsel %vm3123, %v3116, %v3120
  %v3125 = vand.u32 2147483647, %v834
  %vm3126 = vcmp.eq.f32.partialorder %v3125, 8.507059e+37
  %v3127 = vand.u32 %v834, 2147483648
  %v3128 = vor.u32 1.1754944e-38, %v3127
  %v3129 = vsel %vm3126, %v3128, %v3124
  %v3130 = vmul.f32 1.0, %v3129
  %v3131 = vrcp.pop %v835
  %v3132 = vmul.f32 %v835, %v3131
  %v3133 = vsub.f32 1.0, %v3132
  %v3134 = vmul.f32 %v3131, %v3133
  %v3135 = vadd.f32 %v3131, %v3134
  %vm3136 = vweird.f32 %v835
  %vm3137 = vweird.f32 %v3131
  %vm3138 = vmor %vm3136, %vm3137
  %v3139 = vsel %vm3138, %v3131, %v3135
  %v3140 = vand.u32 2147483647, %v835
  %vm3141 = vcmp.eq.f32.partialorder %v3140, 8.507059e+37
  %v3142 = vand.u32 %v835, 2147483648
  %v3143 = vor.u32 1.1754944e-38, %v3142
  %v3144 = vsel %vm3141, %v3143, %v3139
  %v3145 = vmul.f32 1.0, %v3144
  %v3146 = vrcp.pop %v836
  %v3147 = vmul.f32 %v836, %v3146
  %v3148 = vsub.f32 1.0, %v3147
  %v3149 = vmul.f32 %v3146, %v3148
  %v3150 = vadd.f32 %v3146, %v3149
  %vm3151 = vweird.f32 %v836
  %vm3152 = vweird.f32 %v3146
  %vm3153 = vmor %vm3151, %vm3152
  %v3154 = vsel %vm3153, %v3146, %v3150
  %v3155 = vand.u32 2147483647, %v836
  %vm3156 = vcmp.eq.f32.partialorder %v3155, 8.507059e+37
  %v3157 = vand.u32 %v836, 2147483648
  %v3158 = vor.u32 1.1754944e-38, %v3157
  %v3159 = vsel %vm3156, %v3158, %v3154
  %v3160 = vmul.f32 1.0, %v3159
  %v3161 = vrcp.pop %v837
  %v3162 = vmul.f32 %v837, %v3161
  %v3163 = vsub.f32 1.0, %v3162
  %v3164 = vmul.f32 %v3161, %v3163
  %v3165 = vadd.f32 %v3161, %v3164
  %vm3166 = vweird.f32 %v837
  %vm3167 = vweird.f32 %v3161
  %vm3168 = vmor %vm3166, %vm3167
  %v3169 = vsel %vm3168, %v3161, %v3165
  %v3170 = vand.u32 2147483647, %v837
  %vm3171 = vcmp.eq.f32.partialorder %v3170, 8.507059e+37
  %v3172 = vand.u32 %v837, 2147483648
  %v3173 = vor.u32 1.1754944e-38, %v3172
  %v3174 = vsel %vm3171, %v3173, %v3169
  %v3175 = vmul.f32 1.0, %v3174
  %v3176 = vrcp.pop %v838
  %v3177 = vmul.f32 %v838, %v3176
  %v3178 = vsub.f32 1.0, %v3177
  %v3179 = vmul.f32 %v3176, %v3178
  %v3180 = vadd.f32 %v3176, %v3179
  %vm3181 = vweird.f32 %v838
  %vm3182 = vweird.f32 %v3176
  %vm3183 = vmor %vm3181, %vm3182
  %v3184 = vsel %vm3183, %v3176, %v3180
  %v3185 = vand.u32 2147483647, %v838
  %vm3186 = vcmp.eq.f32.partialorder %v3185, 8.507059e+37
  %v3187 = vand.u32 %v838, 2147483648
  %v3188 = vor.u32 1.1754944e-38, %v3187
  %v3189 = vsel %vm3186, %v3188, %v3184
  %v3190 = vmul.f32 1.0, %v3189
  %v3191 = vrcp.pop %v839
  %v3192 = vmul.f32 %v839, %v3191
  %v3193 = vsub.f32 1.0, %v3192
  %v3194 = vmul.f32 %v3191, %v3193
  %v3195 = vadd.f32 %v3191, %v3194
  %vm3196 = vweird.f32 %v839
  %vm3197 = vweird.f32 %v3191
  %vm3198 = vmor %vm3196, %vm3197
  %v3199 = vsel %vm3198, %v3191, %v3195
  %v3200 = vand.u32 2147483647, %v839
  %vm3201 = vcmp.eq.f32.partialorder %v3200, 8.507059e+37
  %v3202 = vand.u32 %v839, 2147483648
  %v3203 = vor.u32 1.1754944e-38, %v3202
  %v3204 = vsel %vm3201, %v3203, %v3199
  %v3205 = vmul.f32 1.0, %v3204
  %v3206 = vrcp.pop %v840
  %v3207 = vmul.f32 %v840, %v3206
  %v3208 = vsub.f32 1.0, %v3207
  %v3209 = vmul.f32 %v3206, %v3208
  %v3210 = vadd.f32 %v3206, %v3209
  %vm3211 = vweird.f32 %v840
  %vm3212 = vweird.f32 %v3206
  %vm3213 = vmor %vm3211, %vm3212
  %v3214 = vsel %vm3213, %v3206, %v3210
  %v3215 = vand.u32 2147483647, %v840
  %vm3216 = vcmp.eq.f32.partialorder %v3215, 8.507059e+37
  %v3217 = vand.u32 %v840, 2147483648
  %v3218 = vor.u32 1.1754944e-38, %v3217
  %v3219 = vsel %vm3216, %v3218, %v3214
  %v3220 = vmul.f32 1.0, %v3219
  %v3221 = vrcp.pop %v841
  %v3222 = vmul.f32 %v841, %v3221
  %v3223 = vsub.f32 1.0, %v3222
  %v3224 = vmul.f32 %v3221, %v3223
  %v3225 = vadd.f32 %v3221, %v3224
  %vm3226 = vweird.f32 %v841
  %vm3227 = vweird.f32 %v3221
  %vm3228 = vmor %vm3226, %vm3227
  %v3229 = vsel %vm3228, %v3221, %v3225
  %v3230 = vand.u32 2147483647, %v841
  %vm3231 = vcmp.eq.f32.partialorder %v3230, 8.507059e+37
  %v3232 = vand.u32 %v841, 2147483648
  %v3233 = vor.u32 1.1754944e-38, %v3232
  %v3234 = vsel %vm3231, %v3233, %v3229
  %v3235 = vmul.f32 1.0, %v3234
  %v3236 = vrcp.pop %v842
  %v3237 = vmul.f32 %v842, %v3236
  %v3238 = vsub.f32 1.0, %v3237
  %v3239 = vmul.f32 %v3236, %v3238
  %v3240 = vadd.f32 %v3236, %v3239
  %vm3241 = vweird.f32 %v842
  %vm3242 = vweird.f32 %v3236
  %vm3243 = vmor %vm3241, %vm3242
  %v3244 = vsel %vm3243, %v3236, %v3240
  %v3245 = vand.u32 2147483647, %v842
  %vm3246 = vcmp.eq.f32.partialorder %v3245, 8.507059e+37
  %v3247 = vand.u32 %v842, 2147483648
  %v3248 = vor.u32 1.1754944e-38, %v3247
  %v3249 = vsel %vm3246, %v3248, %v3244
  %v3250 = vmul.f32 1.0, %v3249
  %v3251 = vrcp.pop %v843
  %v3252 = vmul.f32 %v843, %v3251
  %v3253 = vsub.f32 1.0, %v3252
  %v3254 = vmul.f32 %v3251, %v3253
  %v3255 = vadd.f32 %v3251, %v3254
  %vm3256 = vweird.f32 %v843
  %vm3257 = vweird.f32 %v3251
  %vm3258 = vmor %vm3256, %vm3257
  %v3259 = vsel %vm3258, %v3251, %v3255
  %v3260 = vand.u32 2147483647, %v843
  %vm3261 = vcmp.eq.f32.partialorder %v3260, 8.507059e+37
  %v3262 = vand.u32 %v843, 2147483648
  %v3263 = vor.u32 1.1754944e-38, %v3262
  %v3264 = vsel %vm3261, %v3263, %v3259
  %v3265 = vmul.f32 1.0, %v3264
  %v3266 = vrcp.pop %v844
  %v3267 = vmul.f32 %v844, %v3266
  %v3268 = vsub.f32 1.0, %v3267
  %v3269 = vmul.f32 %v3266, %v3268
  %v3270 = vadd.f32 %v3266, %v3269
  %vm3271 = vweird.f32 %v844
  %vm3272 = vweird.f32 %v3266
  %vm3273 = vmor %vm3271, %vm3272
  %v3274 = vsel %vm3273, %v3266, %v3270
  %v3275 = vand.u32 2147483647, %v844
  %vm3276 = vcmp.eq.f32.partialorder %v3275, 8.507059e+37
  %v3277 = vand.u32 %v844, 2147483648
  %v3278 = vor.u32 1.1754944e-38, %v3277
  %v3279 = vsel %vm3276, %v3278, %v3274
  %v3280 = vmul.f32 1.0, %v3279
  %v3281 = vrcp.pop %v845
  %v3282 = vmul.f32 %v845, %v3281
  %v3283 = vsub.f32 1.0, %v3282
  %v3284 = vmul.f32 %v3281, %v3283
  %v3285 = vadd.f32 %v3281, %v3284
  %vm3286 = vweird.f32 %v845
  %vm3287 = vweird.f32 %v3281
  %vm3288 = vmor %vm3286, %vm3287
  %v3289 = vsel %vm3288, %v3281, %v3285
  %v3290 = vand.u32 2147483647, %v845
  %vm3291 = vcmp.eq.f32.partialorder %v3290, 8.507059e+37
  %v3292 = vand.u32 %v845, 2147483648
  %v3293 = vor.u32 1.1754944e-38, %v3292
  %v3294 = vsel %vm3291, %v3293, %v3289
  %v3295 = vmul.f32 1.0, %v3294
  %v3296 = vrcp.pop %v846
  %v3297 = vmul.f32 %v846, %v3296
  %v3298 = vsub.f32 1.0, %v3297
  %v3299 = vmul.f32 %v3296, %v3298
  %v3300 = vadd.f32 %v3296, %v3299
  %vm3301 = vweird.f32 %v846
  %vm3302 = vweird.f32 %v3296
  %vm3303 = vmor %vm3301, %vm3302
  %v3304 = vsel %vm3303, %v3296, %v3300
  %v3305 = vand.u32 2147483647, %v846
  %vm3306 = vcmp.eq.f32.partialorder %v3305, 8.507059e+37
  %v3307 = vand.u32 %v846, 2147483648
  %v3308 = vor.u32 1.1754944e-38, %v3307
  %v3309 = vsel %vm3306, %v3308, %v3304
  %v3310 = vmul.f32 1.0, %v3309
  %v3311 = vrcp.pop %v847
  %v3312 = vmul.f32 %v847, %v3311
  %v3313 = vsub.f32 1.0, %v3312
  %v3314 = vmul.f32 %v3311, %v3313
  %v3315 = vadd.f32 %v3311, %v3314
  %vm3316 = vweird.f32 %v847
  %vm3317 = vweird.f32 %v3311
  %vm3318 = vmor %vm3316, %vm3317
  %v3319 = vsel %vm3318, %v3311, %v3315
  %v3320 = vand.u32 2147483647, %v847
  %vm3321 = vcmp.eq.f32.partialorder %v3320, 8.507059e+37
  %v3322 = vand.u32 %v847, 2147483648
  %v3323 = vor.u32 1.1754944e-38, %v3322
  %v3324 = vsel %vm3321, %v3323, %v3319
  %v3325 = vmul.f32 1.0, %v3324
  %v3326 = vrcp.pop %v848
  %v3327 = vmul.f32 %v848, %v3326
  %v3328 = vsub.f32 1.0, %v3327
  %v3329 = vmul.f32 %v3326, %v3328
  %v3330 = vadd.f32 %v3326, %v3329
  %vm3331 = vweird.f32 %v848
  %vm3332 = vweird.f32 %v3326
  %vm3333 = vmor %vm3331, %vm3332
  %v3334 = vsel %vm3333, %v3326, %v3330
  %v3335 = vand.u32 2147483647, %v848
  %vm3336 = vcmp.eq.f32.partialorder %v3335, 8.507059e+37
  %v3337 = vand.u32 %v848, 2147483648
  %v3338 = vor.u32 1.1754944e-38, %v3337
  %v3339 = vsel %vm3336, %v3338, %v3334
  %v3340 = vmul.f32 1.0, %v3339
  %v3341 = vrcp.pop %v849
  %v3342 = vmul.f32 %v849, %v3341
  %v3343 = vsub.f32 1.0, %v3342
  %v3344 = vmul.f32 %v3341, %v3343
  %v3345 = vadd.f32 %v3341, %v3344
  %vm3346 = vweird.f32 %v849
  %vm3347 = vweird.f32 %v3341
  %vm3348 = vmor %vm3346, %vm3347
  %v3349 = vsel %vm3348, %v3341, %v3345
  %v3350 = vand.u32 2147483647, %v849
  %vm3351 = vcmp.eq.f32.partialorder %v3350, 8.507059e+37
  %v3352 = vand.u32 %v849, 2147483648
  %v3353 = vor.u32 1.1754944e-38, %v3352
  %v3354 = vsel %vm3351, %v3353, %v3349
  %v3355 = vmul.f32 1.0, %v3354
  %v3356 = vrcp.pop %v850
  %v3357 = vmul.f32 %v850, %v3356
  %v3358 = vsub.f32 1.0, %v3357
  %v3359 = vmul.f32 %v3356, %v3358
  %v3360 = vadd.f32 %v3356, %v3359
  %vm3361 = vweird.f32 %v850
  %vm3362 = vweird.f32 %v3356
  %vm3363 = vmor %vm3361, %vm3362
  %v3364 = vsel %vm3363, %v3356, %v3360
  %v3365 = vand.u32 2147483647, %v850
  %vm3366 = vcmp.eq.f32.partialorder %v3365, 8.507059e+37
  %v3367 = vand.u32 %v850, 2147483648
  %v3368 = vor.u32 1.1754944e-38, %v3367
  %v3369 = vsel %vm3366, %v3368, %v3364
  %v3370 = vmul.f32 1.0, %v3369
  %v3371 = vld [vmem:[%s1] sm:$0xff]
  %v3372 = vld [vmem:[%s1 + $0x8] sm:$0xff]
  %v3373 = vld [vmem:[%s1 + $0x10] sm:$0xff]
  %v3374 = vld [vmem:[%s1 + $0x18] sm:$0xff]
  %v3375 = vld [vmem:[%s1 + $0x20] sm:$0xff]
  %v3376 = vld [vmem:[%s1 + $0x28] sm:$0xff]
  %v3377 = vld [vmem:[%s1 + $0x30] sm:$0xff]
  %v3378 = vld [vmem:[%s1 + $0x38] sm:$0xff]
  %v3379 = vld [vmem:[%s1 + $0x40] sm:$0xff]
  %v3380 = vld [vmem:[%s1 + $0x48] sm:$0xff]
  %v3381 = vld [vmem:[%s1 + $0x50] sm:$0xff]
  %v3382 = vld [vmem:[%s1 + $0x58] sm:$0xff]
  %v3383 = vld [vmem:[%s1 + $0x60] sm:$0xff]
  %v3384 = vld [vmem:[%s1 + $0x68] sm:$0xff]
  %v3385 = vld [vmem:[%s1 + $0x70] sm:$0xff]
  %v3386 = vld [vmem:[%s1 + $0x78] sm:$0xff]
  %v3387 = vld [vmem:[%s1 + $0x80] sm:$0xff]
  %v3388 = vld [vmem:[%s1 + $0x88] sm:$0xff]
  %v3389 = vld [vmem:[%s1 + $0x90] sm:$0xff]
  %v3390 = vld [vmem:[%s1 + $0x98] sm:$0xff]
  %v3391 = vld [vmem:[%s1 + $0xa0] sm:$0xff]
  %v3392 = vld [vmem:[%s1 + $0xa8] sm:$0xff]
  %v3393 = vld [vmem:[%s1 + $0xb0] sm:$0xff]
  %v3394 = vld [vmem:[%s1 + $0xb8] sm:$0xff]
  %v3395 = vld [vmem:[%s1 + $0xc0] sm:$0xff]
  %v3396 = vld [vmem:[%s1 + $0xc8] sm:$0xff]
  %v3397 = vld [vmem:[%s1 + $0xd0] sm:$0xff]
  %v3398 = vld [vmem:[%s1 + $0xd8] sm:$0xff]
  %v3399 = vld [vmem:[%s1 + $0xe0] sm:$0xff]
  %v3400 = vld [vmem:[%s1 + $0xe8] sm:$0xff]
  %v3401 = vld [vmem:[%s1 + $0xf0] sm:$0xff]
  %v3402 = vld [vmem:[%s1 + $0xf8] sm:$0xff]
  %v3403 = vld [vmem:[%s1 + $0x100] sm:$0xff]
  %v3404 = vld [vmem:[%s1 + $0x108] sm:$0xff]
  %v3405 = vld [vmem:[%s1 + $0x110] sm:$0xff]
  %v3406 = vld [vmem:[%s1 + $0x118] sm:$0xff]
  %v3407 = vld [vmem:[%s1 + $0x120] sm:$0xff]
  %v3408 = vld [vmem:[%s1 + $0x128] sm:$0xff]
  %v3409 = vld [vmem:[%s1 + $0x130] sm:$0xff]
  %v3410 = vld [vmem:[%s1 + $0x138] sm:$0xff]
  %v3411 = vld [vmem:[%s1 + $0x140] sm:$0xff]
  %v3412 = vld [vmem:[%s1 + $0x148] sm:$0xff]
  %v3413 = vld [vmem:[%s1 + $0x150] sm:$0xff]
  %v3414 = vld [vmem:[%s1 + $0x158] sm:$0xff]
  %v3415 = vld [vmem:[%s1 + $0x160] sm:$0xff]
  %v3416 = vld [vmem:[%s1 + $0x168] sm:$0xff]
  %v3417 = vld [vmem:[%s1 + $0x170] sm:$0xff]
  %v3418 = vld [vmem:[%s1 + $0x178] sm:$0xff]
  %v3419 = vld [vmem:[%s1 + $0x180] sm:$0xff]
  %v3420 = vld [vmem:[%s1 + $0x188] sm:$0xff]
  %v3421 = vld [vmem:[%s1 + $0x190] sm:$0xff]
  %v3422 = vld [vmem:[%s1 + $0x198] sm:$0xff]
  %v3423 = vld [vmem:[%s1 + $0x1a0] sm:$0xff]
  %v3424 = vld [vmem:[%s1 + $0x1a8] sm:$0xff]
  %v3425 = vld [vmem:[%s1 + $0x1b0] sm:$0xff]
  %v3426 = vld [vmem:[%s1 + $0x1b8] sm:$0xff]
  %v3427 = vld [vmem:[%s1 + $0x1c0] sm:$0xff]
  %v3428 = vld [vmem:[%s1 + $0x1c8] sm:$0xff]
  %v3429 = vld [vmem:[%s1 + $0x1d0] sm:$0xff]
  %v3430 = vld [vmem:[%s1 + $0x1d8] sm:$0xff]
  %v3431 = vld [vmem:[%s1 + $0x1e0] sm:$0xff]
  %v3432 = vld [vmem:[%s1 + $0x1e8] sm:$0xff]
  %v3433 = vld [vmem:[%s1 + $0x1f0] sm:$0xff]
  %v3434 = vld [vmem:[%s1 + $0x1f8] sm:$0xff]
  %v3435 = vld [vmem:[%s1 + $0x200] sm:$0xff]
  %v3436 = vld [vmem:[%s1 + $0x208] sm:$0xff]
  %v3437 = vld [vmem:[%s1 + $0x210] sm:$0xff]
  %v3438 = vld [vmem:[%s1 + $0x218] sm:$0xff]
  %v3439 = vld [vmem:[%s1 + $0x220] sm:$0xff]
  %v3440 = vld [vmem:[%s1 + $0x228] sm:$0xff]
  %v3441 = vld [vmem:[%s1 + $0x230] sm:$0xff]
  %v3442 = vld [vmem:[%s1 + $0x238] sm:$0xff]
  %v3443 = vld [vmem:[%s1 + $0x240] sm:$0xff]
  %v3444 = vld [vmem:[%s1 + $0x248] sm:$0xff]
  %v3445 = vld [vmem:[%s1 + $0x250] sm:$0xff]
  %v3446 = vld [vmem:[%s1 + $0x258] sm:$0xff]
  %v3447 = vld [vmem:[%s1 + $0x260] sm:$0xff]
  %v3448 = vld [vmem:[%s1 + $0x268] sm:$0xff]
  %v3449 = vld [vmem:[%s1 + $0x270] sm:$0xff]
  %v3450 = vld [vmem:[%s1 + $0x278] sm:$0xff]
  %v3451 = vld [vmem:[%s1 + $0x280] sm:$0xff]
  %v3452 = vld [vmem:[%s1 + $0x288] sm:$0xff]
  %v3453 = vld [vmem:[%s1 + $0x290] sm:$0xff]
  %v3454 = vld [vmem:[%s1 + $0x298] sm:$0xff]
  %v3455 = vld [vmem:[%s1 + $0x2a0] sm:$0xff]
  %v3456 = vld [vmem:[%s1 + $0x2a8] sm:$0xff]
  %v3457 = vld [vmem:[%s1 + $0x2b0] sm:$0xff]
  %v3458 = vld [vmem:[%s1 + $0x2b8] sm:$0xff]
  %v3459 = vld [vmem:[%s1 + $0x2c0] sm:$0xff]
  %v3460 = vld [vmem:[%s1 + $0x2c8] sm:$0xff]
  %v3461 = vld [vmem:[%s1 + $0x2d0] sm:$0xff]
  %v3462 = vld [vmem:[%s1 + $0x2d8] sm:$0xff]
  %v3463 = vld [vmem:[%s1 + $0x2e0] sm:$0xff]
  %v3464 = vld [vmem:[%s1 + $0x2e8] sm:$0xff]
  %v3465 = vld [vmem:[%s1 + $0x2f0] sm:$0xff]
  %v3466 = vld [vmem:[%s1 + $0x2f8] sm:$0xff]
  %v3467 = vld [vmem:[%s1 + $0x300] sm:$0xff]
  %v3468 = vld [vmem:[%s1 + $0x308] sm:$0xff]
  %v3469 = vld [vmem:[%s1 + $0x310] sm:$0xff]
  %v3470 = vld [vmem:[%s1 + $0x318] sm:$0xff]
  %v3471 = vld [vmem:[%s1 + $0x320] sm:$0xff]
  %v3472 = vld [vmem:[%s1 + $0x328] sm:$0xff]
  %v3473 = vld [vmem:[%s1 + $0x330] sm:$0xff]
  %v3474 = vld [vmem:[%s1 + $0x338] sm:$0xff]
  %v3475 = vld [vmem:[%s1 + $0x340] sm:$0xff]
  %v3476 = vld [vmem:[%s1 + $0x348] sm:$0xff]
  %v3477 = vld [vmem:[%s1 + $0x350] sm:$0xff]
  %v3478 = vld [vmem:[%s1 + $0x358] sm:$0xff]
  %v3479 = vld [vmem:[%s1 + $0x360] sm:$0xff]
  %v3480 = vld [vmem:[%s1 + $0x368] sm:$0xff]
  %v3481 = vld [vmem:[%s1 + $0x370] sm:$0xff]
  %v3482 = vld [vmem:[%s1 + $0x378] sm:$0xff]
  %v3483 = vld [vmem:[%s1 + $0x380] sm:$0xff]
  %v3484 = vld [vmem:[%s1 + $0x388] sm:$0xff]
  %v3485 = vld [vmem:[%s1 + $0x390] sm:$0xff]
  %v3486 = vld [vmem:[%s1 + $0x398] sm:$0xff]
  %v3487 = vld [vmem:[%s1 + $0x3a0] sm:$0xff]
  %v3488 = vld [vmem:[%s1 + $0x3a8] sm:$0xff]
  %v3489 = vld [vmem:[%s1 + $0x3b0] sm:$0xff]
  %v3490 = vld [vmem:[%s1 + $0x3b8] sm:$0xff]
  %v3491 = vld [vmem:[%s1 + $0x3c0] sm:$0xff]
  %v3492 = vld [vmem:[%s1 + $0x3c8] sm:$0xff]
  %v3493 = vld [vmem:[%s1 + $0x3d0] sm:$0xff]
  %v3494 = vld [vmem:[%s1 + $0x3d8] sm:$0xff]
  %v3495 = vld [vmem:[%s1 + $0x3e0] sm:$0xff]
  %v3496 = vld [vmem:[%s1 + $0x3e8] sm:$0xff]
  %v3497 = vld [vmem:[%s1 + $0x3f0] sm:$0xff]
  %v3498 = vld [vmem:[%s1 + $0x3f8] sm:$0xff]
  %v3499 = vld [vmem:[%s1 + $0x400] sm:$0xff]
  %v3500 = vld [vmem:[%s1 + $0x408] sm:$0xff]
  %v3501 = vld [vmem:[%s1 + $0x410] sm:$0xff]
  %v3502 = vld [vmem:[%s1 + $0x418] sm:$0xff]
  %v3503 = vld [vmem:[%s1 + $0x420] sm:$0xff]
  %v3504 = vld [vmem:[%s1 + $0x428] sm:$0xff]
  %v3505 = vld [vmem:[%s1 + $0x430] sm:$0xff]
  %v3506 = vld [vmem:[%s1 + $0x438] sm:$0xff]
  %v3507 = vld [vmem:[%s1 + $0x440] sm:$0xff]
  %v3508 = vld [vmem:[%s1 + $0x448] sm:$0xff]
  %v3509 = vld [vmem:[%s1 + $0x450] sm:$0xff]
  %v3510 = vld [vmem:[%s1 + $0x458] sm:$0xff]
  %v3511 = vld [vmem:[%s1 + $0x460] sm:$0xff]
  %v3512 = vld [vmem:[%s1 + $0x468] sm:$0xff]
  %v3513 = vld [vmem:[%s1 + $0x470] sm:$0xff]
  %v3514 = vld [vmem:[%s1 + $0x478] sm:$0xff]
  %v3515 = vld [vmem:[%s1 + $0x480] sm:$0xff]
  %v3516 = vld [vmem:[%s1 + $0x488] sm:$0xff]
  %v3517 = vld [vmem:[%s1 + $0x490] sm:$0xff]
  %v3518 = vld [vmem:[%s1 + $0x498] sm:$0xff]
  %v3519 = vld [vmem:[%s1 + $0x4a0] sm:$0xff]
  %v3520 = vld [vmem:[%s1 + $0x4a8] sm:$0xff]
  %v3521 = vld [vmem:[%s1 + $0x4b0] sm:$0xff]
  %v3522 = vld [vmem:[%s1 + $0x4b8] sm:$0xff]
  %v3523 = vld [vmem:[%s1 + $0x4c0] sm:$0xff]
  %v3524 = vld [vmem:[%s1 + $0x4c8] sm:$0xff]
  %v3525 = vld [vmem:[%s1 + $0x4d0] sm:$0xff]
  %v3526 = vld [vmem:[%s1 + $0x4d8] sm:$0xff]
  %v3527 = vld [vmem:[%s1 + $0x4e0] sm:$0xff]
  %v3528 = vld [vmem:[%s1 + $0x4e8] sm:$0xff]
  %v3529 = vld [vmem:[%s1 + $0x4f0] sm:$0xff]
  %v3530 = vld [vmem:[%s1 + $0x4f8] sm:$0xff]
  %v3531 = vld [vmem:[%s1 + $0x500] sm:$0xff]
  %v3532 = vld [vmem:[%s1 + $0x508] sm:$0xff]
  %v3533 = vld [vmem:[%s1 + $0x510] sm:$0xff]
  %v3534 = vld [vmem:[%s1 + $0x518] sm:$0xff]
  %v3535 = vld [vmem:[%s1 + $0x520] sm:$0xff]
  %v3536 = vld [vmem:[%s1 + $0x528] sm:$0xff]
  %v3537 = vld [vmem:[%s1 + $0x530] sm:$0xff]
  %v3538 = vld [vmem:[%s1 + $0x538] sm:$0xff]
  %v3539 = vld [vmem:[%s1 + $0x540] sm:$0xff]
  %v3540 = vld [vmem:[%s1 + $0x548] sm:$0xff]
  %v3541 = vld [vmem:[%s1 + $0x550] sm:$0xff]
  %v3542 = vld [vmem:[%s1 + $0x558] sm:$0xff]
  %v3543 = vld [vmem:[%s1 + $0x560] sm:$0xff]
  %v3544 = vld [vmem:[%s1 + $0x568] sm:$0xff]
  %v3545 = vld [vmem:[%s1 + $0x570] sm:$0xff]
  %v3546 = vld [vmem:[%s1 + $0x578] sm:$0xff]
  %v3547 = vld [vmem:[%s1 + $0x580] sm:$0xff]
  %v3548 = vld [vmem:[%s1 + $0x588] sm:$0xff]
  %v3549 = vld [vmem:[%s1 + $0x590] sm:$0xff]
  %v3550 = vld [vmem:[%s1 + $0x598] sm:$0xff]
  %v3551 = vld [vmem:[%s1 + $0x5a0] sm:$0xff]
  %v3552 = vld [vmem:[%s1 + $0x5a8] sm:$0xff]
  %v3553 = vld [vmem:[%s1 + $0x5b0] sm:$0xff]
  %v3554 = vld [vmem:[%s1 + $0x5b8] sm:$0xff]
  %v3555 = vld [vmem:[%s1 + $0x5c0] sm:$0xff]
  %v3556 = vld [vmem:[%s1 + $0x5c8] sm:$0xff]
  %v3557 = vld [vmem:[%s1 + $0x5d0] sm:$0xff]
  %v3558 = vld [vmem:[%s1 + $0x5d8] sm:$0xff]
  %v3559 = vld [vmem:[%s1 + $0x5e0] sm:$0xff]
  %v3560 = vld [vmem:[%s1 + $0x5e8] sm:$0xff]
  %v3561 = vld [vmem:[%s1 + $0x5f0] sm:$0xff]
  %v3562 = vld [vmem:[%s1 + $0x5f8] sm:$0xff]
  %v3563 = vld [vmem:[%s1 + $0x600] sm:$0xff]
  %v3564 = vld [vmem:[%s1 + $0x608] sm:$0xff]
  %v3565 = vld [vmem:[%s1 + $0x610] sm:$0xff]
  %v3566 = vld [vmem:[%s1 + $0x618] sm:$0xff]
  %v3567 = vld [vmem:[%s1 + $0x620] sm:$0xff]
  %v3568 = vld [vmem:[%s1 + $0x628] sm:$0xff]
  %v3569 = vld [vmem:[%s1 + $0x630] sm:$0xff]
  %v3570 = vld [vmem:[%s1 + $0x638] sm:$0xff]
  %v3571 = vld [vmem:[%s1 + $0x640] sm:$0xff]
  %v3572 = vld [vmem:[%s1 + $0x648] sm:$0xff]
  %v3573 = vld [vmem:[%s1 + $0x650] sm:$0xff]
  %v3574 = vld [vmem:[%s1 + $0x658] sm:$0xff]
  %v3575 = vld [vmem:[%s1 + $0x660] sm:$0xff]
  %v3576 = vld [vmem:[%s1 + $0x668] sm:$0xff]
  %v3577 = vld [vmem:[%s1 + $0x670] sm:$0xff]
  %v3578 = vld [vmem:[%s1 + $0x678] sm:$0xff]
  %v3579 = vld [vmem:[%s1 + $0x680] sm:$0xff]
  %v3580 = vld [vmem:[%s1 + $0x688] sm:$0xff]
  %v3581 = vld [vmem:[%s1 + $0x690] sm:$0xff]
  %v3582 = vld [vmem:[%s1 + $0x698] sm:$0xff]
  %v3583 = vld [vmem:[%s1 + $0x6a0] sm:$0xff]
  %v3584 = vld [vmem:[%s1 + $0x6a8] sm:$0xff]
  %v3585 = vld [vmem:[%s1 + $0x6b0] sm:$0xff]
  %v3586 = vld [vmem:[%s1 + $0x6b8] sm:$0xff]
  %v3587 = vld [vmem:[%s1 + $0x6c0] sm:$0xff]
  %v3588 = vld [vmem:[%s1 + $0x6c8] sm:$0xff]
  %v3589 = vld [vmem:[%s1 + $0x6d0] sm:$0xff]
  %v3590 = vld [vmem:[%s1 + $0x6d8] sm:$0xff]
  %v3591 = vld [vmem:[%s1 + $0x6e0] sm:$0xff]
  %v3592 = vld [vmem:[%s1 + $0x6e8] sm:$0xff]
  %v3593 = vld [vmem:[%s1 + $0x6f0] sm:$0xff]
  %v3594 = vld [vmem:[%s1 + $0x6f8] sm:$0xff]
  %v3595 = vld [vmem:[%s1 + $0x700] sm:$0xff]
  %v3596 = vld [vmem:[%s1 + $0x708] sm:$0xff]
  %v3597 = vld [vmem:[%s1 + $0x710] sm:$0xff]
  %v3598 = vld [vmem:[%s1 + $0x718] sm:$0xff]
  %v3599 = vld [vmem:[%s1 + $0x720] sm:$0xff]
  %v3600 = vld [vmem:[%s1 + $0x728] sm:$0xff]
  %v3601 = vld [vmem:[%s1 + $0x730] sm:$0xff]
  %v3602 = vld [vmem:[%s1 + $0x738] sm:$0xff]
  %v3603 = vld [vmem:[%s1 + $0x740] sm:$0xff]
  %v3604 = vld [vmem:[%s1 + $0x748] sm:$0xff]
  %v3605 = vld [vmem:[%s1 + $0x750] sm:$0xff]
  %v3606 = vld [vmem:[%s1 + $0x758] sm:$0xff]
  %v3607 = vld [vmem:[%s1 + $0x760] sm:$0xff]
  %v3608 = vld [vmem:[%s1 + $0x768] sm:$0xff]
  %v3609 = vld [vmem:[%s1 + $0x770] sm:$0xff]
  %v3610 = vld [vmem:[%s1 + $0x778] sm:$0xff]
  %v3611 = vld [vmem:[%s1 + $0x780] sm:$0xff]
  %v3612 = vld [vmem:[%s1 + $0x788] sm:$0xff]
  %v3613 = vld [vmem:[%s1 + $0x790] sm:$0xff]
  %v3614 = vld [vmem:[%s1 + $0x798] sm:$0xff]
  %v3615 = vld [vmem:[%s1 + $0x7a0] sm:$0xff]
  %v3616 = vld [vmem:[%s1 + $0x7a8] sm:$0xff]
  %v3617 = vld [vmem:[%s1 + $0x7b0] sm:$0xff]
  %v3618 = vld [vmem:[%s1 + $0x7b8] sm:$0xff]
  %v3619 = vld [vmem:[%s1 + $0x7c0] sm:$0xff]
  %v3620 = vld [vmem:[%s1 + $0x7c8] sm:$0xff]
  %v3621 = vld [vmem:[%s1 + $0x7d0] sm:$0xff]
  %v3622 = vld [vmem:[%s1 + $0x7d8] sm:$0xff]
  %v3623 = vld [vmem:[%s1 + $0x7e0] sm:$0xff]
  %v3624 = vld [vmem:[%s1 + $0x7e8] sm:$0xff]
  %v3625 = vld [vmem:[%s1 + $0x7f0] sm:$0xff]
  %v3626 = vld [vmem:[%s1 + $0x7f8] sm:$0xff]
  %v3627 = vld [vmem:[%s1 + $0x800] sm:$0xff]
  %v3628 = vld [vmem:[%s1 + $0x808] sm:$0xff]
  %v3629 = vld [vmem:[%s1 + $0x810] sm:$0xff]
  %v3630 = vld [vmem:[%s1 + $0x818] sm:$0xff]
  %v3631 = vld [vmem:[%s1 + $0x820] sm:$0xff]
  %v3632 = vld [vmem:[%s1 + $0x828] sm:$0xff]
  %v3633 = vld [vmem:[%s1 + $0x830] sm:$0xff]
  %v3634 = vld [vmem:[%s1 + $0x838] sm:$0xff]
  %v3635 = vld [vmem:[%s1 + $0x840] sm:$0xff]
  %v3636 = vld [vmem:[%s1 + $0x848] sm:$0xff]
  %v3637 = vld [vmem:[%s1 + $0x850] sm:$0xff]
  %v3638 = vld [vmem:[%s1 + $0x858] sm:$0xff]
  %v3639 = vld [vmem:[%s1 + $0x860] sm:$0xff]
  %v3640 = vld [vmem:[%s1 + $0x868] sm:$0xff]
  %v3641 = vld [vmem:[%s1 + $0x870] sm:$0xff]
  %v3642 = vld [vmem:[%s1 + $0x878] sm:$0xff]
  %v3643 = vld [vmem:[%s1 + $0x880] sm:$0xff]
  %v3644 = vld [vmem:[%s1 + $0x888] sm:$0xff]
  %v3645 = vld [vmem:[%s1 + $0x890] sm:$0xff]
  %v3646 = vld [vmem:[%s1 + $0x898] sm:$0xff]
  %v3647 = vld [vmem:[%s1 + $0x8a0] sm:$0xff]
  %v3648 = vld [vmem:[%s1 + $0x8a8] sm:$0xff]
  %v3649 = vld [vmem:[%s1 + $0x8b0] sm:$0xff]
  %v3650 = vld [vmem:[%s1 + $0x8b8] sm:$0xff]
  %v3651 = vld [vmem:[%s1 + $0x8c0] sm:$0xff]
  %v3652 = vld [vmem:[%s1 + $0x8c8] sm:$0xff]
  %v3653 = vld [vmem:[%s1 + $0x8d0] sm:$0xff]
  %v3654 = vld [vmem:[%s1 + $0x8d8] sm:$0xff]
  %v3655 = vld [vmem:[%s1 + $0x8e0] sm:$0xff]
  %v3656 = vld [vmem:[%s1 + $0x8e8] sm:$0xff]
  %v3657 = vld [vmem:[%s1 + $0x8f0] sm:$0xff]
  %v3658 = vld [vmem:[%s1 + $0x8f8] sm:$0xff]
  %v3659 = vld [vmem:[%s1 + $0x900] sm:$0xff]
  %v3660 = vld [vmem:[%s1 + $0x908] sm:$0xff]
  %v3661 = vld [vmem:[%s1 + $0x910] sm:$0xff]
  %v3662 = vld [vmem:[%s1 + $0x918] sm:$0xff]
  %v3663 = vld [vmem:[%s1 + $0x920] sm:$0xff]
  %v3664 = vld [vmem:[%s1 + $0x928] sm:$0xff]
  %v3665 = vld [vmem:[%s1 + $0x930] sm:$0xff]
  %v3666 = vld [vmem:[%s1 + $0x938] sm:$0xff]
  %v3667 = vld [vmem:[%s1 + $0x940] sm:$0xff]
  %v3668 = vld [vmem:[%s1 + $0x948] sm:$0xff]
  %v3669 = vld [vmem:[%s1 + $0x950] sm:$0xff]
  %v3670 = vld [vmem:[%s1 + $0x958] sm:$0xff]
  %v3671 = vld [vmem:[%s1 + $0x960] sm:$0xff]
  %v3672 = vld [vmem:[%s1 + $0x968] sm:$0xff]
  %v3673 = vld [vmem:[%s1 + $0x970] sm:$0xff]
  %v3674 = vld [vmem:[%s1 + $0x978] sm:$0xff]
  %v3675 = vld [vmem:[%s1 + $0x980] sm:$0xff]
  %v3676 = vld [vmem:[%s1 + $0x988] sm:$0xff]
  %v3677 = vld [vmem:[%s1 + $0x990] sm:$0xff]
  %v3678 = vld [vmem:[%s1 + $0x998] sm:$0xff]
  %v3679 = vld [vmem:[%s1 + $0x9a0] sm:$0xff]
  %v3680 = vld [vmem:[%s1 + $0x9a8] sm:$0xff]
  %v3681 = vld [vmem:[%s1 + $0x9b0] sm:$0xff]
  %v3682 = vld [vmem:[%s1 + $0x9b8] sm:$0xff]
  %v3683 = vld [vmem:[%s1 + $0x9c0] sm:$0xff]
  %v3684 = vld [vmem:[%s1 + $0x9c8] sm:$0xff]
  %v3685 = vld [vmem:[%s1 + $0x9d0] sm:$0xff]
  %v3686 = vld [vmem:[%s1 + $0x9d8] sm:$0xff]
  %v3687 = vld [vmem:[%s1 + $0x9e0] sm:$0xff]
  %v3688 = vld [vmem:[%s1 + $0x9e8] sm:$0xff]
  %v3689 = vld [vmem:[%s1 + $0x9f0] sm:$0xff]
  %v3690 = vld [vmem:[%s1 + $0x9f8] sm:$0xff]
  %v3691 = vld [vmem:[%s1 + $0xa00] sm:$0xff]
  %v3692 = vld [vmem:[%s1 + $0xa08] sm:$0xff]
  %v3693 = vld [vmem:[%s1 + $0xa10] sm:$0xff]
  %v3694 = vld [vmem:[%s1 + $0xa18] sm:$0xff]
  %v3695 = vld [vmem:[%s1 + $0xa20] sm:$0xff]
  %v3696 = vld [vmem:[%s1 + $0xa28] sm:$0xff]
  %v3697 = vld [vmem:[%s1 + $0xa30] sm:$0xff]
  %v3698 = vld [vmem:[%s1 + $0xa38] sm:$0xff]
  %v3699 = vld [vmem:[%s1 + $0xa40] sm:$0xff]
  %v3700 = vld [vmem:[%s1 + $0xa48] sm:$0xff]
  %v3701 = vld [vmem:[%s1 + $0xa50] sm:$0xff]
  %v3702 = vld [vmem:[%s1 + $0xa58] sm:$0xff]
  %v3703 = vld [vmem:[%s1 + $0xa60] sm:$0xff]
  %v3704 = vld [vmem:[%s1 + $0xa68] sm:$0xff]
  %v3705 = vld [vmem:[%s1 + $0xa70] sm:$0xff]
  %v3706 = vld [vmem:[%s1 + $0xa78] sm:$0xff]
  %3708 = vset.pattern.permute.xlu0 0
  %3709 = vperm.xlu0 %3708, %v865
  %v3710 = vpop.permute.xlu0 %3709
  %3713 = vset.pattern.permute.xlu0 0
  %3714 = vperm.xlu0 %3713, %v880
  %v3715 = vpop.permute.xlu0 %3714
  %3718 = vset.pattern.permute.xlu0 0
  %3719 = vperm.xlu0 %3718, %v895
  %v3720 = vpop.permute.xlu0 %3719
  %3723 = vset.pattern.permute.xlu0 0
  %3724 = vperm.xlu0 %3723, %v910
  %v3725 = vpop.permute.xlu0 %3724
  %3728 = vset.pattern.permute.xlu0 0
  %3729 = vperm.xlu0 %3728, %v925
  %v3730 = vpop.permute.xlu0 %3729
  %3733 = vset.pattern.permute.xlu0 0
  %3734 = vperm.xlu0 %3733, %v940
  %v3735 = vpop.permute.xlu0 %3734
  %3738 = vset.pattern.permute.xlu0 0
  %3739 = vperm.xlu0 %3738, %v955
  %v3740 = vpop.permute.xlu0 %3739
  %3743 = vset.pattern.permute.xlu0 0
  %3744 = vperm.xlu0 %3743, %v970
  %v3745 = vpop.permute.xlu0 %3744
  %3748 = vset.pattern.permute.xlu0 0
  %3749 = vperm.xlu0 %3748, %v985
  %v3750 = vpop.permute.xlu0 %3749
  %3753 = vset.pattern.permute.xlu0 0
  %3754 = vperm.xlu0 %3753, %v1000
  %v3755 = vpop.permute.xlu0 %3754
  %3758 = vset.pattern.permute.xlu0 0
  %3759 = vperm.xlu0 %3758, %v1015
  %v3760 = vpop.permute.xlu0 %3759
  %3763 = vset.pattern.permute.xlu0 0
  %3764 = vperm.xlu0 %3763, %v1030
  %v3765 = vpop.permute.xlu0 %3764
  %3768 = vset.pattern.permute.xlu0 0
  %3769 = vperm.xlu0 %3768, %v1045
  %v3770 = vpop.permute.xlu0 %3769
  %3773 = vset.pattern.permute.xlu0 0
  %3774 = vperm.xlu0 %3773, %v1060
  %v3775 = vpop.permute.xlu0 %3774
  %3778 = vset.pattern.permute.xlu0 0
  %3779 = vperm.xlu0 %3778, %v1075
  %v3780 = vpop.permute.xlu0 %3779
  %3783 = vset.pattern.permute.xlu0 0
  %3784 = vperm.xlu0 %3783, %v1090
  %v3785 = vpop.permute.xlu0 %3784
  %3788 = vset.pattern.permute.xlu0 0
  %3789 = vperm.xlu0 %3788, %v1105
  %v3790 = vpop.permute.xlu0 %3789
  %3793 = vset.pattern.permute.xlu0 0
  %3794 = vperm.xlu0 %3793, %v1120
  %v3795 = vpop.permute.xlu0 %3794
  %3798 = vset.pattern.permute.xlu0 0
  %3799 = vperm.xlu0 %3798, %v1135
  %v3800 = vpop.permute.xlu0 %3799
  %3803 = vset.pattern.permute.xlu0 0
  %3804 = vperm.xlu0 %3803, %v1150
  %v3805 = vpop.permute.xlu0 %3804
  %3808 = vset.pattern.permute.xlu0 0
  %3809 = vperm.xlu0 %3808, %v1165
  %v3810 = vpop.permute.xlu0 %3809
  %3813 = vset.pattern.permute.xlu0 0
  %3814 = vperm.xlu0 %3813, %v1180
  %v3815 = vpop.permute.xlu0 %3814
  %3818 = vset.pattern.permute.xlu0 0
  %3819 = vperm.xlu0 %3818, %v1195
  %v3820 = vpop.permute.xlu0 %3819
  %3823 = vset.pattern.permute.xlu0 0
  %3824 = vperm.xlu0 %3823, %v1210
  %v3825 = vpop.permute.xlu0 %3824
  %3828 = vset.pattern.permute.xlu0 0
  %3829 = vperm.xlu0 %3828, %v1225
  %v3830 = vpop.permute.xlu0 %3829
  %3833 = vset.pattern.permute.xlu0 0
  %3834 = vperm.xlu0 %3833, %v1240
  %v3835 = vpop.permute.xlu0 %3834
  %3838 = vset.pattern.permute.xlu0 0
  %3839 = vperm.xlu0 %3838, %v1255
  %v3840 = vpop.permute.xlu0 %3839
  %3843 = vset.pattern.permute.xlu0 0
  %3844 = vperm.xlu0 %3843, %v1270
  %v3845 = vpop.permute.xlu0 %3844
  %3848 = vset.pattern.permute.xlu0 0
  %3849 = vperm.xlu0 %3848, %v1285
  %v3850 = vpop.permute.xlu0 %3849
  %3853 = vset.pattern.permute.xlu0 0
  %3854 = vperm.xlu0 %3853, %v1300
  %v3855 = vpop.permute.xlu0 %3854
  %3858 = vset.pattern.permute.xlu0 0
  %3859 = vperm.xlu0 %3858, %v1315
  %v3860 = vpop.permute.xlu0 %3859
  %3863 = vset.pattern.permute.xlu0 0
  %3864 = vperm.xlu0 %3863, %v1330
  %v3865 = vpop.permute.xlu0 %3864
  %3868 = vset.pattern.permute.xlu0 0
  %3869 = vperm.xlu0 %3868, %v1345
  %v3870 = vpop.permute.xlu0 %3869
  %3873 = vset.pattern.permute.xlu0 0
  %3874 = vperm.xlu0 %3873, %v1360
  %v3875 = vpop.permute.xlu0 %3874
  %3878 = vset.pattern.permute.xlu0 0
  %3879 = vperm.xlu0 %3878, %v1375
  %v3880 = vpop.permute.xlu0 %3879
  %3883 = vset.pattern.permute.xlu0 0
  %3884 = vperm.xlu0 %3883, %v1390
  %v3885 = vpop.permute.xlu0 %3884
  %3888 = vset.pattern.permute.xlu0 0
  %3889 = vperm.xlu0 %3888, %v1405
  %v3890 = vpop.permute.xlu0 %3889
  %3893 = vset.pattern.permute.xlu0 0
  %3894 = vperm.xlu0 %3893, %v1420
  %v3895 = vpop.permute.xlu0 %3894
  %3898 = vset.pattern.permute.xlu0 0
  %3899 = vperm.xlu0 %3898, %v1435
  %v3900 = vpop.permute.xlu0 %3899
  %3903 = vset.pattern.permute.xlu0 0
  %3904 = vperm.xlu0 %3903, %v1450
  %v3905 = vpop.permute.xlu0 %3904
  %3908 = vset.pattern.permute.xlu0 0
  %3909 = vperm.xlu0 %3908, %v1465
  %v3910 = vpop.permute.xlu0 %3909
  %3913 = vset.pattern.permute.xlu0 0
  %3914 = vperm.xlu0 %3913, %v1480
  %v3915 = vpop.permute.xlu0 %3914
  %3918 = vset.pattern.permute.xlu0 0
  %3919 = vperm.xlu0 %3918, %v1495
  %v3920 = vpop.permute.xlu0 %3919
  %3923 = vset.pattern.permute.xlu0 0
  %3924 = vperm.xlu0 %3923, %v1510
  %v3925 = vpop.permute.xlu0 %3924
  %3928 = vset.pattern.permute.xlu0 0
  %3929 = vperm.xlu0 %3928, %v1525
  %v3930 = vpop.permute.xlu0 %3929
  %3933 = vset.pattern.permute.xlu0 0
  %3934 = vperm.xlu0 %3933, %v1540
  %v3935 = vpop.permute.xlu0 %3934
  %3938 = vset.pattern.permute.xlu0 0
  %3939 = vperm.xlu0 %3938, %v1555
  %v3940 = vpop.permute.xlu0 %3939
  %3943 = vset.pattern.permute.xlu0 0
  %3944 = vperm.xlu0 %3943, %v1570
  %v3945 = vpop.permute.xlu0 %3944
  %3948 = vset.pattern.permute.xlu0 0
  %3949 = vperm.xlu0 %3948, %v1585
  %v3950 = vpop.permute.xlu0 %3949
  %3953 = vset.pattern.permute.xlu0 0
  %3954 = vperm.xlu0 %3953, %v1600
  %v3955 = vpop.permute.xlu0 %3954
  %3958 = vset.pattern.permute.xlu0 0
  %3959 = vperm.xlu0 %3958, %v1615
  %v3960 = vpop.permute.xlu0 %3959
  %3963 = vset.pattern.permute.xlu0 0
  %3964 = vperm.xlu0 %3963, %v1630
  %v3965 = vpop.permute.xlu0 %3964
  %3968 = vset.pattern.permute.xlu0 0
  %3969 = vperm.xlu0 %3968, %v1645
  %v3970 = vpop.permute.xlu0 %3969
  %3973 = vset.pattern.permute.xlu0 0
  %3974 = vperm.xlu0 %3973, %v1660
  %v3975 = vpop.permute.xlu0 %3974
  %3978 = vset.pattern.permute.xlu0 0
  %3979 = vperm.xlu0 %3978, %v1675
  %v3980 = vpop.permute.xlu0 %3979
  %3983 = vset.pattern.permute.xlu0 0
  %3984 = vperm.xlu0 %3983, %v1690
  %v3985 = vpop.permute.xlu0 %3984
  %3988 = vset.pattern.permute.xlu0 0
  %3989 = vperm.xlu0 %3988, %v1705
  %v3990 = vpop.permute.xlu0 %3989
  %3993 = vset.pattern.permute.xlu0 0
  %3994 = vperm.xlu0 %3993, %v1720
  %v3995 = vpop.permute.xlu0 %3994
  %3998 = vset.pattern.permute.xlu0 0
  %3999 = vperm.xlu0 %3998, %v1735
  %v4000 = vpop.permute.xlu0 %3999
  %4003 = vset.pattern.permute.xlu0 0
  %4004 = vperm.xlu0 %4003, %v1750
  %v4005 = vpop.permute.xlu0 %4004
  %4008 = vset.pattern.permute.xlu0 0
  %4009 = vperm.xlu0 %4008, %v1765
  %v4010 = vpop.permute.xlu0 %4009
  %4013 = vset.pattern.permute.xlu0 0
  %4014 = vperm.xlu0 %4013, %v1780
  %v4015 = vpop.permute.xlu0 %4014
  %4018 = vset.pattern.permute.xlu0 0
  %4019 = vperm.xlu0 %4018, %v1795
  %v4020 = vpop.permute.xlu0 %4019
  %4023 = vset.pattern.permute.xlu0 0
  %4024 = vperm.xlu0 %4023, %v1810
  %v4025 = vpop.permute.xlu0 %4024
  %4028 = vset.pattern.permute.xlu0 0
  %4029 = vperm.xlu0 %4028, %v1825
  %v4030 = vpop.permute.xlu0 %4029
  %4033 = vset.pattern.permute.xlu0 0
  %4034 = vperm.xlu0 %4033, %v1840
  %v4035 = vpop.permute.xlu0 %4034
  %4038 = vset.pattern.permute.xlu0 0
  %4039 = vperm.xlu0 %4038, %v1855
  %v4040 = vpop.permute.xlu0 %4039
  %4043 = vset.pattern.permute.xlu0 0
  %4044 = vperm.xlu0 %4043, %v1870
  %v4045 = vpop.permute.xlu0 %4044
  %4048 = vset.pattern.permute.xlu0 0
  %4049 = vperm.xlu0 %4048, %v1885
  %v4050 = vpop.permute.xlu0 %4049
  %4053 = vset.pattern.permute.xlu0 0
  %4054 = vperm.xlu0 %4053, %v1900
  %v4055 = vpop.permute.xlu0 %4054
  %4058 = vset.pattern.permute.xlu0 0
  %4059 = vperm.xlu0 %4058, %v1915
  %v4060 = vpop.permute.xlu0 %4059
  %4063 = vset.pattern.permute.xlu0 0
  %4064 = vperm.xlu0 %4063, %v1930
  %v4065 = vpop.permute.xlu0 %4064
  %4068 = vset.pattern.permute.xlu0 0
  %4069 = vperm.xlu0 %4068, %v1945
  %v4070 = vpop.permute.xlu0 %4069
  %4073 = vset.pattern.permute.xlu0 0
  %4074 = vperm.xlu0 %4073, %v1960
  %v4075 = vpop.permute.xlu0 %4074
  %4078 = vset.pattern.permute.xlu0 0
  %4079 = vperm.xlu0 %4078, %v1975
  %v4080 = vpop.permute.xlu0 %4079
  %4083 = vset.pattern.permute.xlu0 0
  %4084 = vperm.xlu0 %4083, %v1990
  %v4085 = vpop.permute.xlu0 %4084
  %4088 = vset.pattern.permute.xlu0 0
  %4089 = vperm.xlu0 %4088, %v2005
  %v4090 = vpop.permute.xlu0 %4089
  %4093 = vset.pattern.permute.xlu0 0
  %4094 = vperm.xlu0 %4093, %v2020
  %v4095 = vpop.permute.xlu0 %4094
  %4098 = vset.pattern.permute.xlu0 0
  %4099 = vperm.xlu0 %4098, %v2035
  %v4100 = vpop.permute.xlu0 %4099
  %4103 = vset.pattern.permute.xlu0 0
  %4104 = vperm.xlu0 %4103, %v2050
  %v4105 = vpop.permute.xlu0 %4104
  %4108 = vset.pattern.permute.xlu0 0
  %4109 = vperm.xlu0 %4108, %v2065
  %v4110 = vpop.permute.xlu0 %4109
  %4113 = vset.pattern.permute.xlu0 0
  %4114 = vperm.xlu0 %4113, %v2080
  %v4115 = vpop.permute.xlu0 %4114
  %4118 = vset.pattern.permute.xlu0 0
  %4119 = vperm.xlu0 %4118, %v2095
  %v4120 = vpop.permute.xlu0 %4119
  %4123 = vset.pattern.permute.xlu0 0
  %4124 = vperm.xlu0 %4123, %v2110
  %v4125 = vpop.permute.xlu0 %4124
  %4128 = vset.pattern.permute.xlu0 0
  %4129 = vperm.xlu0 %4128, %v2125
  %v4130 = vpop.permute.xlu0 %4129
  %4133 = vset.pattern.permute.xlu0 0
  %4134 = vperm.xlu0 %4133, %v2140
  %v4135 = vpop.permute.xlu0 %4134
  %4138 = vset.pattern.permute.xlu0 0
  %4139 = vperm.xlu0 %4138, %v2155
  %v4140 = vpop.permute.xlu0 %4139
  %4143 = vset.pattern.permute.xlu0 0
  %4144 = vperm.xlu0 %4143, %v2170
  %v4145 = vpop.permute.xlu0 %4144
  %4148 = vset.pattern.permute.xlu0 0
  %4149 = vperm.xlu0 %4148, %v2185
  %v4150 = vpop.permute.xlu0 %4149
  %4153 = vset.pattern.permute.xlu0 0
  %4154 = vperm.xlu0 %4153, %v2200
  %v4155 = vpop.permute.xlu0 %4154
  %4158 = vset.pattern.permute.xlu0 0
  %4159 = vperm.xlu0 %4158, %v2215
  %v4160 = vpop.permute.xlu0 %4159
  %4163 = vset.pattern.permute.xlu0 0
  %4164 = vperm.xlu0 %4163, %v2230
  %v4165 = vpop.permute.xlu0 %4164
  %4168 = vset.pattern.permute.xlu0 0
  %4169 = vperm.xlu0 %4168, %v2245
  %v4170 = vpop.permute.xlu0 %4169
  %4173 = vset.pattern.permute.xlu0 0
  %4174 = vperm.xlu0 %4173, %v2260
  %v4175 = vpop.permute.xlu0 %4174
  %4178 = vset.pattern.permute.xlu0 0
  %4179 = vperm.xlu0 %4178, %v2275
  %v4180 = vpop.permute.xlu0 %4179
  %4183 = vset.pattern.permute.xlu0 0
  %4184 = vperm.xlu0 %4183, %v2290
  %v4185 = vpop.permute.xlu0 %4184
  %4188 = vset.pattern.permute.xlu0 0
  %4189 = vperm.xlu0 %4188, %v2305
  %v4190 = vpop.permute.xlu0 %4189
  %4193 = vset.pattern.permute.xlu0 0
  %4194 = vperm.xlu0 %4193, %v2320
  %v4195 = vpop.permute.xlu0 %4194
  %4198 = vset.pattern.permute.xlu0 0
  %4199 = vperm.xlu0 %4198, %v2335
  %v4200 = vpop.permute.xlu0 %4199
  %4203 = vset.pattern.permute.xlu0 0
  %4204 = vperm.xlu0 %4203, %v2350
  %v4205 = vpop.permute.xlu0 %4204
  %4208 = vset.pattern.permute.xlu0 0
  %4209 = vperm.xlu0 %4208, %v2365
  %v4210 = vpop.permute.xlu0 %4209
  %4213 = vset.pattern.permute.xlu0 0
  %4214 = vperm.xlu0 %4213, %v2380
  %v4215 = vpop.permute.xlu0 %4214
  %4218 = vset.pattern.permute.xlu0 0
  %4219 = vperm.xlu0 %4218, %v2395
  %v4220 = vpop.permute.xlu0 %4219
  %4223 = vset.pattern.permute.xlu0 0
  %4224 = vperm.xlu0 %4223, %v2410
  %v4225 = vpop.permute.xlu0 %4224
  %4228 = vset.pattern.permute.xlu0 0
  %4229 = vperm.xlu0 %4228, %v2425
  %v4230 = vpop.permute.xlu0 %4229
  %4233 = vset.pattern.permute.xlu0 0
  %4234 = vperm.xlu0 %4233, %v2440
  %v4235 = vpop.permute.xlu0 %4234
  %4238 = vset.pattern.permute.xlu0 0
  %4239 = vperm.xlu0 %4238, %v2455
  %v4240 = vpop.permute.xlu0 %4239
  %4243 = vset.pattern.permute.xlu0 0
  %4244 = vperm.xlu0 %4243, %v2470
  %v4245 = vpop.permute.xlu0 %4244
  %4248 = vset.pattern.permute.xlu0 0
  %4249 = vperm.xlu0 %4248, %v2485
  %v4250 = vpop.permute.xlu0 %4249
  %4253 = vset.pattern.permute.xlu0 0
  %4254 = vperm.xlu0 %4253, %v2500
  %v4255 = vpop.permute.xlu0 %4254
  %4258 = vset.pattern.permute.xlu0 0
  %4259 = vperm.xlu0 %4258, %v2515
  %v4260 = vpop.permute.xlu0 %4259
  %4263 = vset.pattern.permute.xlu0 0
  %4264 = vperm.xlu0 %4263, %v2530
  %v4265 = vpop.permute.xlu0 %4264
  %4268 = vset.pattern.permute.xlu0 0
  %4269 = vperm.xlu0 %4268, %v2545
  %v4270 = vpop.permute.xlu0 %4269
  %4273 = vset.pattern.permute.xlu0 0
  %4274 = vperm.xlu0 %4273, %v2560
  %v4275 = vpop.permute.xlu0 %4274
  %4278 = vset.pattern.permute.xlu0 0
  %4279 = vperm.xlu0 %4278, %v2575
  %v4280 = vpop.permute.xlu0 %4279
  %4283 = vset.pattern.permute.xlu0 0
  %4284 = vperm.xlu0 %4283, %v2590
  %v4285 = vpop.permute.xlu0 %4284
  %4288 = vset.pattern.permute.xlu0 0
  %4289 = vperm.xlu0 %4288, %v2605
  %v4290 = vpop.permute.xlu0 %4289
  %4293 = vset.pattern.permute.xlu0 0
  %4294 = vperm.xlu0 %4293, %v2620
  %v4295 = vpop.permute.xlu0 %4294
  %4298 = vset.pattern.permute.xlu0 0
  %4299 = vperm.xlu0 %4298, %v2635
  %v4300 = vpop.permute.xlu0 %4299
  %4303 = vset.pattern.permute.xlu0 0
  %4304 = vperm.xlu0 %4303, %v2650
  %v4305 = vpop.permute.xlu0 %4304
  %4308 = vset.pattern.permute.xlu0 0
  %4309 = vperm.xlu0 %4308, %v2665
  %v4310 = vpop.permute.xlu0 %4309
  %4313 = vset.pattern.permute.xlu0 0
  %4314 = vperm.xlu0 %4313, %v2680
  %v4315 = vpop.permute.xlu0 %4314
  %4318 = vset.pattern.permute.xlu0 0
  %4319 = vperm.xlu0 %4318, %v2695
  %v4320 = vpop.permute.xlu0 %4319
  %4323 = vset.pattern.permute.xlu0 0
  %4324 = vperm.xlu0 %4323, %v2710
  %v4325 = vpop.permute.xlu0 %4324
  %4328 = vset.pattern.permute.xlu0 0
  %4329 = vperm.xlu0 %4328, %v2725
  %v4330 = vpop.permute.xlu0 %4329
  %4333 = vset.pattern.permute.xlu0 0
  %4334 = vperm.xlu0 %4333, %v2740
  %v4335 = vpop.permute.xlu0 %4334
  %4338 = vset.pattern.permute.xlu0 0
  %4339 = vperm.xlu0 %4338, %v2755
  %v4340 = vpop.permute.xlu0 %4339
  %4343 = vset.pattern.permute.xlu0 0
  %4344 = vperm.xlu0 %4343, %v2770
  %v4345 = vpop.permute.xlu0 %4344
  %4348 = vset.pattern.permute.xlu0 0
  %4349 = vperm.xlu0 %4348, %v2785
  %v4350 = vpop.permute.xlu0 %4349
  %4353 = vset.pattern.permute.xlu0 0
  %4354 = vperm.xlu0 %4353, %v2800
  %v4355 = vpop.permute.xlu0 %4354
  %4358 = vset.pattern.permute.xlu0 0
  %4359 = vperm.xlu0 %4358, %v2815
  %v4360 = vpop.permute.xlu0 %4359
  %4363 = vset.pattern.permute.xlu0 0
  %4364 = vperm.xlu0 %4363, %v2830
  %v4365 = vpop.permute.xlu0 %4364
  %4368 = vset.pattern.permute.xlu0 0
  %4369 = vperm.xlu0 %4368, %v2845
  %v4370 = vpop.permute.xlu0 %4369
  %4373 = vset.pattern.permute.xlu0 0
  %4374 = vperm.xlu0 %4373, %v2860
  %v4375 = vpop.permute.xlu0 %4374
  %4378 = vset.pattern.permute.xlu0 0
  %4379 = vperm.xlu0 %4378, %v2875
  %v4380 = vpop.permute.xlu0 %4379
  %4383 = vset.pattern.permute.xlu0 0
  %4384 = vperm.xlu0 %4383, %v2890
  %v4385 = vpop.permute.xlu0 %4384
  %4388 = vset.pattern.permute.xlu0 0
  %4389 = vperm.xlu0 %4388, %v2905
  %v4390 = vpop.permute.xlu0 %4389
  %4393 = vset.pattern.permute.xlu0 0
  %4394 = vperm.xlu0 %4393, %v2920
  %v4395 = vpop.permute.xlu0 %4394
  %4398 = vset.pattern.permute.xlu0 0
  %4399 = vperm.xlu0 %4398, %v2935
  %v4400 = vpop.permute.xlu0 %4399
  %4403 = vset.pattern.permute.xlu0 0
  %4404 = vperm.xlu0 %4403, %v2950
  %v4405 = vpop.permute.xlu0 %4404
  %4408 = vset.pattern.permute.xlu0 0
  %4409 = vperm.xlu0 %4408, %v2965
  %v4410 = vpop.permute.xlu0 %4409
  %4413 = vset.pattern.permute.xlu0 0
  %4414 = vperm.xlu0 %4413, %v2980
  %v4415 = vpop.permute.xlu0 %4414
  %4418 = vset.pattern.permute.xlu0 0
  %4419 = vperm.xlu0 %4418, %v2995
  %v4420 = vpop.permute.xlu0 %4419
  %4423 = vset.pattern.permute.xlu0 0
  %4424 = vperm.xlu0 %4423, %v3010
  %v4425 = vpop.permute.xlu0 %4424
  %4428 = vset.pattern.permute.xlu0 0
  %4429 = vperm.xlu0 %4428, %v3025
  %v4430 = vpop.permute.xlu0 %4429
  %4433 = vset.pattern.permute.xlu0 0
  %4434 = vperm.xlu0 %4433, %v3040
  %v4435 = vpop.permute.xlu0 %4434
  %4438 = vset.pattern.permute.xlu0 0
  %4439 = vperm.xlu0 %4438, %v3055
  %v4440 = vpop.permute.xlu0 %4439
  %4443 = vset.pattern.permute.xlu0 0
  %4444 = vperm.xlu0 %4443, %v3070
  %v4445 = vpop.permute.xlu0 %4444
  %4448 = vset.pattern.permute.xlu0 0
  %4449 = vperm.xlu0 %4448, %v3085
  %v4450 = vpop.permute.xlu0 %4449
  %4453 = vset.pattern.permute.xlu0 0
  %4454 = vperm.xlu0 %4453, %v3100
  %v4455 = vpop.permute.xlu0 %4454
  %4458 = vset.pattern.permute.xlu0 0
  %4459 = vperm.xlu0 %4458, %v3115
  %v4460 = vpop.permute.xlu0 %4459
  %4463 = vset.pattern.permute.xlu0 0
  %4464 = vperm.xlu0 %4463, %v3130
  %v4465 = vpop.permute.xlu0 %4464
  %4468 = vset.pattern.permute.xlu0 0
  %4469 = vperm.xlu0 %4468, %v3145
  %v4470 = vpop.permute.xlu0 %4469
  %4473 = vset.pattern.permute.xlu0 0
  %4474 = vperm.xlu0 %4473, %v3160
  %v4475 = vpop.permute.xlu0 %4474
  %4478 = vset.pattern.permute.xlu0 0
  %4479 = vperm.xlu0 %4478, %v3175
  %v4480 = vpop.permute.xlu0 %4479
  %4483 = vset.pattern.permute.xlu0 0
  %4484 = vperm.xlu0 %4483, %v3190
  %v4485 = vpop.permute.xlu0 %4484
  %4488 = vset.pattern.permute.xlu0 0
  %4489 = vperm.xlu0 %4488, %v3205
  %v4490 = vpop.permute.xlu0 %4489
  %4493 = vset.pattern.permute.xlu0 0
  %4494 = vperm.xlu0 %4493, %v3220
  %v4495 = vpop.permute.xlu0 %4494
  %4498 = vset.pattern.permute.xlu0 0
  %4499 = vperm.xlu0 %4498, %v3235
  %v4500 = vpop.permute.xlu0 %4499
  %4503 = vset.pattern.permute.xlu0 0
  %4504 = vperm.xlu0 %4503, %v3250
  %v4505 = vpop.permute.xlu0 %4504
  %4508 = vset.pattern.permute.xlu0 0
  %4509 = vperm.xlu0 %4508, %v3265
  %v4510 = vpop.permute.xlu0 %4509
  %4513 = vset.pattern.permute.xlu0 0
  %4514 = vperm.xlu0 %4513, %v3280
  %v4515 = vpop.permute.xlu0 %4514
  %4518 = vset.pattern.permute.xlu0 0
  %4519 = vperm.xlu0 %4518, %v3295
  %v4520 = vpop.permute.xlu0 %4519
  %4523 = vset.pattern.permute.xlu0 0
  %4524 = vperm.xlu0 %4523, %v3310
  %v4525 = vpop.permute.xlu0 %4524
  %4528 = vset.pattern.permute.xlu0 0
  %4529 = vperm.xlu0 %4528, %v3325
  %v4530 = vpop.permute.xlu0 %4529
  %4533 = vset.pattern.permute.xlu0 0
  %4534 = vperm.xlu0 %4533, %v3340
  %v4535 = vpop.permute.xlu0 %4534
  %4538 = vset.pattern.permute.xlu0 0
  %4539 = vperm.xlu0 %4538, %v3355
  %v4540 = vpop.permute.xlu0 %4539
  %4543 = vset.pattern.permute.xlu0 0
  %4544 = vperm.xlu0 %4543, %v3370
  %v4545 = vpop.permute.xlu0 %4544
  %v4547 = vmul.f32 %v3710, %v3371
  %v4548 = vmul.f32 %v3710, %v3372
  %v4549 = vmul.f32 %v3715, %v3373
  %v4550 = vmul.f32 %v3715, %v3374
  %v4551 = vmul.f32 %v3720, %v3375
  %v4552 = vmul.f32 %v3720, %v3376
  %v4553 = vmul.f32 %v3725, %v3377
  %v4554 = vmul.f32 %v3725, %v3378
  %v4555 = vmul.f32 %v3730, %v3379
  %v4556 = vmul.f32 %v3730, %v3380
  %v4557 = vmul.f32 %v3735, %v3381
  %v4558 = vmul.f32 %v3735, %v3382
  %v4559 = vmul.f32 %v3740, %v3383
  %v4560 = vmul.f32 %v3740, %v3384
  %v4561 = vmul.f32 %v3745, %v3385
  %v4562 = vmul.f32 %v3745, %v3386
  %v4563 = vmul.f32 %v3750, %v3387
  %v4564 = vmul.f32 %v3750, %v3388
  %v4565 = vmul.f32 %v3755, %v3389
  %v4566 = vmul.f32 %v3755, %v3390
  %v4567 = vmul.f32 %v3760, %v3391
  %v4568 = vmul.f32 %v3760, %v3392
  %v4569 = vmul.f32 %v3765, %v3393
  %v4570 = vmul.f32 %v3765, %v3394
  %v4571 = vmul.f32 %v3770, %v3395
  %v4572 = vmul.f32 %v3770, %v3396
  %v4573 = vmul.f32 %v3775, %v3397
  %v4574 = vmul.f32 %v3775, %v3398
  %v4575 = vmul.f32 %v3780, %v3399
  %v4576 = vmul.f32 %v3780, %v3400
  %v4577 = vmul.f32 %v3785, %v3401
  %v4578 = vmul.f32 %v3785, %v3402
  %v4579 = vmul.f32 %v3790, %v3403
  %v4580 = vmul.f32 %v3790, %v3404
  %v4581 = vmul.f32 %v3795, %v3405
  %v4582 = vmul.f32 %v3795, %v3406
  %v4583 = vmul.f32 %v3800, %v3407
  %v4584 = vmul.f32 %v3800, %v3408
  %v4585 = vmul.f32 %v3805, %v3409
  %v4586 = vmul.f32 %v3805, %v3410
  %v4587 = vmul.f32 %v3810, %v3411
  %v4588 = vmul.f32 %v3810, %v3412
  %v4589 = vmul.f32 %v3815, %v3413
  %v4590 = vmul.f32 %v3815, %v3414
  %v4591 = vmul.f32 %v3820, %v3415
  %v4592 = vmul.f32 %v3820, %v3416
  %v4593 = vmul.f32 %v3825, %v3417
  %v4594 = vmul.f32 %v3825, %v3418
  %v4595 = vmul.f32 %v3830, %v3419
  %v4596 = vmul.f32 %v3830, %v3420
  %v4597 = vmul.f32 %v3835, %v3421
  %v4598 = vmul.f32 %v3835, %v3422
  %v4599 = vmul.f32 %v3840, %v3423
  %v4600 = vmul.f32 %v3840, %v3424
  %v4601 = vmul.f32 %v3845, %v3425
  %v4602 = vmul.f32 %v3845, %v3426
  %v4603 = vmul.f32 %v3850, %v3427
  %v4604 = vmul.f32 %v3850, %v3428
  %v4605 = vmul.f32 %v3855, %v3429
  %v4606 = vmul.f32 %v3855, %v3430
  %v4607 = vmul.f32 %v3860, %v3431
  %v4608 = vmul.f32 %v3860, %v3432
  %v4609 = vmul.f32 %v3865, %v3433
  %v4610 = vmul.f32 %v3865, %v3434
  %v4611 = vmul.f32 %v3870, %v3435
  %v4612 = vmul.f32 %v3870, %v3436
  %v4613 = vmul.f32 %v3875, %v3437
  %v4614 = vmul.f32 %v3875, %v3438
  %v4615 = vmul.f32 %v3880, %v3439
  %v4616 = vmul.f32 %v3880, %v3440
  %v4617 = vmul.f32 %v3885, %v3441
  %v4618 = vmul.f32 %v3885, %v3442
  %v4619 = vmul.f32 %v3890, %v3443
  %v4620 = vmul.f32 %v3890, %v3444
  %v4621 = vmul.f32 %v3895, %v3445
  %v4622 = vmul.f32 %v3895, %v3446
  %v4623 = vmul.f32 %v3900, %v3447
  %v4624 = vmul.f32 %v3900, %v3448
  %v4625 = vmul.f32 %v3905, %v3449
  %v4626 = vmul.f32 %v3905, %v3450
  %v4627 = vmul.f32 %v3910, %v3451
  %v4628 = vmul.f32 %v3910, %v3452
  %v4629 = vmul.f32 %v3915, %v3453
  %v4630 = vmul.f32 %v3915, %v3454
  %v4631 = vmul.f32 %v3920, %v3455
  %v4632 = vmul.f32 %v3920, %v3456
  %v4633 = vmul.f32 %v3925, %v3457
  %v4634 = vmul.f32 %v3925, %v3458
  %v4635 = vmul.f32 %v3930, %v3459
  %v4636 = vmul.f32 %v3930, %v3460
  %v4637 = vmul.f32 %v3935, %v3461
  %v4638 = vmul.f32 %v3935, %v3462
  %v4639 = vmul.f32 %v3940, %v3463
  %v4640 = vmul.f32 %v3940, %v3464
  %v4641 = vmul.f32 %v3945, %v3465
  %v4642 = vmul.f32 %v3945, %v3466
  %v4643 = vmul.f32 %v3950, %v3467
  %v4644 = vmul.f32 %v3950, %v3468
  %v4645 = vmul.f32 %v3955, %v3469
  %v4646 = vmul.f32 %v3955, %v3470
  %v4647 = vmul.f32 %v3960, %v3471
  %v4648 = vmul.f32 %v3960, %v3472
  %v4649 = vmul.f32 %v3965, %v3473
  %v4650 = vmul.f32 %v3965, %v3474
  %v4651 = vmul.f32 %v3970, %v3475
  %v4652 = vmul.f32 %v3970, %v3476
  %v4653 = vmul.f32 %v3975, %v3477
  %v4654 = vmul.f32 %v3975, %v3478
  %v4655 = vmul.f32 %v3980, %v3479
  %v4656 = vmul.f32 %v3980, %v3480
  %v4657 = vmul.f32 %v3985, %v3481
  %v4658 = vmul.f32 %v3985, %v3482
  %v4659 = vmul.f32 %v3990, %v3483
  %v4660 = vmul.f32 %v3990, %v3484
  %v4661 = vmul.f32 %v3995, %v3485
  %v4662 = vmul.f32 %v3995, %v3486
  %v4663 = vmul.f32 %v4000, %v3487
  %v4664 = vmul.f32 %v4000, %v3488
  %v4665 = vmul.f32 %v4005, %v3489
  %v4666 = vmul.f32 %v4005, %v3490
  %v4667 = vmul.f32 %v4010, %v3491
  %v4668 = vmul.f32 %v4010, %v3492
  %v4669 = vmul.f32 %v4015, %v3493
  %v4670 = vmul.f32 %v4015, %v3494
  %v4671 = vmul.f32 %v4020, %v3495
  %v4672 = vmul.f32 %v4020, %v3496
  %v4673 = vmul.f32 %v4025, %v3497
  %v4674 = vmul.f32 %v4025, %v3498
  %v4675 = vmul.f32 %v4030, %v3499
  %v4676 = vmul.f32 %v4030, %v3500
  %v4677 = vmul.f32 %v4035, %v3501
  %v4678 = vmul.f32 %v4035, %v3502
  %v4679 = vmul.f32 %v4040, %v3503
  %v4680 = vmul.f32 %v4040, %v3504
  %v4681 = vmul.f32 %v4045, %v3505
  %v4682 = vmul.f32 %v4045, %v3506
  %v4683 = vmul.f32 %v4050, %v3507
  %v4684 = vmul.f32 %v4050, %v3508
  %v4685 = vmul.f32 %v4055, %v3509
  %v4686 = vmul.f32 %v4055, %v3510
  %v4687 = vmul.f32 %v4060, %v3511
  %v4688 = vmul.f32 %v4060, %v3512
  %v4689 = vmul.f32 %v4065, %v3513
  %v4690 = vmul.f32 %v4065, %v3514
  %v4691 = vmul.f32 %v4070, %v3515
  %v4692 = vmul.f32 %v4070, %v3516
  %v4693 = vmul.f32 %v4075, %v3517
  %v4694 = vmul.f32 %v4075, %v3518
  %v4695 = vmul.f32 %v4080, %v3519
  %v4696 = vmul.f32 %v4080, %v3520
  %v4697 = vmul.f32 %v4085, %v3521
  %v4698 = vmul.f32 %v4085, %v3522
  %v4699 = vmul.f32 %v4090, %v3523
  %v4700 = vmul.f32 %v4090, %v3524
  %v4701 = vmul.f32 %v4095, %v3525
  %v4702 = vmul.f32 %v4095, %v3526
  %v4703 = vmul.f32 %v4100, %v3527
  %v4704 = vmul.f32 %v4100, %v3528
  %v4705 = vmul.f32 %v4105, %v3529
  %v4706 = vmul.f32 %v4105, %v3530
  %v4707 = vmul.f32 %v4110, %v3531
  %v4708 = vmul.f32 %v4110, %v3532
  %v4709 = vmul.f32 %v4115, %v3533
  %v4710 = vmul.f32 %v4115, %v3534
  %v4711 = vmul.f32 %v4120, %v3535
  %v4712 = vmul.f32 %v4120, %v3536
  %v4713 = vmul.f32 %v4125, %v3537
  %v4714 = vmul.f32 %v4125, %v3538
  %v4715 = vmul.f32 %v4130, %v3539
  %v4716 = vmul.f32 %v4130, %v3540
  %v4717 = vmul.f32 %v4135, %v3541
  %v4718 = vmul.f32 %v4135, %v3542
  %v4719 = vmul.f32 %v4140, %v3543
  %v4720 = vmul.f32 %v4140, %v3544
  %v4721 = vmul.f32 %v4145, %v3545
  %v4722 = vmul.f32 %v4145, %v3546
  %v4723 = vmul.f32 %v4150, %v3547
  %v4724 = vmul.f32 %v4150, %v3548
  %v4725 = vmul.f32 %v4155, %v3549
  %v4726 = vmul.f32 %v4155, %v3550
  %v4727 = vmul.f32 %v4160, %v3551
  %v4728 = vmul.f32 %v4160, %v3552
  %v4729 = vmul.f32 %v4165, %v3553
  %v4730 = vmul.f32 %v4165, %v3554
  %v4731 = vmul.f32 %v4170, %v3555
  %v4732 = vmul.f32 %v4170, %v3556
  %v4733 = vmul.f32 %v4175, %v3557
  %v4734 = vmul.f32 %v4175, %v3558
  %v4735 = vmul.f32 %v4180, %v3559
  %v4736 = vmul.f32 %v4180, %v3560
  %v4737 = vmul.f32 %v4185, %v3561
  %v4738 = vmul.f32 %v4185, %v3562
  %v4739 = vmul.f32 %v4190, %v3563
  %v4740 = vmul.f32 %v4190, %v3564
  %v4741 = vmul.f32 %v4195, %v3565
  %v4742 = vmul.f32 %v4195, %v3566
  %v4743 = vmul.f32 %v4200, %v3567
  %v4744 = vmul.f32 %v4200, %v3568
  %v4745 = vmul.f32 %v4205, %v3569
  %v4746 = vmul.f32 %v4205, %v3570
  %v4747 = vmul.f32 %v4210, %v3571
  %v4748 = vmul.f32 %v4210, %v3572
  %v4749 = vmul.f32 %v4215, %v3573
  %v4750 = vmul.f32 %v4215, %v3574
  %v4751 = vmul.f32 %v4220, %v3575
  %v4752 = vmul.f32 %v4220, %v3576
  %v4753 = vmul.f32 %v4225, %v3577
  %v4754 = vmul.f32 %v4225, %v3578
  %v4755 = vmul.f32 %v4230, %v3579
  %v4756 = vmul.f32 %v4230, %v3580
  %v4757 = vmul.f32 %v4235, %v3581
  %v4758 = vmul.f32 %v4235, %v3582
  %v4759 = vmul.f32 %v4240, %v3583
  %v4760 = vmul.f32 %v4240, %v3584
  %v4761 = vmul.f32 %v4245, %v3585
  %v4762 = vmul.f32 %v4245, %v3586
  %v4763 = vmul.f32 %v4250, %v3587
  %v4764 = vmul.f32 %v4250, %v3588
  %v4765 = vmul.f32 %v4255, %v3589
  %v4766 = vmul.f32 %v4255, %v3590
  %v4767 = vmul.f32 %v4260, %v3591
  %v4768 = vmul.f32 %v4260, %v3592
  %v4769 = vmul.f32 %v4265, %v3593
  %v4770 = vmul.f32 %v4265, %v3594
  %v4771 = vmul.f32 %v4270, %v3595
  %v4772 = vmul.f32 %v4270, %v3596
  %v4773 = vmul.f32 %v4275, %v3597
  %v4774 = vmul.f32 %v4275, %v3598
  %v4775 = vmul.f32 %v4280, %v3599
  %v4776 = vmul.f32 %v4280, %v3600
  %v4777 = vmul.f32 %v4285, %v3601
  %v4778 = vmul.f32 %v4285, %v3602
  %v4779 = vmul.f32 %v4290, %v3603
  %v4780 = vmul.f32 %v4290, %v3604
  %v4781 = vmul.f32 %v4295, %v3605
  %v4782 = vmul.f32 %v4295, %v3606
  %v4783 = vmul.f32 %v4300, %v3607
  %v4784 = vmul.f32 %v4300, %v3608
  %v4785 = vmul.f32 %v4305, %v3609
  %v4786 = vmul.f32 %v4305, %v3610
  %v4787 = vmul.f32 %v4310, %v3611
  %v4788 = vmul.f32 %v4310, %v3612
  %v4789 = vmul.f32 %v4315, %v3613
  %v4790 = vmul.f32 %v4315, %v3614
  %v4791 = vmul.f32 %v4320, %v3615
  %v4792 = vmul.f32 %v4320, %v3616
  %v4793 = vmul.f32 %v4325, %v3617
  %v4794 = vmul.f32 %v4325, %v3618
  %v4795 = vmul.f32 %v4330, %v3619
  %v4796 = vmul.f32 %v4330, %v3620
  %v4797 = vmul.f32 %v4335, %v3621
  %v4798 = vmul.f32 %v4335, %v3622
  %v4799 = vmul.f32 %v4340, %v3623
  %v4800 = vmul.f32 %v4340, %v3624
  %v4801 = vmul.f32 %v4345, %v3625
  %v4802 = vmul.f32 %v4345, %v3626
  %v4803 = vmul.f32 %v4350, %v3627
  %v4804 = vmul.f32 %v4350, %v3628
  %v4805 = vmul.f32 %v4355, %v3629
  %v4806 = vmul.f32 %v4355, %v3630
  %v4807 = vmul.f32 %v4360, %v3631
  %v4808 = vmul.f32 %v4360, %v3632
  %v4809 = vmul.f32 %v4365, %v3633
  %v4810 = vmul.f32 %v4365, %v3634
  %v4811 = vmul.f32 %v4370, %v3635
  %v4812 = vmul.f32 %v4370, %v3636
  %v4813 = vmul.f32 %v4375, %v3637
  %v4814 = vmul.f32 %v4375, %v3638
  %v4815 = vmul.f32 %v4380, %v3639
  %v4816 = vmul.f32 %v4380, %v3640
  %v4817 = vmul.f32 %v4385, %v3641
  %v4818 = vmul.f32 %v4385, %v3642
  %v4819 = vmul.f32 %v4390, %v3643
  %v4820 = vmul.f32 %v4390, %v3644
  %v4821 = vmul.f32 %v4395, %v3645
  %v4822 = vmul.f32 %v4395, %v3646
  %v4823 = vmul.f32 %v4400, %v3647
  %v4824 = vmul.f32 %v4400, %v3648
  %v4825 = vmul.f32 %v4405, %v3649
  %v4826 = vmul.f32 %v4405, %v3650
  %v4827 = vmul.f32 %v4410, %v3651
  %v4828 = vmul.f32 %v4410, %v3652
  %v4829 = vmul.f32 %v4415, %v3653
  %v4830 = vmul.f32 %v4415, %v3654
  %v4831 = vmul.f32 %v4420, %v3655
  %v4832 = vmul.f32 %v4420, %v3656
  %v4833 = vmul.f32 %v4425, %v3657
  %v4834 = vmul.f32 %v4425, %v3658
  %v4835 = vmul.f32 %v4430, %v3659
  %v4836 = vmul.f32 %v4430, %v3660
  %v4837 = vmul.f32 %v4435, %v3661
  %v4838 = vmul.f32 %v4435, %v3662
  %v4839 = vmul.f32 %v4440, %v3663
  %v4840 = vmul.f32 %v4440, %v3664
  %v4841 = vmul.f32 %v4445, %v3665
  %v4842 = vmul.f32 %v4445, %v3666
  %v4843 = vmul.f32 %v4450, %v3667
  %v4844 = vmul.f32 %v4450, %v3668
  %v4845 = vmul.f32 %v4455, %v3669
  %v4846 = vmul.f32 %v4455, %v3670
  %v4847 = vmul.f32 %v4460, %v3671
  %v4848 = vmul.f32 %v4460, %v3672
  %v4849 = vmul.f32 %v4465, %v3673
  %v4850 = vmul.f32 %v4465, %v3674
  %v4851 = vmul.f32 %v4470, %v3675
  %v4852 = vmul.f32 %v4470, %v3676
  %v4853 = vmul.f32 %v4475, %v3677
  %v4854 = vmul.f32 %v4475, %v3678
  %v4855 = vmul.f32 %v4480, %v3679
  %v4856 = vmul.f32 %v4480, %v3680
  %v4857 = vmul.f32 %v4485, %v3681
  %v4858 = vmul.f32 %v4485, %v3682
  %v4859 = vmul.f32 %v4490, %v3683
  %v4860 = vmul.f32 %v4490, %v3684
  %v4861 = vmul.f32 %v4495, %v3685
  %v4862 = vmul.f32 %v4495, %v3686
  %v4863 = vmul.f32 %v4500, %v3687
  %v4864 = vmul.f32 %v4500, %v3688
  %v4865 = vmul.f32 %v4505, %v3689
  %v4866 = vmul.f32 %v4505, %v3690
  %v4867 = vmul.f32 %v4510, %v3691
  %v4868 = vmul.f32 %v4510, %v3692
  %v4869 = vmul.f32 %v4515, %v3693
  %v4870 = vmul.f32 %v4515, %v3694
  %v4871 = vmul.f32 %v4520, %v3695
  %v4872 = vmul.f32 %v4520, %v3696
  %v4873 = vmul.f32 %v4525, %v3697
  %v4874 = vmul.f32 %v4525, %v3698
  %v4875 = vmul.f32 %v4530, %v3699
  %v4876 = vmul.f32 %v4530, %v3700
  %v4877 = vmul.f32 %v4535, %v3701
  %v4878 = vmul.f32 %v4535, %v3702
  %v4879 = vmul.f32 %v4540, %v3703
  %v4880 = vmul.f32 %v4540, %v3704
  %v4881 = vmul.f32 %v4545, %v3705
  %v4882 = vmul.f32 %v4545, %v3706
  %4883 = vst [vmem:[%s2] sm:$0xff] %v4547
  %vm4884 = vcmask 556032
  %4885 = vst.msk [vmem:[%s2 + $0x8] sm:$0xff] %vm4884, %v4548
  %4886 = vst [vmem:[%s2 + $0x10] sm:$0xff] %v4549
  %4887 = vst.msk [vmem:[%s2 + $0x18] sm:$0xff] %vm4884, %v4550
  %4888 = vst [vmem:[%s2 + $0x20] sm:$0xff] %v4551
  %4889 = vst.msk [vmem:[%s2 + $0x28] sm:$0xff] %vm4884, %v4552
  %4890 = vst [vmem:[%s2 + $0x30] sm:$0xff] %v4553
  %4891 = vst.msk [vmem:[%s2 + $0x38] sm:$0xff] %vm4884, %v4554
  %4892 = vst [vmem:[%s2 + $0x40] sm:$0xff] %v4555
  %4893 = vst.msk [vmem:[%s2 + $0x48] sm:$0xff] %vm4884, %v4556
  %4894 = vst [vmem:[%s2 + $0x50] sm:$0xff] %v4557
  %4895 = vst.msk [vmem:[%s2 + $0x58] sm:$0xff] %vm4884, %v4558
  %4896 = vst [vmem:[%s2 + $0x60] sm:$0xff] %v4559
  %4897 = vst.msk [vmem:[%s2 + $0x68] sm:$0xff] %vm4884, %v4560
  %4898 = vst [vmem:[%s2 + $0x70] sm:$0xff] %v4561
  %4899 = vst.msk [vmem:[%s2 + $0x78] sm:$0xff] %vm4884, %v4562
  %4900 = vst [vmem:[%s2 + $0x80] sm:$0xff] %v4563
  %4901 = vst.msk [vmem:[%s2 + $0x88] sm:$0xff] %vm4884, %v4564
  %4902 = vst [vmem:[%s2 + $0x90] sm:$0xff] %v4565
  %4903 = vst.msk [vmem:[%s2 + $0x98] sm:$0xff] %vm4884, %v4566
  %4904 = vst [vmem:[%s2 + $0xa0] sm:$0xff] %v4567
  %4905 = vst.msk [vmem:[%s2 + $0xa8] sm:$0xff] %vm4884, %v4568
  %4906 = vst [vmem:[%s2 + $0xb0] sm:$0xff] %v4569
  %4907 = vst.msk [vmem:[%s2 + $0xb8] sm:$0xff] %vm4884, %v4570
  %4908 = vst [vmem:[%s2 + $0xc0] sm:$0xff] %v4571
  %4909 = vst.msk [vmem:[%s2 + $0xc8] sm:$0xff] %vm4884, %v4572
  %4910 = vst [vmem:[%s2 + $0xd0] sm:$0xff] %v4573
  %4911 = vst.msk [vmem:[%s2 + $0xd8] sm:$0xff] %vm4884, %v4574
  %4912 = vst [vmem:[%s2 + $0xe0] sm:$0xff] %v4575
  %4913 = vst.msk [vmem:[%s2 + $0xe8] sm:$0xff] %vm4884, %v4576
  %4914 = vst [vmem:[%s2 + $0xf0] sm:$0xff] %v4577
  %4915 = vst.msk [vmem:[%s2 + $0xf8] sm:$0xff] %vm4884, %v4578
  %4916 = vst [vmem:[%s2 + $0x100] sm:$0xff] %v4579
  %4917 = vst.msk [vmem:[%s2 + $0x108] sm:$0xff] %vm4884, %v4580
  %4918 = vst [vmem:[%s2 + $0x110] sm:$0xff] %v4581
  %4919 = vst.msk [vmem:[%s2 + $0x118] sm:$0xff] %vm4884, %v4582
  %4920 = vst [vmem:[%s2 + $0x120] sm:$0xff] %v4583
  %4921 = vst.msk [vmem:[%s2 + $0x128] sm:$0xff] %vm4884, %v4584
  %4922 = vst [vmem:[%s2 + $0x130] sm:$0xff] %v4585
  %4923 = vst.msk [vmem:[%s2 + $0x138] sm:$0xff] %vm4884, %v4586
  %4924 = vst [vmem:[%s2 + $0x140] sm:$0xff] %v4587
  %4925 = vst.msk [vmem:[%s2 + $0x148] sm:$0xff] %vm4884, %v4588
  %4926 = vst [vmem:[%s2 + $0x150] sm:$0xff] %v4589
  %4927 = vst.msk [vmem:[%s2 + $0x158] sm:$0xff] %vm4884, %v4590
  %4928 = vst [vmem:[%s2 + $0x160] sm:$0xff] %v4591
  %4929 = vst.msk [vmem:[%s2 + $0x168] sm:$0xff] %vm4884, %v4592
  %4930 = vst [vmem:[%s2 + $0x170] sm:$0xff] %v4593
  %4931 = vst.msk [vmem:[%s2 + $0x178] sm:$0xff] %vm4884, %v4594
  %4932 = vst [vmem:[%s2 + $0x180] sm:$0xff] %v4595
  %4933 = vst.msk [vmem:[%s2 + $0x188] sm:$0xff] %vm4884, %v4596
  %4934 = vst [vmem:[%s2 + $0x190] sm:$0xff] %v4597
  %4935 = vst.msk [vmem:[%s2 + $0x198] sm:$0xff] %vm4884, %v4598
  %4936 = vst [vmem:[%s2 + $0x1a0] sm:$0xff] %v4599
  %4937 = vst.msk [vmem:[%s2 + $0x1a8] sm:$0xff] %vm4884, %v4600
  %4938 = vst [vmem:[%s2 + $0x1b0] sm:$0xff] %v4601
  %4939 = vst.msk [vmem:[%s2 + $0x1b8] sm:$0xff] %vm4884, %v4602
  %4940 = vst [vmem:[%s2 + $0x1c0] sm:$0xff] %v4603
  %4941 = vst.msk [vmem:[%s2 + $0x1c8] sm:$0xff] %vm4884, %v4604
  %4942 = vst [vmem:[%s2 + $0x1d0] sm:$0xff] %v4605
  %4943 = vst.msk [vmem:[%s2 + $0x1d8] sm:$0xff] %vm4884, %v4606
  %4944 = vst [vmem:[%s2 + $0x1e0] sm:$0xff] %v4607
  %4945 = vst.msk [vmem:[%s2 + $0x1e8] sm:$0xff] %vm4884, %v4608
  %4946 = vst [vmem:[%s2 + $0x1f0] sm:$0xff] %v4609
  %4947 = vst.msk [vmem:[%s2 + $0x1f8] sm:$0xff] %vm4884, %v4610
  %4948 = vst [vmem:[%s2 + $0x200] sm:$0xff] %v4611
  %4949 = vst.msk [vmem:[%s2 + $0x208] sm:$0xff] %vm4884, %v4612
  %4950 = vst [vmem:[%s2 + $0x210] sm:$0xff] %v4613
  %4951 = vst.msk [vmem:[%s2 + $0x218] sm:$0xff] %vm4884, %v4614
  %4952 = vst [vmem:[%s2 + $0x220] sm:$0xff] %v4615
  %4953 = vst.msk [vmem:[%s2 + $0x228] sm:$0xff] %vm4884, %v4616
  %4954 = vst [vmem:[%s2 + $0x230] sm:$0xff] %v4617
  %4955 = vst.msk [vmem:[%s2 + $0x238] sm:$0xff] %vm4884, %v4618
  %4956 = vst [vmem:[%s2 + $0x240] sm:$0xff] %v4619
  %4957 = vst.msk [vmem:[%s2 + $0x248] sm:$0xff] %vm4884, %v4620
  %4958 = vst [vmem:[%s2 + $0x250] sm:$0xff] %v4621
  %4959 = vst.msk [vmem:[%s2 + $0x258] sm:$0xff] %vm4884, %v4622
  %4960 = vst [vmem:[%s2 + $0x260] sm:$0xff] %v4623
  %4961 = vst.msk [vmem:[%s2 + $0x268] sm:$0xff] %vm4884, %v4624
  %4962 = vst [vmem:[%s2 + $0x270] sm:$0xff] %v4625
  %4963 = vst.msk [vmem:[%s2 + $0x278] sm:$0xff] %vm4884, %v4626
  %4964 = vst [vmem:[%s2 + $0x280] sm:$0xff] %v4627
  %4965 = vst.msk [vmem:[%s2 + $0x288] sm:$0xff] %vm4884, %v4628
  %4966 = vst [vmem:[%s2 + $0x290] sm:$0xff] %v4629
  %4967 = vst.msk [vmem:[%s2 + $0x298] sm:$0xff] %vm4884, %v4630
  %4968 = vst [vmem:[%s2 + $0x2a0] sm:$0xff] %v4631
  %4969 = vst.msk [vmem:[%s2 + $0x2a8] sm:$0xff] %vm4884, %v4632
  %4970 = vst [vmem:[%s2 + $0x2b0] sm:$0xff] %v4633
  %4971 = vst.msk [vmem:[%s2 + $0x2b8] sm:$0xff] %vm4884, %v4634
  %4972 = vst [vmem:[%s2 + $0x2c0] sm:$0xff] %v4635
  %4973 = vst.msk [vmem:[%s2 + $0x2c8] sm:$0xff] %vm4884, %v4636
  %4974 = vst [vmem:[%s2 + $0x2d0] sm:$0xff] %v4637
  %4975 = vst.msk [vmem:[%s2 + $0x2d8] sm:$0xff] %vm4884, %v4638
  %4976 = vst [vmem:[%s2 + $0x2e0] sm:$0xff] %v4639
  %4977 = vst.msk [vmem:[%s2 + $0x2e8] sm:$0xff] %vm4884, %v4640
  %4978 = vst [vmem:[%s2 + $0x2f0] sm:$0xff] %v4641
  %4979 = vst.msk [vmem:[%s2 + $0x2f8] sm:$0xff] %vm4884, %v4642
  %4980 = vst [vmem:[%s2 + $0x300] sm:$0xff] %v4643
  %4981 = vst.msk [vmem:[%s2 + $0x308] sm:$0xff] %vm4884, %v4644
  %4982 = vst [vmem:[%s2 + $0x310] sm:$0xff] %v4645
  %4983 = vst.msk [vmem:[%s2 + $0x318] sm:$0xff] %vm4884, %v4646
  %4984 = vst [vmem:[%s2 + $0x320] sm:$0xff] %v4647
  %4985 = vst.msk [vmem:[%s2 + $0x328] sm:$0xff] %vm4884, %v4648
  %4986 = vst [vmem:[%s2 + $0x330] sm:$0xff] %v4649
  %4987 = vst.msk [vmem:[%s2 + $0x338] sm:$0xff] %vm4884, %v4650
  %4988 = vst [vmem:[%s2 + $0x340] sm:$0xff] %v4651
  %4989 = vst.msk [vmem:[%s2 + $0x348] sm:$0xff] %vm4884, %v4652
  %4990 = vst [vmem:[%s2 + $0x350] sm:$0xff] %v4653
  %4991 = vst.msk [vmem:[%s2 + $0x358] sm:$0xff] %vm4884, %v4654
  %4992 = vst [vmem:[%s2 + $0x360] sm:$0xff] %v4655
  %4993 = vst.msk [vmem:[%s2 + $0x368] sm:$0xff] %vm4884, %v4656
  %4994 = vst [vmem:[%s2 + $0x370] sm:$0xff] %v4657
  %4995 = vst.msk [vmem:[%s2 + $0x378] sm:$0xff] %vm4884, %v4658
  %4996 = vst [vmem:[%s2 + $0x380] sm:$0xff] %v4659
  %4997 = vst.msk [vmem:[%s2 + $0x388] sm:$0xff] %vm4884, %v4660
  %4998 = vst [vmem:[%s2 + $0x390] sm:$0xff] %v4661
  %4999 = vst.msk [vmem:[%s2 + $0x398] sm:$0xff] %vm4884, %v4662
  %5000 = vst [vmem:[%s2 + $0x3a0] sm:$0xff] %v4663
  %5001 = vst.msk [vmem:[%s2 + $0x3a8] sm:$0xff] %vm4884, %v4664
  %5002 = vst [vmem:[%s2 + $0x3b0] sm:$0xff] %v4665
  %5003 = vst.msk [vmem:[%s2 + $0x3b8] sm:$0xff] %vm4884, %v4666
  %5004 = vst [vmem:[%s2 + $0x3c0] sm:$0xff] %v4667
  %5005 = vst.msk [vmem:[%s2 + $0x3c8] sm:$0xff] %vm4884, %v4668
  %5006 = vst [vmem:[%s2 + $0x3d0] sm:$0xff] %v4669
  %5007 = vst.msk [vmem:[%s2 + $0x3d8] sm:$0xff] %vm4884, %v4670
  %5008 = vst [vmem:[%s2 + $0x3e0] sm:$0xff] %v4671
  %5009 = vst.msk [vmem:[%s2 + $0x3e8] sm:$0xff] %vm4884, %v4672
  %5010 = vst [vmem:[%s2 + $0x3f0] sm:$0xff] %v4673
  %5011 = vst.msk [vmem:[%s2 + $0x3f8] sm:$0xff] %vm4884, %v4674
  %5012 = vst [vmem:[%s2 + $0x400] sm:$0xff] %v4675
  %5013 = vst.msk [vmem:[%s2 + $0x408] sm:$0xff] %vm4884, %v4676
  %5014 = vst [vmem:[%s2 + $0x410] sm:$0xff] %v4677
  %5015 = vst.msk [vmem:[%s2 + $0x418] sm:$0xff] %vm4884, %v4678
  %5016 = vst [vmem:[%s2 + $0x420] sm:$0xff] %v4679
  %5017 = vst.msk [vmem:[%s2 + $0x428] sm:$0xff] %vm4884, %v4680
  %5018 = vst [vmem:[%s2 + $0x430] sm:$0xff] %v4681
  %5019 = vst.msk [vmem:[%s2 + $0x438] sm:$0xff] %vm4884, %v4682
  %5020 = vst [vmem:[%s2 + $0x440] sm:$0xff] %v4683
  %5021 = vst.msk [vmem:[%s2 + $0x448] sm:$0xff] %vm4884, %v4684
  %5022 = vst [vmem:[%s2 + $0x450] sm:$0xff] %v4685
  %5023 = vst.msk [vmem:[%s2 + $0x458] sm:$0xff] %vm4884, %v4686
  %5024 = vst [vmem:[%s2 + $0x460] sm:$0xff] %v4687
  %5025 = vst.msk [vmem:[%s2 + $0x468] sm:$0xff] %vm4884, %v4688
  %5026 = vst [vmem:[%s2 + $0x470] sm:$0xff] %v4689
  %5027 = vst.msk [vmem:[%s2 + $0x478] sm:$0xff] %vm4884, %v4690
  %5028 = vst [vmem:[%s2 + $0x480] sm:$0xff] %v4691
  %5029 = vst.msk [vmem:[%s2 + $0x488] sm:$0xff] %vm4884, %v4692
  %5030 = vst [vmem:[%s2 + $0x490] sm:$0xff] %v4693
  %5031 = vst.msk [vmem:[%s2 + $0x498] sm:$0xff] %vm4884, %v4694
  %5032 = vst [vmem:[%s2 + $0x4a0] sm:$0xff] %v4695
  %5033 = vst.msk [vmem:[%s2 + $0x4a8] sm:$0xff] %vm4884, %v4696
  %5034 = vst [vmem:[%s2 + $0x4b0] sm:$0xff] %v4697
  %5035 = vst.msk [vmem:[%s2 + $0x4b8] sm:$0xff] %vm4884, %v4698
  %5036 = vst [vmem:[%s2 + $0x4c0] sm:$0xff] %v4699
  %5037 = vst.msk [vmem:[%s2 + $0x4c8] sm:$0xff] %vm4884, %v4700
  %5038 = vst [vmem:[%s2 + $0x4d0] sm:$0xff] %v4701
  %5039 = vst.msk [vmem:[%s2 + $0x4d8] sm:$0xff] %vm4884, %v4702
  %5040 = vst [vmem:[%s2 + $0x4e0] sm:$0xff] %v4703
  %5041 = vst.msk [vmem:[%s2 + $0x4e8] sm:$0xff] %vm4884, %v4704
  %5042 = vst [vmem:[%s2 + $0x4f0] sm:$0xff] %v4705
  %5043 = vst.msk [vmem:[%s2 + $0x4f8] sm:$0xff] %vm4884, %v4706
  %5044 = vst [vmem:[%s2 + $0x500] sm:$0xff] %v4707
  %5045 = vst.msk [vmem:[%s2 + $0x508] sm:$0xff] %vm4884, %v4708
  %5046 = vst [vmem:[%s2 + $0x510] sm:$0xff] %v4709
  %5047 = vst.msk [vmem:[%s2 + $0x518] sm:$0xff] %vm4884, %v4710
  %5048 = vst [vmem:[%s2 + $0x520] sm:$0xff] %v4711
  %5049 = vst.msk [vmem:[%s2 + $0x528] sm:$0xff] %vm4884, %v4712
  %5050 = vst [vmem:[%s2 + $0x530] sm:$0xff] %v4713
  %5051 = vst.msk [vmem:[%s2 + $0x538] sm:$0xff] %vm4884, %v4714
  %5052 = vst [vmem:[%s2 + $0x540] sm:$0xff] %v4715
  %5053 = vst.msk [vmem:[%s2 + $0x548] sm:$0xff] %vm4884, %v4716
  %5054 = vst [vmem:[%s2 + $0x550] sm:$0xff] %v4717
  %5055 = vst.msk [vmem:[%s2 + $0x558] sm:$0xff] %vm4884, %v4718
  %5056 = vst [vmem:[%s2 + $0x560] sm:$0xff] %v4719
  %5057 = vst.msk [vmem:[%s2 + $0x568] sm:$0xff] %vm4884, %v4720
  %5058 = vst [vmem:[%s2 + $0x570] sm:$0xff] %v4721
  %5059 = vst.msk [vmem:[%s2 + $0x578] sm:$0xff] %vm4884, %v4722
  %5060 = vst [vmem:[%s2 + $0x580] sm:$0xff] %v4723
  %5061 = vst.msk [vmem:[%s2 + $0x588] sm:$0xff] %vm4884, %v4724
  %5062 = vst [vmem:[%s2 + $0x590] sm:$0xff] %v4725
  %5063 = vst.msk [vmem:[%s2 + $0x598] sm:$0xff] %vm4884, %v4726
  %5064 = vst [vmem:[%s2 + $0x5a0] sm:$0xff] %v4727
  %5065 = vst.msk [vmem:[%s2 + $0x5a8] sm:$0xff] %vm4884, %v4728
  %5066 = vst [vmem:[%s2 + $0x5b0] sm:$0xff] %v4729
  %5067 = vst.msk [vmem:[%s2 + $0x5b8] sm:$0xff] %vm4884, %v4730
  %5068 = vst [vmem:[%s2 + $0x5c0] sm:$0xff] %v4731
  %5069 = vst.msk [vmem:[%s2 + $0x5c8] sm:$0xff] %vm4884, %v4732
  %5070 = vst [vmem:[%s2 + $0x5d0] sm:$0xff] %v4733
  %5071 = vst.msk [vmem:[%s2 + $0x5d8] sm:$0xff] %vm4884, %v4734
  %5072 = vst [vmem:[%s2 + $0x5e0] sm:$0xff] %v4735
  %5073 = vst.msk [vmem:[%s2 + $0x5e8] sm:$0xff] %vm4884, %v4736
  %5074 = vst [vmem:[%s2 + $0x5f0] sm:$0xff] %v4737
  %5075 = vst.msk [vmem:[%s2 + $0x5f8] sm:$0xff] %vm4884, %v4738
  %5076 = vst [vmem:[%s2 + $0x600] sm:$0xff] %v4739
  %5077 = vst.msk [vmem:[%s2 + $0x608] sm:$0xff] %vm4884, %v4740
  %5078 = vst [vmem:[%s2 + $0x610] sm:$0xff] %v4741
  %5079 = vst.msk [vmem:[%s2 + $0x618] sm:$0xff] %vm4884, %v4742
  %5080 = vst [vmem:[%s2 + $0x620] sm:$0xff] %v4743
  %5081 = vst.msk [vmem:[%s2 + $0x628] sm:$0xff] %vm4884, %v4744
  %5082 = vst [vmem:[%s2 + $0x630] sm:$0xff] %v4745
  %5083 = vst.msk [vmem:[%s2 + $0x638] sm:$0xff] %vm4884, %v4746
  %5084 = vst [vmem:[%s2 + $0x640] sm:$0xff] %v4747
  %5085 = vst.msk [vmem:[%s2 + $0x648] sm:$0xff] %vm4884, %v4748
  %5086 = vst [vmem:[%s2 + $0x650] sm:$0xff] %v4749
  %5087 = vst.msk [vmem:[%s2 + $0x658] sm:$0xff] %vm4884, %v4750
  %5088 = vst [vmem:[%s2 + $0x660] sm:$0xff] %v4751
  %5089 = vst.msk [vmem:[%s2 + $0x668] sm:$0xff] %vm4884, %v4752
  %5090 = vst [vmem:[%s2 + $0x670] sm:$0xff] %v4753
  %5091 = vst.msk [vmem:[%s2 + $0x678] sm:$0xff] %vm4884, %v4754
  %5092 = vst [vmem:[%s2 + $0x680] sm:$0xff] %v4755
  %5093 = vst.msk [vmem:[%s2 + $0x688] sm:$0xff] %vm4884, %v4756
  %5094 = vst [vmem:[%s2 + $0x690] sm:$0xff] %v4757
  %5095 = vst.msk [vmem:[%s2 + $0x698] sm:$0xff] %vm4884, %v4758
  %5096 = vst [vmem:[%s2 + $0x6a0] sm:$0xff] %v4759
  %5097 = vst.msk [vmem:[%s2 + $0x6a8] sm:$0xff] %vm4884, %v4760
  %5098 = vst [vmem:[%s2 + $0x6b0] sm:$0xff] %v4761
  %5099 = vst.msk [vmem:[%s2 + $0x6b8] sm:$0xff] %vm4884, %v4762
  %5100 = vst [vmem:[%s2 + $0x6c0] sm:$0xff] %v4763
  %5101 = vst.msk [vmem:[%s2 + $0x6c8] sm:$0xff] %vm4884, %v4764
  %5102 = vst [vmem:[%s2 + $0x6d0] sm:$0xff] %v4765
  %5103 = vst.msk [vmem:[%s2 + $0x6d8] sm:$0xff] %vm4884, %v4766
  %5104 = vst [vmem:[%s2 + $0x6e0] sm:$0xff] %v4767
  %5105 = vst.msk [vmem:[%s2 + $0x6e8] sm:$0xff] %vm4884, %v4768
  %5106 = vst [vmem:[%s2 + $0x6f0] sm:$0xff] %v4769
  %5107 = vst.msk [vmem:[%s2 + $0x6f8] sm:$0xff] %vm4884, %v4770
  %5108 = vst [vmem:[%s2 + $0x700] sm:$0xff] %v4771
  %5109 = vst.msk [vmem:[%s2 + $0x708] sm:$0xff] %vm4884, %v4772
  %5110 = vst [vmem:[%s2 + $0x710] sm:$0xff] %v4773
  %5111 = vst.msk [vmem:[%s2 + $0x718] sm:$0xff] %vm4884, %v4774
  %5112 = vst [vmem:[%s2 + $0x720] sm:$0xff] %v4775
  %5113 = vst.msk [vmem:[%s2 + $0x728] sm:$0xff] %vm4884, %v4776
  %5114 = vst [vmem:[%s2 + $0x730] sm:$0xff] %v4777
  %5115 = vst.msk [vmem:[%s2 + $0x738] sm:$0xff] %vm4884, %v4778
  %5116 = vst [vmem:[%s2 + $0x740] sm:$0xff] %v4779
  %5117 = vst.msk [vmem:[%s2 + $0x748] sm:$0xff] %vm4884, %v4780
  %5118 = vst [vmem:[%s2 + $0x750] sm:$0xff] %v4781
  %5119 = vst.msk [vmem:[%s2 + $0x758] sm:$0xff] %vm4884, %v4782
  %5120 = vst [vmem:[%s2 + $0x760] sm:$0xff] %v4783
  %5121 = vst.msk [vmem:[%s2 + $0x768] sm:$0xff] %vm4884, %v4784
  %5122 = vst [vmem:[%s2 + $0x770] sm:$0xff] %v4785
  %5123 = vst.msk [vmem:[%s2 + $0x778] sm:$0xff] %vm4884, %v4786
  %5124 = vst [vmem:[%s2 + $0x780] sm:$0xff] %v4787
  %5125 = vst.msk [vmem:[%s2 + $0x788] sm:$0xff] %vm4884, %v4788
  %5126 = vst [vmem:[%s2 + $0x790] sm:$0xff] %v4789
  %5127 = vst.msk [vmem:[%s2 + $0x798] sm:$0xff] %vm4884, %v4790
  %5128 = vst [vmem:[%s2 + $0x7a0] sm:$0xff] %v4791
  %5129 = vst.msk [vmem:[%s2 + $0x7a8] sm:$0xff] %vm4884, %v4792
  %5130 = vst [vmem:[%s2 + $0x7b0] sm:$0xff] %v4793
  %5131 = vst.msk [vmem:[%s2 + $0x7b8] sm:$0xff] %vm4884, %v4794
  %5132 = vst [vmem:[%s2 + $0x7c0] sm:$0xff] %v4795
  %5133 = vst.msk [vmem:[%s2 + $0x7c8] sm:$0xff] %vm4884, %v4796
  %5134 = vst [vmem:[%s2 + $0x7d0] sm:$0xff] %v4797
  %5135 = vst.msk [vmem:[%s2 + $0x7d8] sm:$0xff] %vm4884, %v4798
  %5136 = vst [vmem:[%s2 + $0x7e0] sm:$0xff] %v4799
  %5137 = vst.msk [vmem:[%s2 + $0x7e8] sm:$0xff] %vm4884, %v4800
  %5138 = vst [vmem:[%s2 + $0x7f0] sm:$0xff] %v4801
  %5139 = vst.msk [vmem:[%s2 + $0x7f8] sm:$0xff] %vm4884, %v4802
  %5140 = vst [vmem:[%s2 + $0x800] sm:$0xff] %v4803
  %5141 = vst.msk [vmem:[%s2 + $0x808] sm:$0xff] %vm4884, %v4804
  %5142 = vst [vmem:[%s2 + $0x810] sm:$0xff] %v4805
  %5143 = vst.msk [vmem:[%s2 + $0x818] sm:$0xff] %vm4884, %v4806
  %5144 = vst [vmem:[%s2 + $0x820] sm:$0xff] %v4807
  %5145 = vst.msk [vmem:[%s2 + $0x828] sm:$0xff] %vm4884, %v4808
  %5146 = vst [vmem:[%s2 + $0x830] sm:$0xff] %v4809
  %5147 = vst.msk [vmem:[%s2 + $0x838] sm:$0xff] %vm4884, %v4810
  %5148 = vst [vmem:[%s2 + $0x840] sm:$0xff] %v4811
  %5149 = vst.msk [vmem:[%s2 + $0x848] sm:$0xff] %vm4884, %v4812
  %5150 = vst [vmem:[%s2 + $0x850] sm:$0xff] %v4813
  %5151 = vst.msk [vmem:[%s2 + $0x858] sm:$0xff] %vm4884, %v4814
  %5152 = vst [vmem:[%s2 + $0x860] sm:$0xff] %v4815
  %5153 = vst.msk [vmem:[%s2 + $0x868] sm:$0xff] %vm4884, %v4816
  %5154 = vst [vmem:[%s2 + $0x870] sm:$0xff] %v4817
  %5155 = vst.msk [vmem:[%s2 + $0x878] sm:$0xff] %vm4884, %v4818
  %5156 = vst [vmem:[%s2 + $0x880] sm:$0xff] %v4819
  %5157 = vst.msk [vmem:[%s2 + $0x888] sm:$0xff] %vm4884, %v4820
  %5158 = vst [vmem:[%s2 + $0x890] sm:$0xff] %v4821
  %5159 = vst.msk [vmem:[%s2 + $0x898] sm:$0xff] %vm4884, %v4822
  %5160 = vst [vmem:[%s2 + $0x8a0] sm:$0xff] %v4823
  %5161 = vst.msk [vmem:[%s2 + $0x8a8] sm:$0xff] %vm4884, %v4824
  %5162 = vst [vmem:[%s2 + $0x8b0] sm:$0xff] %v4825
  %5163 = vst.msk [vmem:[%s2 + $0x8b8] sm:$0xff] %vm4884, %v4826
  %5164 = vst [vmem:[%s2 + $0x8c0] sm:$0xff] %v4827
  %5165 = vst.msk [vmem:[%s2 + $0x8c8] sm:$0xff] %vm4884, %v4828
  %5166 = vst [vmem:[%s2 + $0x8d0] sm:$0xff] %v4829
  %5167 = vst.msk [vmem:[%s2 + $0x8d8] sm:$0xff] %vm4884, %v4830
  %5168 = vst [vmem:[%s2 + $0x8e0] sm:$0xff] %v4831
  %5169 = vst.msk [vmem:[%s2 + $0x8e8] sm:$0xff] %vm4884, %v4832
  %5170 = vst [vmem:[%s2 + $0x8f0] sm:$0xff] %v4833
  %5171 = vst.msk [vmem:[%s2 + $0x8f8] sm:$0xff] %vm4884, %v4834
  %5172 = vst [vmem:[%s2 + $0x900] sm:$0xff] %v4835
  %5173 = vst.msk [vmem:[%s2 + $0x908] sm:$0xff] %vm4884, %v4836
  %5174 = vst [vmem:[%s2 + $0x910] sm:$0xff] %v4837
  %5175 = vst.msk [vmem:[%s2 + $0x918] sm:$0xff] %vm4884, %v4838
  %5176 = vst [vmem:[%s2 + $0x920] sm:$0xff] %v4839
  %5177 = vst.msk [vmem:[%s2 + $0x928] sm:$0xff] %vm4884, %v4840
  %5178 = vst [vmem:[%s2 + $0x930] sm:$0xff] %v4841
  %5179 = vst.msk [vmem:[%s2 + $0x938] sm:$0xff] %vm4884, %v4842
  %5180 = vst [vmem:[%s2 + $0x940] sm:$0xff] %v4843
  %5181 = vst.msk [vmem:[%s2 + $0x948] sm:$0xff] %vm4884, %v4844
  %5182 = vst [vmem:[%s2 + $0x950] sm:$0xff] %v4845
  %5183 = vst.msk [vmem:[%s2 + $0x958] sm:$0xff] %vm4884, %v4846
  %5184 = vst [vmem:[%s2 + $0x960] sm:$0xff] %v4847
  %5185 = vst.msk [vmem:[%s2 + $0x968] sm:$0xff] %vm4884, %v4848
  %5186 = vst [vmem:[%s2 + $0x970] sm:$0xff] %v4849
  %5187 = vst.msk [vmem:[%s2 + $0x978] sm:$0xff] %vm4884, %v4850
  %5188 = vst [vmem:[%s2 + $0x980] sm:$0xff] %v4851
  %5189 = vst.msk [vmem:[%s2 + $0x988] sm:$0xff] %vm4884, %v4852
  %5190 = vst [vmem:[%s2 + $0x990] sm:$0xff] %v4853
  %5191 = vst.msk [vmem:[%s2 + $0x998] sm:$0xff] %vm4884, %v4854
  %5192 = vst [vmem:[%s2 + $0x9a0] sm:$0xff] %v4855
  %5193 = vst.msk [vmem:[%s2 + $0x9a8] sm:$0xff] %vm4884, %v4856
  %5194 = vst [vmem:[%s2 + $0x9b0] sm:$0xff] %v4857
  %5195 = vst.msk [vmem:[%s2 + $0x9b8] sm:$0xff] %vm4884, %v4858
  %5196 = vst [vmem:[%s2 + $0x9c0] sm:$0xff] %v4859
  %5197 = vst.msk [vmem:[%s2 + $0x9c8] sm:$0xff] %vm4884, %v4860
  %5198 = vst [vmem:[%s2 + $0x9d0] sm:$0xff] %v4861
  %5199 = vst.msk [vmem:[%s2 + $0x9d8] sm:$0xff] %vm4884, %v4862
  %5200 = vst [vmem:[%s2 + $0x9e0] sm:$0xff] %v4863
  %5201 = vst.msk [vmem:[%s2 + $0x9e8] sm:$0xff] %vm4884, %v4864
  %5202 = vst [vmem:[%s2 + $0x9f0] sm:$0xff] %v4865
  %5203 = vst.msk [vmem:[%s2 + $0x9f8] sm:$0xff] %vm4884, %v4866
  %5204 = vst [vmem:[%s2 + $0xa00] sm:$0xff] %v4867
  %5205 = vst.msk [vmem:[%s2 + $0xa08] sm:$0xff] %vm4884, %v4868
  %5206 = vst [vmem:[%s2 + $0xa10] sm:$0xff] %v4869
  %5207 = vst.msk [vmem:[%s2 + $0xa18] sm:$0xff] %vm4884, %v4870
  %5208 = vst [vmem:[%s2 + $0xa20] sm:$0xff] %v4871
  %5209 = vst.msk [vmem:[%s2 + $0xa28] sm:$0xff] %vm4884, %v4872
  %5210 = vst [vmem:[%s2 + $0xa30] sm:$0xff] %v4873
  %5211 = vst.msk [vmem:[%s2 + $0xa38] sm:$0xff] %vm4884, %v4874
  %5212 = vst [vmem:[%s2 + $0xa40] sm:$0xff] %v4875
  %5213 = vst.msk [vmem:[%s2 + $0xa48] sm:$0xff] %vm4884, %v4876
  %5214 = vst [vmem:[%s2 + $0xa50] sm:$0xff] %v4877
  %5215 = vst.msk [vmem:[%s2 + $0xa58] sm:$0xff] %vm4884, %v4878
  %5216 = vst [vmem:[%s2 + $0xa60] sm:$0xff] %v4879
  %5217 = vst.msk [vmem:[%s2 + $0xa68] sm:$0xff] %vm4884, %v4880
  %5218 = vst [vmem:[%s2 + $0xa70] sm:$0xff] %v4881
  %5219 = vst.msk [vmem:[%s2 + $0xa78] sm:$0xff] %vm4884, %v4882
  // Predicated region
  $region10: #{tpu_custom_call.1} parent=0 // pred_check
    _
  $region11: #{tpu_custom_call.1} parent=0 // pred_check_branch
    %5221 = sbr.rel (0) target = $region13
  $region12: #{tpu_custom_call.1} parent=0 // pred_region
    _
  $region13: #{tpu_custom_call.1} parent=0 // pred_fallthru
    _
  // Predicated region
  $region14: #{tpu_custom_call.1} parent=0 // pred_check
    _
  $region15: #{tpu_custom_call.1} parent=0 // pred_check_branch
    %5223 = sbr.rel (0) target = $region17
  $region16: #{tpu_custom_call.1} parent=0 // pred_region
    _
  $region17: #{tpu_custom_call.1} parent=0 // pred_fallthru
    _

</llo_original>
